<compile_context>
chip_gen: v5e
topology: v5e:2x2
jax: 0.10.0
libtpu: 0.0.40
codegen_flags: <defaults>
</compile_context>

<pallas_src>
import numpy as np
import jax
import jax.numpy as jnp
from jax.experimental import pallas as pl
from jax.experimental.pallas import tpu as pltpu

# ---- synthetic stand-ins for argparse args --------------------------------
INPUT_CHANNEL = 3
NGF = 8
EPS = 1e-5


# ---- parameter setup (glue) ------------------------------------------------
def _spectral_normalize(w, key, n_iter=1, eps=1e-12):
    """PyTorch-style spectral norm: flatten to (Cout, -1), 1 power iteration."""
    cout = w.shape[0]
    wm = w.reshape(cout, -1)
    u = jax.random.normal(key, (cout,), dtype=w.dtype)
    u = u / (jnp.linalg.norm(u) + eps)
    v = None
    for _ in range(n_iter):
        v = wm.T @ u
        v = v / (jnp.linalg.norm(v) + eps)
        u = wm @ v
        u = u / (jnp.linalg.norm(u) + eps)
    sigma = u @ (wm @ v)
    return w / sigma


def _init_conv(key, cout, cin, k):
    kw_key, kb_key, ku_key = jax.random.split(key, 3)
    fan_in = cin * k * k
    w = jax.random.normal(kw_key, (cout, cin, k, k), jnp.float32) / jnp.sqrt(fan_in)
    b = 0.01 * jax.random.normal(kb_key, (cout,), jnp.float32)   # used by reference only
    w = _spectral_normalize(w, ku_key)
    return w, b


def init_encoder_params(key):
    k1, k2, k3 = jax.random.split(key, 3)
    p1 = _init_conv(k1, NGF, INPUT_CHANNEL, 7)        # Conv2d(Cin, ngf, 7, 1, 3)
    p2 = _init_conv(k2, NGF * 2, NGF, 4)              # Conv2d(ngf, 2ngf, 4, 2, 1)
    p3 = _init_conv(k3, NGF * 4, NGF * 2, 4)          # Conv2d(2ngf, 4ngf, 4, 2, 1)
    return (p1, p2, p3)


# ---- wrapper glue -----------------------------------------------------------
def _reflect_index(i, n):
    """PyTorch 'reflect' padding index (mirror, edge not repeated)."""
    if i < 0:
        i = -i
    if i >= n:
        i = 2 * n - 2 - i
    return i


def _gather_taps(h_in, w_in, k, stride, pad):
    """Constant 0/1 gather matrices G[t, q, p]: for kernel tap t, G picks the
    (reflect-padded) input pixel feeding output position p.  conv(y) then equals
    sum_t W[:, :, t] @ (y @ G[t]) with y laid out as (Cin, Hin*Win)."""
    ho = (h_in + 2 * pad - k) // stride + 1
    wo = (w_in + 2 * pad - k) // stride + 1
    g = np.zeros((k * k, h_in * w_in, ho * wo), np.float32)
    for di in range(k):
        for dj in range(k):
            t = di * k + dj
            for oh in range(ho):
                ih = _reflect_index(oh * stride + di - pad, h_in)
                for ow in range(wo):
                    iw = _reflect_index(ow * stride + dj - pad, w_in)
                    g[t, ih * w_in + iw, oh * wo + ow] = 1.0
    return jnp.asarray(g, jnp.bfloat16), ho, wo


def _im2col_cm(x, k, stride, pad):
    """Channel-minor im2col: NCHW -> (N, C*k*k, Ho*Wo).  Pure reshape of NCHW
    slices -- no transpose needed (spatial ends up on the lane axis)."""
    xp = jnp.pad(x, ((0, 0), (0, 0), (pad, pad), (pad, pad)), mode="reflect")
    n, c, hp, wp = xp.shape
    ho = (hp - k) // stride + 1
    wo = (wp - k) // stride + 1
    cols = [xp[:, :, di:di + stride * ho:stride, dj:dj + stride * wo:stride]
            for di in range(k) for dj in range(k)]
    p = jnp.stack(cols, axis=2)                       # (N, C, k*k, Ho, Wo)
    return p.reshape(n, c * k * k, ho * wo), ho, wo


# ---- fused Pallas kernel: (conv -> InstanceNorm -> ReLU) x 3 ---------------
def _encoder_kernel(p1_ref, w1_ref, g2_ref, w2_ref, g3_ref, w3_ref, o_ref):
    def inorm_relu(y):
        # InstanceNorm2d(affine=False): per channel (sublane) over spatial (lane),
        # biased variance, eps=1e-5.  Reuse d = y - mean for var AND normalization.
        mean = jnp.mean(y, axis=1, keepdims=True)
        d = y - mean
        var = jnp.mean(d * d, axis=1, keepdims=True)
        return jnp.maximum(d * jax.lax.rsqrt(var + EPS), 0.0)

    def conv_taps(y_bf16, g_ref, w_ref):
        # y_bf16: (Cin, Pin)   g_ref: (taps, Pin, Pout)   w_ref: (taps, Cout, Cin)
        n_taps, cout, _ = w_ref.shape
        pout = g_ref.shape[2]
        acc = jnp.zeros((cout, pout), jnp.float32)
        for t in range(n_taps):
            # Gather of y (exact in bf16: G[t] is a 0/1 selection matrix).
            z = jnp.dot(y_bf16, g_ref[t], preferred_element_type=jnp.float32)
            acc = acc + jnp.dot(w_ref[t], z.astype(jnp.bfloat16),
                                preferred_element_type=jnp.float32)
        return acc

    # layer 1: im2col matmul (Cout on sublanes, spatial on lanes -> lane-dense)
    y = jnp.dot(w1_ref[...], p1_ref[0], preferred_element_type=jnp.float32)
    y = inorm_relu(y).astype(jnp.bfloat16)
    # layer 2: 4x4 stride-2 conv as 16 gathered matmuls (reflect pad folded in)
    y = inorm_relu(conv_taps(y, g2_ref, w2_ref)).astype(jnp.bfloat16)
    # layer 3
    o_ref[0] = inorm_relu(conv_taps(y, g3_ref, w3_ref))


def encoder_forward(x, params):
    """x: (N, Cin, H, W) float32 NCHW -> (N, 4*ngf, H//4, W//4) float32 NCHW."""
    (w1, _b1), (w2, _b2), (w3, _b3) = params   # biases cancelled by IN(affine=False)
    n = x.shape[0]
    c1, c2, c3 = w1.shape[0], w2.shape[0], w3.shape[0]

    # layer-1 im2col depends only on the input -> precompute as XLA glue.
    p1, h1, w1s = _im2col_cm(x, 7, 1, 3)               # (N, Cin*49, P1)
    k1 = p1.shape[1]
    k1p = ((k1 + 127) // 128) * 128                    # lane-align the contraction dim
    p1 = jnp.pad(p1, ((0, 0), (0, k1p - k1), (0, 0))).astype(jnp.bfloat16)
    w1m = jnp.pad(w1.reshape(c1, k1), ((0, 0), (0, k1p - k1))).astype(jnp.bfloat16)
    p1_spatial = h1 * w1s

    # layers 2/3: constant gather matrices (reflect pad + im2col) + per-tap weights.
    g2, h2, w2s = _gather_taps(h1, w1s, 4, 2, 1)       # (16, P1, P2)
    g3, h3, w3s = _gather_taps(h2, w2s, 4, 2, 1)       # (16, P2, P3)
    p2_spatial, p3_spatial = h2 * w2s, h3 * w3s
    w2t = jnp.transpose(w2.reshape(c2, c1, 16), (2, 0, 1)).astype(jnp.bfloat16)
    w3t = jnp.transpose(w3.reshape(c3, c2, 16), (2, 0, 1)).astype(jnp.bfloat16)

    out = pl.pallas_call(
        _encoder_kernel,
        out_shape=jax.ShapeDtypeStruct((n, c3, p3_spatial), jnp.float32),
        grid_spec=pltpu.PrefetchScalarGridSpec(
            num_scalar_prefetch=0,
            grid=(n,),
            in_specs=[
                pl.BlockSpec((1, k1p, p1_spatial), lambda i: (i, 0, 0)),
                pl.BlockSpec((c1, k1p), lambda i: (0, 0)),
                pl.BlockSpec((16, p1_spatial, p2_spatial), lambda i: (0, 0, 0)),
                pl.BlockSpec((16, c2, c1), lambda i: (0, 0, 0)),
                pl.BlockSpec((16, p2_spatial, p3_spatial), lambda i: (0, 0, 0)),
                pl.BlockSpec((16, c3, c2), lambda i: (0, 0, 0)),
            ],
            out_specs=pl.BlockSpec((1, c3, p3_spatial), lambda i: (i, 0, 0)),
        ),
        compiler_params=pltpu.CompilerParams(
            dimension_semantics=("parallel",),          # shard batch across TCs (v7x)
            vmem_limit_bytes=48 * 1024 * 1024,
        ),
    )(p1, w1m, g2, w2t, g3, w3t)

    return out.reshape(n, c3, h3, w3s)                  # already NCHW — no transpose


# ---- pure-JAX f32 reference (conv WITH bias + IN + ReLU) -------------------
def _ref_layer(x, w, b, kernel, stride, pad):
    xp = jnp.pad(x, ((0, 0), (0, 0), (pad, pad), (pad, pad)), mode="reflect")
    n, c, hp, wp = xp.shape
    ho = (hp - kernel) // stride + 1
    wo = (wp - kernel) // stride + 1
    cols = [xp[:, :, di:di + stride * ho:stride, dj:dj + stride * wo:stride]
            for di in range(kernel) for dj in range(kernel)]
    p = jnp.stack(cols, axis=2).transpose(0, 3, 4, 1, 2).reshape(n, ho * wo, -1)
    cout = w.shape[0]
    y = jnp.einsum("npk,ck->npc", p, w.reshape(cout, -1),
                   preferred_element_type=jnp.float32) + b[None, None, :]
    mean = jnp.mean(y, axis=1, keepdims=True)
    var = jnp.mean(jnp.square(y - mean), axis=1, keepdims=True)
    y = jnp.maximum((y - mean) * jax.lax.rsqrt(var + EPS), 0.0)
    return y.reshape(n, ho, wo, cout).transpose(0, 3, 1, 2)


def encoder_reference(x, params):
    (w1, b1), (w2, b2), (w3, b3) = params
    x = _ref_layer(x, w1, b1, 7, 1, 3)
    x = _ref_layer(x, w2, b2, 4, 2, 1)
    x = _ref_layer(x, w3, b3, 4, 2, 1)
    return x


if __name__ == "__main__":
    key = jax.random.PRNGKey(0)
    kx, kp = jax.random.split(key)
    x = jax.random.normal(kx, (2, INPUT_CHANNEL, 16, 16), jnp.float32)  # NCHW
    params = init_encoder_params(kp)

    fwd = jax.jit(encoder_forward)
    y = jax.block_until_ready(fwd(x, params))
    assert y.shape == (2, NGF * 4, 4, 4), y.shape

    y_ref = jax.block_until_ready(encoder_reference(x, params))
    max_err = float(jnp.max(jnp.abs(y - y_ref)))
    assert jnp.allclose(y, y_ref, atol=5e-2, rtol=5e-2), max_err

    print("KERNEL_OK")
</pallas_src>

<mosaic_0001>
module attributes {stable_mosaic.version = 11 : i64} {
  func.func @_encoder_kernel(%arg0: i32, %arg1: memref<1x256x256xbf16, #tpu.memory_space<vmem>>, %arg2: memref<8x256xbf16, #tpu.memory_space<vmem>>, %arg3: memref<16x256x64xbf16, #tpu.memory_space<vmem>>, %arg4: memref<16x16x8xbf16, #tpu.memory_space<vmem>>, %arg5: memref<16x64x16xbf16, #tpu.memory_space<vmem>>, %arg6: memref<16x32x16xbf16, #tpu.memory_space<vmem>>, %arg7: memref<1x32x16xf32, #tpu.memory_space<vmem>>) attributes {dimension_semantics = [#tpu.dimension_semantics<parallel>], iteration_bounds = array<i64: 2>, scalar_prefetch = 0 : i64, scratch_operands = 0 : i64, tpu.core_type = #tpu.core_type<tc>, window_params = [{transform_indices = @transform_0, window_bounds = array<i64: 1, 256, 256>}, {pipeline_mode = #tpu.pipeline_mode<synchronous>, transform_indices = @transform_1, window_bounds = array<i64: 8, 256>}, {pipeline_mode = #tpu.pipeline_mode<synchronous>, transform_indices = @transform_2, window_bounds = array<i64: 16, 256, 64>}, {pipeline_mode = #tpu.pipeline_mode<synchronous>, transform_indices = @transform_3, window_bounds = array<i64: 16, 16, 8>}, {pipeline_mode = #tpu.pipeline_mode<synchronous>, transform_indices = @transform_4, window_bounds = array<i64: 16, 64, 16>}, {pipeline_mode = #tpu.pipeline_mode<synchronous>, transform_indices = @transform_5, window_bounds = array<i64: 16, 32, 16>}, {transform_indices = @transform_6, window_bounds = array<i64: 1, 32, 16>}]} {
    %c0 = arith.constant 0 : index
    %c0_0 = arith.constant 0 : index
    %0 = vector.load %arg2[%c0, %c0_0] : memref<8x256xbf16, #tpu.memory_space<vmem>>, vector<8x256xbf16>
    %c0_1 = arith.constant 0 : index
    %c0_2 = arith.constant 0 : index
    %c0_3 = arith.constant 0 : index
    %1 = vector.load %arg1[%c0_1, %c0_2, %c0_3] : memref<1x256x256xbf16, #tpu.memory_space<vmem>>, vector<1x256x256xbf16>
    %2 = vector.shape_cast %1 : vector<1x256x256xbf16> to vector<256x256xbf16>
    %cst = arith.constant dense<0.000000e+00> : vector<8x256xf32>
    %3 = tpu.matmul %0, %2, %cst {dimension_numbers = #tpu.dot_dimension_numbers<[1], [0], [0], [1], [0, 0, 1, 1], [], []>} : vector<8x256xbf16>, vector<256x256xbf16>, vector<8x256xf32> -> vector<8x256xf32>
    %cst_4 = arith.constant dense<0.000000e+00> : vector<8xf32>
    %4 = vector.multi_reduction <add>, %3, %cst_4 [1] : vector<8x256xf32> to vector<8xf32>
    %5 = vector.shape_cast %4 : vector<8xf32> to vector<8x1xf32>
    %cst_5 = arith.constant 2.560000e+02 : f32
    %6 = vector.broadcast %cst_5 : f32 to vector<8x1xf32>
    %7 = arith.divf %5, %6 : vector<8x1xf32>
    %8 = vector.broadcast %7 : vector<8x1xf32> to vector<8x256xf32>
    %9 = arith.subf %3, %8 : vector<8x256xf32>
    %10 = arith.mulf %9, %9 : vector<8x256xf32>
    %cst_6 = arith.constant dense<0.000000e+00> : vector<8xf32>
    %11 = vector.multi_reduction <add>, %10, %cst_6 [1] : vector<8x256xf32> to vector<8xf32>
    %12 = vector.shape_cast %11 : vector<8xf32> to vector<8x1xf32>
    %cst_7 = arith.constant 2.560000e+02 : f32
    %13 = vector.broadcast %cst_7 : f32 to vector<8x1xf32>
    %14 = arith.divf %12, %13 : vector<8x1xf32>
    %cst_8 = arith.constant 9.99999974E-6 : f32
    %15 = vector.broadcast %cst_8 : f32 to vector<8x1xf32>
    %16 = arith.addf %14, %15 : vector<8x1xf32>
    %17 = math.rsqrt %16 : vector<8x1xf32>
    %18 = vector.broadcast %17 : vector<8x1xf32> to vector<8x256xf32>
    %19 = arith.mulf %9, %18 : vector<8x256xf32>
    %cst_9 = arith.constant 0.000000e+00 : f32
    %20 = vector.broadcast %cst_9 : f32 to vector<8x256xf32>
    %21 = arith.maximumf %19, %20 : vector<8x256xf32>
    %22 = arith.truncf %21 : vector<8x256xf32> to vector<8x256xbf16>
    %cst_10 = arith.constant 0.000000e+00 : f32
    %23 = vector.broadcast %cst_10 : f32 to vector<16x64xf32>
    %c0_11 = arith.constant 0 : index
    %c0_12 = arith.constant 0 : index
    %c0_13 = arith.constant 0 : index
    %24 = vector.load %arg3[%c0_11, %c0_12, %c0_13] : memref<16x256x64xbf16, #tpu.memory_space<vmem>>, vector<1x256x64xbf16>
    %25 = vector.shape_cast %24 : vector<1x256x64xbf16> to vector<256x64xbf16>
    %cst_14 = arith.constant dense<0.000000e+00> : vector<8x64xf32>
    %26 = tpu.matmul %22, %25, %cst_14 {dimension_numbers = #tpu.dot_dimension_numbers<[1], [0], [0], [1], [0, 0, 1, 1], [], []>} : vector<8x256xbf16>, vector<256x64xbf16>, vector<8x64xf32> -> vector<8x64xf32>
    %c0_15 = arith.constant 0 : index
    %c0_16 = arith.constant 0 : index
    %c0_17 = arith.constant 0 : index
    %27 = vector.load %arg4[%c0_15, %c0_16, %c0_17] : memref<16x16x8xbf16, #tpu.memory_space<vmem>>, vector<1x16x8xbf16>
    %28 = vector.shape_cast %27 : vector<1x16x8xbf16> to vector<16x8xbf16>
    %29 = arith.truncf %26 : vector<8x64xf32> to vector<8x64xbf16>
    %cst_18 = arith.constant dense<0.000000e+00> : vector<16x64xf32>
    %30 = tpu.matmul %28, %29, %cst_18 {dimension_numbers = #tpu.dot_dimension_numbers<[1], [0], [0], [1], [0, 0, 1, 1], [], []>} : vector<16x8xbf16>, vector<8x64xbf16>, vector<16x64xf32> -> vector<16x64xf32>
    %31 = arith.addf %23, %30 : vector<16x64xf32>
    %c1 = arith.constant 1 : index
    %c0_19 = arith.constant 0 : index
    %c0_20 = arith.constant 0 : index
    %32 = vector.load %arg3[%c1, %c0_19, %c0_20] : memref<16x256x64xbf16, #tpu.memory_space<vmem>>, vector<1x256x64xbf16>
    %33 = vector.shape_cast %32 : vector<1x256x64xbf16> to vector<256x64xbf16>
    %cst_21 = arith.constant dense<0.000000e+00> : vector<8x64xf32>
    %34 = tpu.matmul %22, %33, %cst_21 {dimension_numbers = #tpu.dot_dimension_numbers<[1], [0], [0], [1], [0, 0, 1, 1], [], []>} : vector<8x256xbf16>, vector<256x64xbf16>, vector<8x64xf32> -> vector<8x64xf32>
    %c1_22 = arith.constant 1 : index
    %c0_23 = arith.constant 0 : index
    %c0_24 = arith.constant 0 : index
    %35 = vector.load %arg4[%c1_22, %c0_23, %c0_24] : memref<16x16x8xbf16, #tpu.memory_space<vmem>>, vector<1x16x8xbf16>
    %36 = vector.shape_cast %35 : vector<1x16x8xbf16> to vector<16x8xbf16>
    %37 = arith.truncf %34 : vector<8x64xf32> to vector<8x64xbf16>
    %cst_25 = arith.constant dense<0.000000e+00> : vector<16x64xf32>
    %38 = tpu.matmul %36, %37, %cst_25 {dimension_numbers = #tpu.dot_dimension_numbers<[1], [0], [0], [1], [0, 0, 1, 1], [], []>} : vector<16x8xbf16>, vector<8x64xbf16>, vector<16x64xf32> -> vector<16x64xf32>
    %39 = arith.addf %31, %38 : vector<16x64xf32>
    %c2 = arith.constant 2 : index
    %c0_26 = arith.constant 0 : index
    %c0_27 = arith.constant 0 : index
    %40 = vector.load %arg3[%c2, %c0_26, %c0_27] : memref<16x256x64xbf16, #tpu.memory_space<vmem>>, vector<1x256x64xbf16>
    %41 = vector.shape_cast %40 : vector<1x256x64xbf16> to vector<256x64xbf16>
    %cst_28 = arith.constant dense<0.000000e+00> : vector<8x64xf32>
    %42 = tpu.matmul %22, %41, %cst_28 {dimension_numbers = #tpu.dot_dimension_numbers<[1], [0], [0], [1], [0, 0, 1, 1], [], []>} : vector<8x256xbf16>, vector<256x64xbf16>, vector<8x64xf32> -> vector<8x64xf32>
    %c2_29 = arith.constant 2 : index
    %c0_30 = arith.constant 0 : index
    %c0_31 = arith.constant 0 : index
    %43 = vector.load %arg4[%c2_29, %c0_30, %c0_31] : memref<16x16x8xbf16, #tpu.memory_space<vmem>>, vector<1x16x8xbf16>
    %44 = vector.shape_cast %43 : vector<1x16x8xbf16> to vector<16x8xbf16>
    %45 = arith.truncf %42 : vector<8x64xf32> to vector<8x64xbf16>
    %cst_32 = arith.constant dense<0.000000e+00> : vector<16x64xf32>
    %46 = tpu.matmul %44, %45, %cst_32 {dimension_numbers = #tpu.dot_dimension_numbers<[1], [0], [0], [1], [0, 0, 1, 1], [], []>} : vector<16x8xbf16>, vector<8x64xbf16>, vector<16x64xf32> -> vector<16x64xf32>
    %47 = arith.addf %39, %46 : vector<16x64xf32>
    %c3 = arith.constant 3 : index
    %c0_33 = arith.constant 0 : index
    %c0_34 = arith.constant 0 : index
    %48 = vector.load %arg3[%c3, %c0_33, %c0_34] : memref<16x256x64xbf16, #tpu.memory_space<vmem>>, vector<1x256x64xbf16>
    %49 = vector.shape_cast %48 : vector<1x256x64xbf16> to vector<256x64xbf16>
    %cst_35 = arith.constant dense<0.000000e+00> : vector<8x64xf32>
    %50 = tpu.matmul %22, %49, %cst_35 {dimension_numbers = #tpu.dot_dimension_numbers<[1], [0], [0], [1], [0, 0, 1, 1], [], []>} : vector<8x256xbf16>, vector<256x64xbf16>, vector<8x64xf32> -> vector<8x64xf32>
    %c3_36 = arith.constant 3 : index
    %c0_37 = arith.constant 0 : index
    %c0_38 = arith.constant 0 : index
    %51 = vector.load %arg4[%c3_36, %c0_37, %c0_38] : memref<16x16x8xbf16, #tpu.memory_space<vmem>>, vector<1x16x8xbf16>
    %52 = vector.shape_cast %51 : vector<1x16x8xbf16> to vector<16x8xbf16>
    %53 = arith.truncf %50 : vector<8x64xf32> to vector<8x64xbf16>
    %cst_39 = arith.constant dense<0.000000e+00> : vector<16x64xf32>
    %54 = tpu.matmul %52, %53, %cst_39 {dimension_numbers = #tpu.dot_dimension_numbers<[1], [0], [0], [1], [0, 0, 1, 1], [], []>} : vector<16x8xbf16>, vector<8x64xbf16>, vector<16x64xf32> -> vector<16x64xf32>
    %55 = arith.addf %47, %54 : vector<16x64xf32>
    %c4 = arith.constant 4 : index
    %c0_40 = arith.constant 0 : index
    %c0_41 = arith.constant 0 : index
    %56 = vector.load %arg3[%c4, %c0_40, %c0_41] : memref<16x256x64xbf16, #tpu.memory_space<vmem>>, vector<1x256x64xbf16>
    %57 = vector.shape_cast %56 : vector<1x256x64xbf16> to vector<256x64xbf16>
    %cst_42 = arith.constant dense<0.000000e+00> : vector<8x64xf32>
    %58 = tpu.matmul %22, %57, %cst_42 {dimension_numbers = #tpu.dot_dimension_numbers<[1], [0], [0], [1], [0, 0, 1, 1], [], []>} : vector<8x256xbf16>, vector<256x64xbf16>, vector<8x64xf32> -> vector<8x64xf32>
    %c4_43 = arith.constant 4 : index
    %c0_44 = arith.constant 0 : index
    %c0_45 = arith.constant 0 : index
    %59 = vector.load %arg4[%c4_43, %c0_44, %c0_45] : memref<16x16x8xbf16, #tpu.memory_space<vmem>>, vector<1x16x8xbf16>
    %60 = vector.shape_cast %59 : vector<1x16x8xbf16> to vector<16x8xbf16>
    %61 = arith.truncf %58 : vector<8x64xf32> to vector<8x64xbf16>
    %cst_46 = arith.constant dense<0.000000e+00> : vector<16x64xf32>
    %62 = tpu.matmul %60, %61, %cst_46 {dimension_numbers = #tpu.dot_dimension_numbers<[1], [0], [0], [1], [0, 0, 1, 1], [], []>} : vector<16x8xbf16>, vector<8x64xbf16>, vector<16x64xf32> -> vector<16x64xf32>
    %63 = arith.addf %55, %62 : vector<16x64xf32>
    %c5 = arith.constant 5 : index
    %c0_47 = arith.constant 0 : index
    %c0_48 = arith.constant 0 : index
    %64 = vector.load %arg3[%c5, %c0_47, %c0_48] : memref<16x256x64xbf16, #tpu.memory_space<vmem>>, vector<1x256x64xbf16>
    %65 = vector.shape_cast %64 : vector<1x256x64xbf16> to vector<256x64xbf16>
    %cst_49 = arith.constant dense<0.000000e+00> : vector<8x64xf32>
    %66 = tpu.matmul %22, %65, %cst_49 {dimension_numbers = #tpu.dot_dimension_numbers<[1], [0], [0], [1], [0, 0, 1, 1], [], []>} : vector<8x256xbf16>, vector<256x64xbf16>, vector<8x64xf32> -> vector<8x64xf32>
    %c5_50 = arith.constant 5 : index
    %c0_51 = arith.constant 0 : index
    %c0_52 = arith.constant 0 : index
    %67 = vector.load %arg4[%c5_50, %c0_51, %c0_52] : memref<16x16x8xbf16, #tpu.memory_space<vmem>>, vector<1x16x8xbf16>
    %68 = vector.shape_cast %67 : vector<1x16x8xbf16> to vector<16x8xbf16>
    %69 = arith.truncf %66 : vector<8x64xf32> to vector<8x64xbf16>
    %cst_53 = arith.constant dense<0.000000e+00> : vector<16x64xf32>
    %70 = tpu.matmul %68, %69, %cst_53 {dimension_numbers = #tpu.dot_dimension_numbers<[1], [0], [0], [1], [0, 0, 1, 1], [], []>} : vector<16x8xbf16>, vector<8x64xbf16>, vector<16x64xf32> -> vector<16x64xf32>
    %71 = arith.addf %63, %70 : vector<16x64xf32>
    %c6 = arith.constant 6 : index
    %c0_54 = arith.constant 0 : index
    %c0_55 = arith.constant 0 : index
    %72 = vector.load %arg3[%c6, %c0_54, %c0_55] : memref<16x256x64xbf16, #tpu.memory_space<vmem>>, vector<1x256x64xbf16>
    %73 = vector.shape_cast %72 : vector<1x256x64xbf16> to vector<256x64xbf16>
    %cst_56 = arith.constant dense<0.000000e+00> : vector<8x64xf32>
    %74 = tpu.matmul %22, %73, %cst_56 {dimension_numbers = #tpu.dot_dimension_numbers<[1], [0], [0], [1], [0, 0, 1, 1], [], []>} : vector<8x256xbf16>, vector<256x64xbf16>, vector<8x64xf32> -> vector<8x64xf32>
    %c6_57 = arith.constant 6 : index
    %c0_58 = arith.constant 0 : index
    %c0_59 = arith.constant 0 : index
    %75 = vector.load %arg4[%c6_57, %c0_58, %c0_59] : memref<16x16x8xbf16, #tpu.memory_space<vmem>>, vector<1x16x8xbf16>
    %76 = vector.shape_cast %75 : vector<1x16x8xbf16> to vector<16x8xbf16>
    %77 = arith.truncf %74 : vector<8x64xf32> to vector<8x64xbf16>
    %cst_60 = arith.constant dense<0.000000e+00> : vector<16x64xf32>
    %78 = tpu.matmul %76, %77, %cst_60 {dimension_numbers = #tpu.dot_dimension_numbers<[1], [0], [0], [1], [0, 0, 1, 1], [], []>} : vector<16x8xbf16>, vector<8x64xbf16>, vector<16x64xf32> -> vector<16x64xf32>
    %79 = arith.addf %71, %78 : vector<16x64xf32>
    %c7 = arith.constant 7 : index
    %c0_61 = arith.constant 0 : index
    %c0_62 = arith.constant 0 : index
    %80 = vector.load %arg3[%c7, %c0_61, %c0_62] : memref<16x256x64xbf16, #tpu.memory_space<vmem>>, vector<1x256x64xbf16>
    %81 = vector.shape_cast %80 : vector<1x256x64xbf16> to vector<256x64xbf16>
    %cst_63 = arith.constant dense<0.000000e+00> : vector<8x64xf32>
    %82 = tpu.matmul %22, %81, %cst_63 {dimension_numbers = #tpu.dot_dimension_numbers<[1], [0], [0], [1], [0, 0, 1, 1], [], []>} : vector<8x256xbf16>, vector<256x64xbf16>, vector<8x64xf32> -> vector<8x64xf32>
    %c7_64 = arith.constant 7 : index
    %c0_65 = arith.constant 0 : index
    %c0_66 = arith.constant 0 : index
    %83 = vector.load %arg4[%c7_64, %c0_65, %c0_66] : memref<16x16x8xbf16, #tpu.memory_space<vmem>>, vector<1x16x8xbf16>
    %84 = vector.shape_cast %83 : vector<1x16x8xbf16> to vector<16x8xbf16>
    %85 = arith.truncf %82 : vector<8x64xf32> to vector<8x64xbf16>
    %cst_67 = arith.constant dense<0.000000e+00> : vector<16x64xf32>
    %86 = tpu.matmul %84, %85, %cst_67 {dimension_numbers = #tpu.dot_dimension_numbers<[1], [0], [0], [1], [0, 0, 1, 1], [], []>} : vector<16x8xbf16>, vector<8x64xbf16>, vector<16x64xf32> -> vector<16x64xf32>
    %87 = arith.addf %79, %86 : vector<16x64xf32>
    %c8 = arith.constant 8 : index
    %c0_68 = arith.constant 0 : index
    %c0_69 = arith.constant 0 : index
    %88 = vector.load %arg3[%c8, %c0_68, %c0_69] : memref<16x256x64xbf16, #tpu.memory_space<vmem>>, vector<1x256x64xbf16>
    %89 = vector.shape_cast %88 : vector<1x256x64xbf16> to vector<256x64xbf16>
    %cst_70 = arith.constant dense<0.000000e+00> : vector<8x64xf32>
    %90 = tpu.matmul %22, %89, %cst_70 {dimension_numbers = #tpu.dot_dimension_numbers<[1], [0], [0], [1], [0, 0, 1, 1], [], []>} : vector<8x256xbf16>, vector<256x64xbf16>, vector<8x64xf32> -> vector<8x64xf32>
    %c8_71 = arith.constant 8 : index
    %c0_72 = arith.constant 0 : index
    %c0_73 = arith.constant 0 : index
    %91 = vector.load %arg4[%c8_71, %c0_72, %c0_73] : memref<16x16x8xbf16, #tpu.memory_space<vmem>>, vector<1x16x8xbf16>
    %92 = vector.shape_cast %91 : vector<1x16x8xbf16> to vector<16x8xbf16>
    %93 = arith.truncf %90 : vector<8x64xf32> to vector<8x64xbf16>
    %cst_74 = arith.constant dense<0.000000e+00> : vector<16x64xf32>
    %94 = tpu.matmul %92, %93, %cst_74 {dimension_numbers = #tpu.dot_dimension_numbers<[1], [0], [0], [1], [0, 0, 1, 1], [], []>} : vector<16x8xbf16>, vector<8x64xbf16>, vector<16x64xf32> -> vector<16x64xf32>
    %95 = arith.addf %87, %94 : vector<16x64xf32>
    %c9 = arith.constant 9 : index
    %c0_75 = arith.constant 0 : index
    %c0_76 = arith.constant 0 : index
    %96 = vector.load %arg3[%c9, %c0_75, %c0_76] : memref<16x256x64xbf16, #tpu.memory_space<vmem>>, vector<1x256x64xbf16>
    %97 = vector.shape_cast %96 : vector<1x256x64xbf16> to vector<256x64xbf16>
    %cst_77 = arith.constant dense<0.000000e+00> : vector<8x64xf32>
    %98 = tpu.matmul %22, %97, %cst_77 {dimension_numbers = #tpu.dot_dimension_numbers<[1], [0], [0], [1], [0, 0, 1, 1], [], []>} : vector<8x256xbf16>, vector<256x64xbf16>, vector<8x64xf32> -> vector<8x64xf32>
    %c9_78 = arith.constant 9 : index
    %c0_79 = arith.constant 0 : index
    %c0_80 = arith.constant 0 : index
    %99 = vector.load %arg4[%c9_78, %c0_79, %c0_80] : memref<16x16x8xbf16, #tpu.memory_space<vmem>>, vector<1x16x8xbf16>
    %100 = vector.shape_cast %99 : vector<1x16x8xbf16> to vector<16x8xbf16>
    %101 = arith.truncf %98 : vector<8x64xf32> to vector<8x64xbf16>
    %cst_81 = arith.constant dense<0.000000e+00> : vector<16x64xf32>
    %102 = tpu.matmul %100, %101, %cst_81 {dimension_numbers = #tpu.dot_dimension_numbers<[1], [0], [0], [1], [0, 0, 1, 1], [], []>} : vector<16x8xbf16>, vector<8x64xbf16>, vector<16x64xf32> -> vector<16x64xf32>
    %103 = arith.addf %95, %102 : vector<16x64xf32>
    %c10 = arith.constant 10 : index
    %c0_82 = arith.constant 0 : index
    %c0_83 = arith.constant 0 : index
    %104 = vector.load %arg3[%c10, %c0_82, %c0_83] : memref<16x256x64xbf16, #tpu.memory_space<vmem>>, vector<1x256x64xbf16>
    %105 = vector.shape_cast %104 : vector<1x256x64xbf16> to vector<256x64xbf16>
    %cst_84 = arith.constant dense<0.000000e+00> : vector<8x64xf32>
    %106 = tpu.matmul %22, %105, %cst_84 {dimension_numbers = #tpu.dot_dimension_numbers<[1], [0], [0], [1], [0, 0, 1, 1], [], []>} : vector<8x256xbf16>, vector<256x64xbf16>, vector<8x64xf32> -> vector<8x64xf32>
    %c10_85 = arith.constant 10 : index
    %c0_86 = arith.constant 0 : index
    %c0_87 = arith.constant 0 : index
    %107 = vector.load %arg4[%c10_85, %c0_86, %c0_87] : memref<16x16x8xbf16, #tpu.memory_space<vmem>>, vector<1x16x8xbf16>
    %108 = vector.shape_cast %107 : vector<1x16x8xbf16> to vector<16x8xbf16>
    %109 = arith.truncf %106 : vector<8x64xf32> to vector<8x64xbf16>
    %cst_88 = arith.constant dense<0.000000e+00> : vector<16x64xf32>
    %110 = tpu.matmul %108, %109, %cst_88 {dimension_numbers = #tpu.dot_dimension_numbers<[1], [0], [0], [1], [0, 0, 1, 1], [], []>} : vector<16x8xbf16>, vector<8x64xbf16>, vector<16x64xf32> -> vector<16x64xf32>
    %111 = arith.addf %103, %110 : vector<16x64xf32>
    %c11 = arith.constant 11 : index
    %c0_89 = arith.constant 0 : index
    %c0_90 = arith.constant 0 : index
    %112 = vector.load %arg3[%c11, %c0_89, %c0_90] : memref<16x256x64xbf16, #tpu.memory_space<vmem>>, vector<1x256x64xbf16>
    %113 = vector.shape_cast %112 : vector<1x256x64xbf16> to vector<256x64xbf16>
    %cst_91 = arith.constant dense<0.000000e+00> : vector<8x64xf32>
    %114 = tpu.matmul %22, %113, %cst_91 {dimension_numbers = #tpu.dot_dimension_numbers<[1], [0], [0], [1], [0, 0, 1, 1], [], []>} : vector<8x256xbf16>, vector<256x64xbf16>, vector<8x64xf32> -> vector<8x64xf32>
    %c11_92 = arith.constant 11 : index
    %c0_93 = arith.constant 0 : index
    %c0_94 = arith.constant 0 : index
    %115 = vector.load %arg4[%c11_92, %c0_93, %c0_94] : memref<16x16x8xbf16, #tpu.memory_space<vmem>>, vector<1x16x8xbf16>
    %116 = vector.shape_cast %115 : vector<1x16x8xbf16> to vector<16x8xbf16>
    %117 = arith.truncf %114 : vector<8x64xf32> to vector<8x64xbf16>
    %cst_95 = arith.constant dense<0.000000e+00> : vector<16x64xf32>
    %118 = tpu.matmul %116, %117, %cst_95 {dimension_numbers = #tpu.dot_dimension_numbers<[1], [0], [0], [1], [0, 0, 1, 1], [], []>} : vector<16x8xbf16>, vector<8x64xbf16>, vector<16x64xf32> -> vector<16x64xf32>
    %119 = arith.addf %111, %118 : vector<16x64xf32>
    %c12 = arith.constant 12 : index
    %c0_96 = arith.constant 0 : index
    %c0_97 = arith.constant 0 : index
    %120 = vector.load %arg3[%c12, %c0_96, %c0_97] : memref<16x256x64xbf16, #tpu.memory_space<vmem>>, vector<1x256x64xbf16>
    %121 = vector.shape_cast %120 : vector<1x256x64xbf16> to vector<256x64xbf16>
    %cst_98 = arith.constant dense<0.000000e+00> : vector<8x64xf32>
    %122 = tpu.matmul %22, %121, %cst_98 {dimension_numbers = #tpu.dot_dimension_numbers<[1], [0], [0], [1], [0, 0, 1, 1], [], []>} : vector<8x256xbf16>, vector<256x64xbf16>, vector<8x64xf32> -> vector<8x64xf32>
    %c12_99 = arith.constant 12 : index
    %c0_100 = arith.constant 0 : index
    %c0_101 = arith.constant 0 : index
    %123 = vector.load %arg4[%c12_99, %c0_100, %c0_101] : memref<16x16x8xbf16, #tpu.memory_space<vmem>>, vector<1x16x8xbf16>
    %124 = vector.shape_cast %123 : vector<1x16x8xbf16> to vector<16x8xbf16>
    %125 = arith.truncf %122 : vector<8x64xf32> to vector<8x64xbf16>
    %cst_102 = arith.constant dense<0.000000e+00> : vector<16x64xf32>
    %126 = tpu.matmul %124, %125, %cst_102 {dimension_numbers = #tpu.dot_dimension_numbers<[1], [0], [0], [1], [0, 0, 1, 1], [], []>} : vector<16x8xbf16>, vector<8x64xbf16>, vector<16x64xf32> -> vector<16x64xf32>
    %127 = arith.addf %119, %126 : vector<16x64xf32>
    %c13 = arith.constant 13 : index
    %c0_103 = arith.constant 0 : index
    %c0_104 = arith.constant 0 : index
    %128 = vector.load %arg3[%c13, %c0_103, %c0_104] : memref<16x256x64xbf16, #tpu.memory_space<vmem>>, vector<1x256x64xbf16>
    %129 = vector.shape_cast %128 : vector<1x256x64xbf16> to vector<256x64xbf16>
    %cst_105 = arith.constant dense<0.000000e+00> : vector<8x64xf32>
    %130 = tpu.matmul %22, %129, %cst_105 {dimension_numbers = #tpu.dot_dimension_numbers<[1], [0], [0], [1], [0, 0, 1, 1], [], []>} : vector<8x256xbf16>, vector<256x64xbf16>, vector<8x64xf32> -> vector<8x64xf32>
    %c13_106 = arith.constant 13 : index
    %c0_107 = arith.constant 0 : index
    %c0_108 = arith.constant 0 : index
    %131 = vector.load %arg4[%c13_106, %c0_107, %c0_108] : memref<16x16x8xbf16, #tpu.memory_space<vmem>>, vector<1x16x8xbf16>
    %132 = vector.shape_cast %131 : vector<1x16x8xbf16> to vector<16x8xbf16>
    %133 = arith.truncf %130 : vector<8x64xf32> to vector<8x64xbf16>
    %cst_109 = arith.constant dense<0.000000e+00> : vector<16x64xf32>
    %134 = tpu.matmul %132, %133, %cst_109 {dimension_numbers = #tpu.dot_dimension_numbers<[1], [0], [0], [1], [0, 0, 1, 1], [], []>} : vector<16x8xbf16>, vector<8x64xbf16>, vector<16x64xf32> -> vector<16x64xf32>
    %135 = arith.addf %127, %134 : vector<16x64xf32>
    %c14 = arith.constant 14 : index
    %c0_110 = arith.constant 0 : index
    %c0_111 = arith.constant 0 : index
    %136 = vector.load %arg3[%c14, %c0_110, %c0_111] : memref<16x256x64xbf16, #tpu.memory_space<vmem>>, vector<1x256x64xbf16>
    %137 = vector.shape_cast %136 : vector<1x256x64xbf16> to vector<256x64xbf16>
    %cst_112 = arith.constant dense<0.000000e+00> : vector<8x64xf32>
    %138 = tpu.matmul %22, %137, %cst_112 {dimension_numbers = #tpu.dot_dimension_numbers<[1], [0], [0], [1], [0, 0, 1, 1], [], []>} : vector<8x256xbf16>, vector<256x64xbf16>, vector<8x64xf32> -> vector<8x64xf32>
    %c14_113 = arith.constant 14 : index
    %c0_114 = arith.constant 0 : index
    %c0_115 = arith.constant 0 : index
    %139 = vector.load %arg4[%c14_113, %c0_114, %c0_115] : memref<16x16x8xbf16, #tpu.memory_space<vmem>>, vector<1x16x8xbf16>
    %140 = vector.shape_cast %139 : vector<1x16x8xbf16> to vector<16x8xbf16>
    %141 = arith.truncf %138 : vector<8x64xf32> to vector<8x64xbf16>
    %cst_116 = arith.constant dense<0.000000e+00> : vector<16x64xf32>
    %142 = tpu.matmul %140, %141, %cst_116 {dimension_numbers = #tpu.dot_dimension_numbers<[1], [0], [0], [1], [0, 0, 1, 1], [], []>} : vector<16x8xbf16>, vector<8x64xbf16>, vector<16x64xf32> -> vector<16x64xf32>
    %143 = arith.addf %135, %142 : vector<16x64xf32>
    %c15 = arith.constant 15 : index
    %c0_117 = arith.constant 0 : index
    %c0_118 = arith.constant 0 : index
    %144 = vector.load %arg3[%c15, %c0_117, %c0_118] : memref<16x256x64xbf16, #tpu.memory_space<vmem>>, vector<1x256x64xbf16>
    %145 = vector.shape_cast %144 : vector<1x256x64xbf16> to vector<256x64xbf16>
    %cst_119 = arith.constant dense<0.000000e+00> : vector<8x64xf32>
    %146 = tpu.matmul %22, %145, %cst_119 {dimension_numbers = #tpu.dot_dimension_numbers<[1], [0], [0], [1], [0, 0, 1, 1], [], []>} : vector<8x256xbf16>, vector<256x64xbf16>, vector<8x64xf32> -> vector<8x64xf32>
    %c15_120 = arith.constant 15 : index
    %c0_121 = arith.constant 0 : index
    %c0_122 = arith.constant 0 : index
    %147 = vector.load %arg4[%c15_120, %c0_121, %c0_122] : memref<16x16x8xbf16, #tpu.memory_space<vmem>>, vector<1x16x8xbf16>
    %148 = vector.shape_cast %147 : vector<1x16x8xbf16> to vector<16x8xbf16>
    %149 = arith.truncf %146 : vector<8x64xf32> to vector<8x64xbf16>
    %cst_123 = arith.constant dense<0.000000e+00> : vector<16x64xf32>
    %150 = tpu.matmul %148, %149, %cst_123 {dimension_numbers = #tpu.dot_dimension_numbers<[1], [0], [0], [1], [0, 0, 1, 1], [], []>} : vector<16x8xbf16>, vector<8x64xbf16>, vector<16x64xf32> -> vector<16x64xf32>
    %151 = arith.addf %143, %150 : vector<16x64xf32>
    %cst_124 = arith.constant dense<0.000000e+00> : vector<16xf32>
    %152 = vector.multi_reduction <add>, %151, %cst_124 [1] : vector<16x64xf32> to vector<16xf32>
    %153 = vector.shape_cast %152 : vector<16xf32> to vector<16x1xf32>
    %cst_125 = arith.constant 6.400000e+01 : f32
    %154 = vector.broadcast %cst_125 : f32 to vector<16x1xf32>
    %155 = arith.divf %153, %154 : vector<16x1xf32>
    %156 = vector.broadcast %155 : vector<16x1xf32> to vector<16x64xf32>
    %157 = arith.subf %151, %156 : vector<16x64xf32>
    %158 = arith.mulf %157, %157 : vector<16x64xf32>
    %cst_126 = arith.constant dense<0.000000e+00> : vector<16xf32>
    %159 = vector.multi_reduction <add>, %158, %cst_126 [1] : vector<16x64xf32> to vector<16xf32>
    %160 = vector.shape_cast %159 : vector<16xf32> to vector<16x1xf32>
    %cst_127 = arith.constant 6.400000e+01 : f32
    %161 = vector.broadcast %cst_127 : f32 to vector<16x1xf32>
    %162 = arith.divf %160, %161 : vector<16x1xf32>
    %cst_128 = arith.constant 9.99999974E-6 : f32
    %163 = vector.broadcast %cst_128 : f32 to vector<16x1xf32>
    %164 = arith.addf %162, %163 : vector<16x1xf32>
    %165 = math.rsqrt %164 : vector<16x1xf32>
    %166 = vector.broadcast %165 : vector<16x1xf32> to vector<16x64xf32>
    %167 = arith.mulf %157, %166 : vector<16x64xf32>
    %cst_129 = arith.constant 0.000000e+00 : f32
    %168 = vector.broadcast %cst_129 : f32 to vector<16x64xf32>
    %169 = arith.maximumf %167, %168 : vector<16x64xf32>
    %170 = arith.truncf %169 : vector<16x64xf32> to vector<16x64xbf16>
    %cst_130 = arith.constant 0.000000e+00 : f32
    %171 = vector.broadcast %cst_130 : f32 to vector<32x16xf32>
    %c0_131 = arith.constant 0 : index
    %c0_132 = arith.constant 0 : index
    %c0_133 = arith.constant 0 : index
    %172 = vector.load %arg5[%c0_131, %c0_132, %c0_133] : memref<16x64x16xbf16, #tpu.memory_space<vmem>>, vector<1x64x16xbf16>
    %173 = vector.shape_cast %172 : vector<1x64x16xbf16> to vector<64x16xbf16>
    %cst_134 = arith.constant dense<0.000000e+00> : vector<16x16xf32>
    %174 = tpu.matmul %170, %173, %cst_134 {dimension_numbers = #tpu.dot_dimension_numbers<[1], [0], [0], [1], [0, 0, 1, 1], [], []>} : vector<16x64xbf16>, vector<64x16xbf16>, vector<16x16xf32> -> vector<16x16xf32>
    %c0_135 = arith.constant 0 : index
    %c0_136 = arith.constant 0 : index
    %c0_137 = arith.constant 0 : index
    %175 = vector.load %arg6[%c0_135, %c0_136, %c0_137] : memref<16x32x16xbf16, #tpu.memory_space<vmem>>, vector<1x32x16xbf16>
    %176 = vector.shape_cast %175 : vector<1x32x16xbf16> to vector<32x16xbf16>
    %177 = arith.truncf %174 : vector<16x16xf32> to vector<16x16xbf16>
    %cst_138 = arith.constant dense<0.000000e+00> : vector<32x16xf32>
    %178 = tpu.matmul %176, %177, %cst_138 {dimension_numbers = #tpu.dot_dimension_numbers<[1], [0], [0], [1], [0, 0, 1, 1], [], []>} : vector<32x16xbf16>, vector<16x16xbf16>, vector<32x16xf32> -> vector<32x16xf32>
    %179 = arith.addf %171, %178 : vector<32x16xf32>
    %c1_139 = arith.constant 1 : index
    %c0_140 = arith.constant 0 : index
    %c0_141 = arith.constant 0 : index
    %180 = vector.load %arg5[%c1_139, %c0_140, %c0_141] : memref<16x64x16xbf16, #tpu.memory_space<vmem>>, vector<1x64x16xbf16>
    %181 = vector.shape_cast %180 : vector<1x64x16xbf16> to vector<64x16xbf16>
    %cst_142 = arith.constant dense<0.000000e+00> : vector<16x16xf32>
    %182 = tpu.matmul %170, %181, %cst_142 {dimension_numbers = #tpu.dot_dimension_numbers<[1], [0], [0], [1], [0, 0, 1, 1], [], []>} : vector<16x64xbf16>, vector<64x16xbf16>, vector<16x16xf32> -> vector<16x16xf32>
    %c1_143 = arith.constant 1 : index
    %c0_144 = arith.constant 0 : index
    %c0_145 = arith.constant 0 : index
    %183 = vector.load %arg6[%c1_143, %c0_144, %c0_145] : memref<16x32x16xbf16, #tpu.memory_space<vmem>>, vector<1x32x16xbf16>
    %184 = vector.shape_cast %183 : vector<1x32x16xbf16> to vector<32x16xbf16>
    %185 = arith.truncf %182 : vector<16x16xf32> to vector<16x16xbf16>
    %cst_146 = arith.constant dense<0.000000e+00> : vector<32x16xf32>
    %186 = tpu.matmul %184, %185, %cst_146 {dimension_numbers = #tpu.dot_dimension_numbers<[1], [0], [0], [1], [0, 0, 1, 1], [], []>} : vector<32x16xbf16>, vector<16x16xbf16>, vector<32x16xf32> -> vector<32x16xf32>
    %187 = arith.addf %179, %186 : vector<32x16xf32>
    %c2_147 = arith.constant 2 : index
    %c0_148 = arith.constant 0 : index
    %c0_149 = arith.constant 0 : index
    %188 = vector.load %arg5[%c2_147, %c0_148, %c0_149] : memref<16x64x16xbf16, #tpu.memory_space<vmem>>, vector<1x64x16xbf16>
    %189 = vector.shape_cast %188 : vector<1x64x16xbf16> to vector<64x16xbf16>
    %cst_150 = arith.constant dense<0.000000e+00> : vector<16x16xf32>
    %190 = tpu.matmul %170, %189, %cst_150 {dimension_numbers = #tpu.dot_dimension_numbers<[1], [0], [0], [1], [0, 0, 1, 1], [], []>} : vector<16x64xbf16>, vector<64x16xbf16>, vector<16x16xf32> -> vector<16x16xf32>
    %c2_151 = arith.constant 2 : index
    %c0_152 = arith.constant 0 : index
    %c0_153 = arith.constant 0 : index
    %191 = vector.load %arg6[%c2_151, %c0_152, %c0_153] : memref<16x32x16xbf16, #tpu.memory_space<vmem>>, vector<1x32x16xbf16>
    %192 = vector.shape_cast %191 : vector<1x32x16xbf16> to vector<32x16xbf16>
    %193 = arith.truncf %190 : vector<16x16xf32> to vector<16x16xbf16>
    %cst_154 = arith.constant dense<0.000000e+00> : vector<32x16xf32>
    %194 = tpu.matmul %192, %193, %cst_154 {dimension_numbers = #tpu.dot_dimension_numbers<[1], [0], [0], [1], [0, 0, 1, 1], [], []>} : vector<32x16xbf16>, vector<16x16xbf16>, vector<32x16xf32> -> vector<32x16xf32>
    %195 = arith.addf %187, %194 : vector<32x16xf32>
    %c3_155 = arith.constant 3 : index
    %c0_156 = arith.constant 0 : index
    %c0_157 = arith.constant 0 : index
    %196 = vector.load %arg5[%c3_155, %c0_156, %c0_157] : memref<16x64x16xbf16, #tpu.memory_space<vmem>>, vector<1x64x16xbf16>
    %197 = vector.shape_cast %196 : vector<1x64x16xbf16> to vector<64x16xbf16>
    %cst_158 = arith.constant dense<0.000000e+00> : vector<16x16xf32>
    %198 = tpu.matmul %170, %197, %cst_158 {dimension_numbers = #tpu.dot_dimension_numbers<[1], [0], [0], [1], [0, 0, 1, 1], [], []>} : vector<16x64xbf16>, vector<64x16xbf16>, vector<16x16xf32> -> vector<16x16xf32>
    %c3_159 = arith.constant 3 : index
    %c0_160 = arith.constant 0 : index
    %c0_161 = arith.constant 0 : index
    %199 = vector.load %arg6[%c3_159, %c0_160, %c0_161] : memref<16x32x16xbf16, #tpu.memory_space<vmem>>, vector<1x32x16xbf16>
    %200 = vector.shape_cast %199 : vector<1x32x16xbf16> to vector<32x16xbf16>
    %201 = arith.truncf %198 : vector<16x16xf32> to vector<16x16xbf16>
    %cst_162 = arith.constant dense<0.000000e+00> : vector<32x16xf32>
    %202 = tpu.matmul %200, %201, %cst_162 {dimension_numbers = #tpu.dot_dimension_numbers<[1], [0], [0], [1], [0, 0, 1, 1], [], []>} : vector<32x16xbf16>, vector<16x16xbf16>, vector<32x16xf32> -> vector<32x16xf32>
    %203 = arith.addf %195, %202 : vector<32x16xf32>
    %c4_163 = arith.constant 4 : index
    %c0_164 = arith.constant 0 : index
    %c0_165 = arith.constant 0 : index
    %204 = vector.load %arg5[%c4_163, %c0_164, %c0_165] : memref<16x64x16xbf16, #tpu.memory_space<vmem>>, vector<1x64x16xbf16>
    %205 = vector.shape_cast %204 : vector<1x64x16xbf16> to vector<64x16xbf16>
    %cst_166 = arith.constant dense<0.000000e+00> : vector<16x16xf32>
    %206 = tpu.matmul %170, %205, %cst_166 {dimension_numbers = #tpu.dot_dimension_numbers<[1], [0], [0], [1], [0, 0, 1, 1], [], []>} : vector<16x64xbf16>, vector<64x16xbf16>, vector<16x16xf32> -> vector<16x16xf32>
    %c4_167 = arith.constant 4 : index
    %c0_168 = arith.constant 0 : index
    %c0_169 = arith.constant 0 : index
    %207 = vector.load %arg6[%c4_167, %c0_168, %c0_169] : memref<16x32x16xbf16, #tpu.memory_space<vmem>>, vector<1x32x16xbf16>
    %208 = vector.shape_cast %207 : vector<1x32x16xbf16> to vector<32x16xbf16>
    %209 = arith.truncf %206 : vector<16x16xf32> to vector<16x16xbf16>
    %cst_170 = arith.constant dense<0.000000e+00> : vector<32x16xf32>
    %210 = tpu.matmul %208, %209, %cst_170 {dimension_numbers = #tpu.dot_dimension_numbers<[1], [0], [0], [1], [0, 0, 1, 1], [], []>} : vector<32x16xbf16>, vector<16x16xbf16>, vector<32x16xf32> -> vector<32x16xf32>
    %211 = arith.addf %203, %210 : vector<32x16xf32>
    %c5_171 = arith.constant 5 : index
    %c0_172 = arith.constant 0 : index
    %c0_173 = arith.constant 0 : index
    %212 = vector.load %arg5[%c5_171, %c0_172, %c0_173] : memref<16x64x16xbf16, #tpu.memory_space<vmem>>, vector<1x64x16xbf16>
    %213 = vector.shape_cast %212 : vector<1x64x16xbf16> to vector<64x16xbf16>
    %cst_174 = arith.constant dense<0.000000e+00> : vector<16x16xf32>
    %214 = tpu.matmul %170, %213, %cst_174 {dimension_numbers = #tpu.dot_dimension_numbers<[1], [0], [0], [1], [0, 0, 1, 1], [], []>} : vector<16x64xbf16>, vector<64x16xbf16>, vector<16x16xf32> -> vector<16x16xf32>
    %c5_175 = arith.constant 5 : index
    %c0_176 = arith.constant 0 : index
    %c0_177 = arith.constant 0 : index
    %215 = vector.load %arg6[%c5_175, %c0_176, %c0_177] : memref<16x32x16xbf16, #tpu.memory_space<vmem>>, vector<1x32x16xbf16>
    %216 = vector.shape_cast %215 : vector<1x32x16xbf16> to vector<32x16xbf16>
    %217 = arith.truncf %214 : vector<16x16xf32> to vector<16x16xbf16>
    %cst_178 = arith.constant dense<0.000000e+00> : vector<32x16xf32>
    %218 = tpu.matmul %216, %217, %cst_178 {dimension_numbers = #tpu.dot_dimension_numbers<[1], [0], [0], [1], [0, 0, 1, 1], [], []>} : vector<32x16xbf16>, vector<16x16xbf16>, vector<32x16xf32> -> vector<32x16xf32>
    %219 = arith.addf %211, %218 : vector<32x16xf32>
    %c6_179 = arith.constant 6 : index
    %c0_180 = arith.constant 0 : index
    %c0_181 = arith.constant 0 : index
    %220 = vector.load %arg5[%c6_179, %c0_180, %c0_181] : memref<16x64x16xbf16, #tpu.memory_space<vmem>>, vector<1x64x16xbf16>
    %221 = vector.shape_cast %220 : vector<1x64x16xbf16> to vector<64x16xbf16>
    %cst_182 = arith.constant dense<0.000000e+00> : vector<16x16xf32>
    %222 = tpu.matmul %170, %221, %cst_182 {dimension_numbers = #tpu.dot_dimension_numbers<[1], [0], [0], [1], [0, 0, 1, 1], [], []>} : vector<16x64xbf16>, vector<64x16xbf16>, vector<16x16xf32> -> vector<16x16xf32>
    %c6_183 = arith.constant 6 : index
    %c0_184 = arith.constant 0 : index
    %c0_185 = arith.constant 0 : index
    %223 = vector.load %arg6[%c6_183, %c0_184, %c0_185] : memref<16x32x16xbf16, #tpu.memory_space<vmem>>, vector<1x32x16xbf16>
    %224 = vector.shape_cast %223 : vector<1x32x16xbf16> to vector<32x16xbf16>
    %225 = arith.truncf %222 : vector<16x16xf32> to vector<16x16xbf16>
    %cst_186 = arith.constant dense<0.000000e+00> : vector<32x16xf32>
    %226 = tpu.matmul %224, %225, %cst_186 {dimension_numbers = #tpu.dot_dimension_numbers<[1], [0], [0], [1], [0, 0, 1, 1], [], []>} : vector<32x16xbf16>, vector<16x16xbf16>, vector<32x16xf32> -> vector<32x16xf32>
    %227 = arith.addf %219, %226 : vector<32x16xf32>
    %c7_187 = arith.constant 7 : index
    %c0_188 = arith.constant 0 : index
    %c0_189 = arith.constant 0 : index
    %228 = vector.load %arg5[%c7_187, %c0_188, %c0_189] : memref<16x64x16xbf16, #tpu.memory_space<vmem>>, vector<1x64x16xbf16>
    %229 = vector.shape_cast %228 : vector<1x64x16xbf16> to vector<64x16xbf16>
    %cst_190 = arith.constant dense<0.000000e+00> : vector<16x16xf32>
    %230 = tpu.matmul %170, %229, %cst_190 {dimension_numbers = #tpu.dot_dimension_numbers<[1], [0], [0], [1], [0, 0, 1, 1], [], []>} : vector<16x64xbf16>, vector<64x16xbf16>, vector<16x16xf32> -> vector<16x16xf32>
    %c7_191 = arith.constant 7 : index
    %c0_192 = arith.constant 0 : index
    %c0_193 = arith.constant 0 : index
    %231 = vector.load %arg6[%c7_191, %c0_192, %c0_193] : memref<16x32x16xbf16, #tpu.memory_space<vmem>>, vector<1x32x16xbf16>
    %232 = vector.shape_cast %231 : vector<1x32x16xbf16> to vector<32x16xbf16>
    %233 = arith.truncf %230 : vector<16x16xf32> to vector<16x16xbf16>
    %cst_194 = arith.constant dense<0.000000e+00> : vector<32x16xf32>
    %234 = tpu.matmul %232, %233, %cst_194 {dimension_numbers = #tpu.dot_dimension_numbers<[1], [0], [0], [1], [0, 0, 1, 1], [], []>} : vector<32x16xbf16>, vector<16x16xbf16>, vector<32x16xf32> -> vector<32x16xf32>
    %235 = arith.addf %227, %234 : vector<32x16xf32>
    %c8_195 = arith.constant 8 : index
    %c0_196 = arith.constant 0 : index
    %c0_197 = arith.constant 0 : index
    %236 = vector.load %arg5[%c8_195, %c0_196, %c0_197] : memref<16x64x16xbf16, #tpu.memory_space<vmem>>, vector<1x64x16xbf16>
    %237 = vector.shape_cast %236 : vector<1x64x16xbf16> to vector<64x16xbf16>
    %cst_198 = arith.constant dense<0.000000e+00> : vector<16x16xf32>
    %238 = tpu.matmul %170, %237, %cst_198 {dimension_numbers = #tpu.dot_dimension_numbers<[1], [0], [0], [1], [0, 0, 1, 1], [], []>} : vector<16x64xbf16>, vector<64x16xbf16>, vector<16x16xf32> -> vector<16x16xf32>
    %c8_199 = arith.constant 8 : index
    %c0_200 = arith.constant 0 : index
    %c0_201 = arith.constant 0 : index
    %239 = vector.load %arg6[%c8_199, %c0_200, %c0_201] : memref<16x32x16xbf16, #tpu.memory_space<vmem>>, vector<1x32x16xbf16>
    %240 = vector.shape_cast %239 : vector<1x32x16xbf16> to vector<32x16xbf16>
    %241 = arith.truncf %238 : vector<16x16xf32> to vector<16x16xbf16>
    %cst_202 = arith.constant dense<0.000000e+00> : vector<32x16xf32>
    %242 = tpu.matmul %240, %241, %cst_202 {dimension_numbers = #tpu.dot_dimension_numbers<[1], [0], [0], [1], [0, 0, 1, 1], [], []>} : vector<32x16xbf16>, vector<16x16xbf16>, vector<32x16xf32> -> vector<32x16xf32>
    %243 = arith.addf %235, %242 : vector<32x16xf32>
    %c9_203 = arith.constant 9 : index
    %c0_204 = arith.constant 0 : index
    %c0_205 = arith.constant 0 : index
    %244 = vector.load %arg5[%c9_203, %c0_204, %c0_205] : memref<16x64x16xbf16, #tpu.memory_space<vmem>>, vector<1x64x16xbf16>
    %245 = vector.shape_cast %244 : vector<1x64x16xbf16> to vector<64x16xbf16>
    %cst_206 = arith.constant dense<0.000000e+00> : vector<16x16xf32>
    %246 = tpu.matmul %170, %245, %cst_206 {dimension_numbers = #tpu.dot_dimension_numbers<[1], [0], [0], [1], [0, 0, 1, 1], [], []>} : vector<16x64xbf16>, vector<64x16xbf16>, vector<16x16xf32> -> vector<16x16xf32>
    %c9_207 = arith.constant 9 : index
    %c0_208 = arith.constant 0 : index
    %c0_209 = arith.constant 0 : index
    %247 = vector.load %arg6[%c9_207, %c0_208, %c0_209] : memref<16x32x16xbf16, #tpu.memory_space<vmem>>, vector<1x32x16xbf16>
    %248 = vector.shape_cast %247 : vector<1x32x16xbf16> to vector<32x16xbf16>
    %249 = arith.truncf %246 : vector<16x16xf32> to vector<16x16xbf16>
    %cst_210 = arith.constant dense<0.000000e+00> : vector<32x16xf32>
    %250 = tpu.matmul %248, %249, %cst_210 {dimension_numbers = #tpu.dot_dimension_numbers<[1], [0], [0], [1], [0, 0, 1, 1], [], []>} : vector<32x16xbf16>, vector<16x16xbf16>, vector<32x16xf32> -> vector<32x16xf32>
    %251 = arith.addf %243, %250 : vector<32x16xf32>
    %c10_211 = arith.constant 10 : index
    %c0_212 = arith.constant 0 : index
    %c0_213 = arith.constant 0 : index
    %252 = vector.load %arg5[%c10_211, %c0_212, %c0_213] : memref<16x64x16xbf16, #tpu.memory_space<vmem>>, vector<1x64x16xbf16>
    %253 = vector.shape_cast %252 : vector<1x64x16xbf16> to vector<64x16xbf16>
    %cst_214 = arith.constant dense<0.000000e+00> : vector<16x16xf32>
    %254 = tpu.matmul %170, %253, %cst_214 {dimension_numbers = #tpu.dot_dimension_numbers<[1], [0], [0], [1], [0, 0, 1, 1], [], []>} : vector<16x64xbf16>, vector<64x16xbf16>, vector<16x16xf32> -> vector<16x16xf32>
    %c10_215 = arith.constant 10 : index
    %c0_216 = arith.constant 0 : index
    %c0_217 = arith.constant 0 : index
    %255 = vector.load %arg6[%c10_215, %c0_216, %c0_217] : memref<16x32x16xbf16, #tpu.memory_space<vmem>>, vector<1x32x16xbf16>
    %256 = vector.shape_cast %255 : vector<1x32x16xbf16> to vector<32x16xbf16>
    %257 = arith.truncf %254 : vector<16x16xf32> to vector<16x16xbf16>
    %cst_218 = arith.constant dense<0.000000e+00> : vector<32x16xf32>
    %258 = tpu.matmul %256, %257, %cst_218 {dimension_numbers = #tpu.dot_dimension_numbers<[1], [0], [0], [1], [0, 0, 1, 1], [], []>} : vector<32x16xbf16>, vector<16x16xbf16>, vector<32x16xf32> -> vector<32x16xf32>
    %259 = arith.addf %251, %258 : vector<32x16xf32>
    %c11_219 = arith.constant 11 : index
    %c0_220 = arith.constant 0 : index
    %c0_221 = arith.constant 0 : index
    %260 = vector.load %arg5[%c11_219, %c0_220, %c0_221] : memref<16x64x16xbf16, #tpu.memory_space<vmem>>, vector<1x64x16xbf16>
    %261 = vector.shape_cast %260 : vector<1x64x16xbf16> to vector<64x16xbf16>
    %cst_222 = arith.constant dense<0.000000e+00> : vector<16x16xf32>
    %262 = tpu.matmul %170, %261, %cst_222 {dimension_numbers = #tpu.dot_dimension_numbers<[1], [0], [0], [1], [0, 0, 1, 1], [], []>} : vector<16x64xbf16>, vector<64x16xbf16>, vector<16x16xf32> -> vector<16x16xf32>
    %c11_223 = arith.constant 11 : index
    %c0_224 = arith.constant 0 : index
    %c0_225 = arith.constant 0 : index
    %263 = vector.load %arg6[%c11_223, %c0_224, %c0_225] : memref<16x32x16xbf16, #tpu.memory_space<vmem>>, vector<1x32x16xbf16>
    %264 = vector.shape_cast %263 : vector<1x32x16xbf16> to vector<32x16xbf16>
    %265 = arith.truncf %262 : vector<16x16xf32> to vector<16x16xbf16>
    %cst_226 = arith.constant dense<0.000000e+00> : vector<32x16xf32>
    %266 = tpu.matmul %264, %265, %cst_226 {dimension_numbers = #tpu.dot_dimension_numbers<[1], [0], [0], [1], [0, 0, 1, 1], [], []>} : vector<32x16xbf16>, vector<16x16xbf16>, vector<32x16xf32> -> vector<32x16xf32>
    %267 = arith.addf %259, %266 : vector<32x16xf32>
    %c12_227 = arith.constant 12 : index
    %c0_228 = arith.constant 0 : index
    %c0_229 = arith.constant 0 : index
    %268 = vector.load %arg5[%c12_227, %c0_228, %c0_229] : memref<16x64x16xbf16, #tpu.memory_space<vmem>>, vector<1x64x16xbf16>
    %269 = vector.shape_cast %268 : vector<1x64x16xbf16> to vector<64x16xbf16>
    %cst_230 = arith.constant dense<0.000000e+00> : vector<16x16xf32>
    %270 = tpu.matmul %170, %269, %cst_230 {dimension_numbers = #tpu.dot_dimension_numbers<[1], [0], [0], [1], [0, 0, 1, 1], [], []>} : vector<16x64xbf16>, vector<64x16xbf16>, vector<16x16xf32> -> vector<16x16xf32>
    %c12_231 = arith.constant 12 : index
    %c0_232 = arith.constant 0 : index
    %c0_233 = arith.constant 0 : index
    %271 = vector.load %arg6[%c12_231, %c0_232, %c0_233] : memref<16x32x16xbf16, #tpu.memory_space<vmem>>, vector<1x32x16xbf16>
    %272 = vector.shape_cast %271 : vector<1x32x16xbf16> to vector<32x16xbf16>
    %273 = arith.truncf %270 : vector<16x16xf32> to vector<16x16xbf16>
    %cst_234 = arith.constant dense<0.000000e+00> : vector<32x16xf32>
    %274 = tpu.matmul %272, %273, %cst_234 {dimension_numbers = #tpu.dot_dimension_numbers<[1], [0], [0], [1], [0, 0, 1, 1], [], []>} : vector<32x16xbf16>, vector<16x16xbf16>, vector<32x16xf32> -> vector<32x16xf32>
    %275 = arith.addf %267, %274 : vector<32x16xf32>
    %c13_235 = arith.constant 13 : index
    %c0_236 = arith.constant 0 : index
    %c0_237 = arith.constant 0 : index
    %276 = vector.load %arg5[%c13_235, %c0_236, %c0_237] : memref<16x64x16xbf16, #tpu.memory_space<vmem>>, vector<1x64x16xbf16>
    %277 = vector.shape_cast %276 : vector<1x64x16xbf16> to vector<64x16xbf16>
    %cst_238 = arith.constant dense<0.000000e+00> : vector<16x16xf32>
    %278 = tpu.matmul %170, %277, %cst_238 {dimension_numbers = #tpu.dot_dimension_numbers<[1], [0], [0], [1], [0, 0, 1, 1], [], []>} : vector<16x64xbf16>, vector<64x16xbf16>, vector<16x16xf32> -> vector<16x16xf32>
    %c13_239 = arith.constant 13 : index
    %c0_240 = arith.constant 0 : index
    %c0_241 = arith.constant 0 : index
    %279 = vector.load %arg6[%c13_239, %c0_240, %c0_241] : memref<16x32x16xbf16, #tpu.memory_space<vmem>>, vector<1x32x16xbf16>
    %280 = vector.shape_cast %279 : vector<1x32x16xbf16> to vector<32x16xbf16>
    %281 = arith.truncf %278 : vector<16x16xf32> to vector<16x16xbf16>
    %cst_242 = arith.constant dense<0.000000e+00> : vector<32x16xf32>
    %282 = tpu.matmul %280, %281, %cst_242 {dimension_numbers = #tpu.dot_dimension_numbers<[1], [0], [0], [1], [0, 0, 1, 1], [], []>} : vector<32x16xbf16>, vector<16x16xbf16>, vector<32x16xf32> -> vector<32x16xf32>
    %283 = arith.addf %275, %282 : vector<32x16xf32>
    %c14_243 = arith.constant 14 : index
    %c0_244 = arith.constant 0 : index
    %c0_245 = arith.constant 0 : index
    %284 = vector.load %arg5[%c14_243, %c0_244, %c0_245] : memref<16x64x16xbf16, #tpu.memory_space<vmem>>, vector<1x64x16xbf16>
    %285 = vector.shape_cast %284 : vector<1x64x16xbf16> to vector<64x16xbf16>
    %cst_246 = arith.constant dense<0.000000e+00> : vector<16x16xf32>
    %286 = tpu.matmul %170, %285, %cst_246 {dimension_numbers = #tpu.dot_dimension_numbers<[1], [0], [0], [1], [0, 0, 1, 1], [], []>} : vector<16x64xbf16>, vector<64x16xbf16>, vector<16x16xf32> -> vector<16x16xf32>
    %c14_247 = arith.constant 14 : index
    %c0_248 = arith.constant 0 : index
    %c0_249 = arith.constant 0 : index
    %287 = vector.load %arg6[%c14_247, %c0_248, %c0_249] : memref<16x32x16xbf16, #tpu.memory_space<vmem>>, vector<1x32x16xbf16>
    %288 = vector.shape_cast %287 : vector<1x32x16xbf16> to vector<32x16xbf16>
    %289 = arith.truncf %286 : vector<16x16xf32> to vector<16x16xbf16>
    %cst_250 = arith.constant dense<0.000000e+00> : vector<32x16xf32>
    %290 = tpu.matmul %288, %289, %cst_250 {dimension_numbers = #tpu.dot_dimension_numbers<[1], [0], [0], [1], [0, 0, 1, 1], [], []>} : vector<32x16xbf16>, vector<16x16xbf16>, vector<32x16xf32> -> vector<32x16xf32>
    %291 = arith.addf %283, %290 : vector<32x16xf32>
    %c15_251 = arith.constant 15 : index
    %c0_252 = arith.constant 0 : index
    %c0_253 = arith.constant 0 : index
    %292 = vector.load %arg5[%c15_251, %c0_252, %c0_253] : memref<16x64x16xbf16, #tpu.memory_space<vmem>>, vector<1x64x16xbf16>
    %293 = vector.shape_cast %292 : vector<1x64x16xbf16> to vector<64x16xbf16>
    %cst_254 = arith.constant dense<0.000000e+00> : vector<16x16xf32>
    %294 = tpu.matmul %170, %293, %cst_254 {dimension_numbers = #tpu.dot_dimension_numbers<[1], [0], [0], [1], [0, 0, 1, 1], [], []>} : vector<16x64xbf16>, vector<64x16xbf16>, vector<16x16xf32> -> vector<16x16xf32>
    %c15_255 = arith.constant 15 : index
    %c0_256 = arith.constant 0 : index
    %c0_257 = arith.constant 0 : index
    %295 = vector.load %arg6[%c15_255, %c0_256, %c0_257] : memref<16x32x16xbf16, #tpu.memory_space<vmem>>, vector<1x32x16xbf16>
    %296 = vector.shape_cast %295 : vector<1x32x16xbf16> to vector<32x16xbf16>
    %297 = arith.truncf %294 : vector<16x16xf32> to vector<16x16xbf16>
    %cst_258 = arith.constant dense<0.000000e+00> : vector<32x16xf32>
    %298 = tpu.matmul %296, %297, %cst_258 {dimension_numbers = #tpu.dot_dimension_numbers<[1], [0], [0], [1], [0, 0, 1, 1], [], []>} : vector<32x16xbf16>, vector<16x16xbf16>, vector<32x16xf32> -> vector<32x16xf32>
    %299 = arith.addf %291, %298 : vector<32x16xf32>
    %cst_259 = arith.constant dense<0.000000e+00> : vector<32xf32>
    %300 = vector.multi_reduction <add>, %299, %cst_259 [1] : vector<32x16xf32> to vector<32xf32>
    %301 = vector.shape_cast %300 : vector<32xf32> to vector<32x1xf32>
    %cst_260 = arith.constant 1.600000e+01 : f32
    %302 = vector.broadcast %cst_260 : f32 to vector<32x1xf32>
    %303 = arith.divf %301, %302 : vector<32x1xf32>
    %304 = vector.broadcast %303 : vector<32x1xf32> to vector<32x16xf32>
    %305 = arith.subf %299, %304 : vector<32x16xf32>
    %306 = arith.mulf %305, %305 : vector<32x16xf32>
    %cst_261 = arith.constant dense<0.000000e+00> : vector<32xf32>
    %307 = vector.multi_reduction <add>, %306, %cst_261 [1] : vector<32x16xf32> to vector<32xf32>
    %308 = vector.shape_cast %307 : vector<32xf32> to vector<32x1xf32>
    %cst_262 = arith.constant 1.600000e+01 : f32
    %309 = vector.broadcast %cst_262 : f32 to vector<32x1xf32>
    %310 = arith.divf %308, %309 : vector<32x1xf32>
    %cst_263 = arith.constant 9.99999974E-6 : f32
    %311 = vector.broadcast %cst_263 : f32 to vector<32x1xf32>
    %312 = arith.addf %310, %311 : vector<32x1xf32>
    %313 = math.rsqrt %312 : vector<32x1xf32>
    %314 = vector.broadcast %313 : vector<32x1xf32> to vector<32x16xf32>
    %315 = arith.mulf %305, %314 : vector<32x16xf32>
    %cst_264 = arith.constant 0.000000e+00 : f32
    %316 = vector.broadcast %cst_264 : f32 to vector<32x16xf32>
    %317 = arith.maximumf %315, %316 : vector<32x16xf32>
    %c0_265 = arith.constant 0 : index
    %c0_266 = arith.constant 0 : index
    %c0_267 = arith.constant 0 : index
    %318 = vector.load %arg7[%c0_265, %c0_266, %c0_267] : memref<1x32x16xf32, #tpu.memory_space<vmem>>, vector<1x32x16xf32>
    %319 = vector.shape_cast %318 : vector<1x32x16xf32> to vector<32x16xf32>
    %320 = vector.shape_cast %317 : vector<32x16xf32> to vector<1x32x16xf32>
    tpu.vector_store %arg7[%c0_265, %c0_266, %c0_267], %320 {strides = array<i32>} : memref<1x32x16xf32, #tpu.memory_space<vmem>>, vector<1x32x16xf32>,
    return
  }
  func.func @transform_0(%arg0: i32) -> (i32, i32, i32) {
    %c0_i32 = arith.constant 0 : i32
    %c0_i32_0 = arith.constant 0 : i32
    %c0_i32_1 = arith.constant 0 : i32
    return %arg0, %c0_i32, %c0_i32_0 : i32, i32, i32
  }
  func.func @transform_1(%arg0: i32) -> (i32, i32) {
    %c0_i32 = arith.constant 0 : i32
    %c0_i32_0 = arith.constant 0 : i32
    %c0_i32_1 = arith.constant 0 : i32
    return %c0_i32, %c0_i32_0 : i32, i32
  }
  func.func @transform_2(%arg0: i32) -> (i32, i32, i32) {
    %c0_i32 = arith.constant 0 : i32
    %c0_i32_0 = arith.constant 0 : i32
    %c0_i32_1 = arith.constant 0 : i32
    %c0_i32_2 = arith.constant 0 : i32
    return %c0_i32, %c0_i32_0, %c0_i32_1 : i32, i32, i32
  }
  func.func @transform_3(%arg0: i32) -> (i32, i32, i32) {
    %c0_i32 = arith.constant 0 : i32
    %c0_i32_0 = arith.constant 0 : i32
    %c0_i32_1 = arith.constant 0 : i32
    %c0_i32_2 = arith.constant 0 : i32
    return %c0_i32, %c0_i32_0, %c0_i32_1 : i32, i32, i32
  }
  func.func @transform_4(%arg0: i32) -> (i32, i32, i32) {
    %c0_i32 = arith.constant 0 : i32
    %c0_i32_0 = arith.constant 0 : i32
    %c0_i32_1 = arith.constant 0 : i32
    %c0_i32_2 = arith.constant 0 : i32
    return %c0_i32, %c0_i32_0, %c0_i32_1 : i32, i32, i32
  }
  func.func @transform_5(%arg0: i32) -> (i32, i32, i32) {
    %c0_i32 = arith.constant 0 : i32
    %c0_i32_0 = arith.constant 0 : i32
    %c0_i32_1 = arith.constant 0 : i32
    %c0_i32_2 = arith.constant 0 : i32
    return %c0_i32, %c0_i32_0, %c0_i32_1 : i32, i32, i32
  }
  func.func @transform_6(%arg0: i32) -> (i32, i32, i32) {
    %c0_i32 = arith.constant 0 : i32
    %c0_i32_0 = arith.constant 0 : i32
    %c0_i32_1 = arith.constant 0 : i32
    return %arg0, %c0_i32, %c0_i32_0 : i32, i32, i32
  }
}

</mosaic_0001>

<llo_original>
// kernel: encoder_forward.1
$region0: #{encoder_forward.1}
  #allocation0 [shape = 'u32[]', space=smem, size = 0x4, offset = 0x4, fixed_abs, tag = 'smem constant byte address 0x4 - core index']
  #allocation1 [shape = 'u32[72,128]{1,0:T(1,128)}', space=vmem, size = 0x9000, scoped, tag = 'internal scratch']
  %s0 = inlined_call_operand.vmem [shape: bf16[2,256,256], index: 0, kind: input, shape index: {}]
  %s1 = inlined_call_operand.vmem [shape: bf16[8,256], index: 1, kind: input, shape index: {}]
  %s2 = inlined_call_operand.vmem [shape: bf16[16,256,64], index: 2, kind: input, shape index: {}]
  %s3 = inlined_call_operand.vmem [shape: bf16[16,16,8], index: 3, kind: input, shape index: {}]
  %s4 = inlined_call_operand.vmem [shape: bf16[16,64,16], index: 4, kind: input, shape index: {}]
  %s5 = inlined_call_operand.vmem [shape: bf16[16,32,16], index: 5, kind: input, shape index: {}]
  %s6 = inlined_call_operand.vmem [shape: f32[2,32,16], index: 6, kind: output, shape index: {}]
  %s7 = sld [smem:[#allocation0]]
  $region57: #{encoder_forward.1} parent=0
    _
  %s9 = ssub.s32 1, %s7
  %s10 = scalar_select 0, %s9, %s7
  loop: start=0, step=1, limit=4
  $region2: #{encoder_forward.1} parent=0 // loop_pre_header
    _
  $region3: #{encoder_forward.1} parent=0 // loop_header
    %s12 = sphi 0, %s16
    %p13 = scmp.ge.s32.totalorder %s12, 4
    %s22 = sphi 0, %s24
    %s25 = sphi 0, %s22
    %s26 = sphi 0, %s25
    %s42 = sphi 0, %s26
    %s46 = sphi 0, %s46
    %s48 = sphi 0, %s46
    %s49 = sphi 0, %s48
    %s63 = sphi 0, %s49
    %s67 = sphi 0, %s67
    %s69 = sphi 0, %s67
    %s70 = sphi 0, %s69
    %s84 = sphi 0, %s70
    %s88 = sphi 0, %s88
    %s90 = sphi 0, %s88
    %s91 = sphi 0, %s90
    %s105 = sphi 0, %s91
    %s109 = sphi 0, %s109
    %s111 = sphi 0, %s109
    %s112 = sphi 0, %s111
    %s126 = sphi 0, %s112
    %s130 = sphi 0, %s130
    %s132 = sphi 0, %s130
    %s133 = sphi 0, %s132
    %s147 = sphi 0, %s133
    %s153 = sphi 0, %s155
    %s156 = sphi 0, %s153
    %s157 = sphi 0, %s156
    %s173 = sphi 0, %s157
  $region4: #{encoder_forward.1} parent=0 // loop_header_branch
    %15 = sbr.rel (%p13) target = $region8
  $region5: #{encoder_forward.1} parent=0 // loop_body
    %s17 = ssub.s32 %s12, 1
    %s18 = ssub.s32 %s12, 2
    %s19 = sadd.s32 %s12, 1
    %s20 = ssub.s32 %s12, %s19
    %p21 = scmp.eq.s32.totalorder %s20, 0
    %s23 = sadd.s32 %s22, 1
    %s24 = scalar_select %p21, %s22, %s23
    %p27 = pneg %p21
    %p28 = scmp.eq.s32.totalorder %s12, 1
    %p29 = por %p27, %p28
    %p30 = scmp.ne.s32.totalorder %s22, %s25
    %p31 = scmp.eq.s32.totalorder %s12, 0
    %p32 = por %p30, %p31
    %p33 = scmp.ne.s32.totalorder %s22, %s25
    %p34 = scmp.eq.s32.totalorder %s17, 1
    %p35 = por %p33, %p34
    %p36 = scmp.ne.s32.totalorder %s25, %s26
    %p37 = scmp.eq.s32.totalorder %s17, 0
    %p38 = por %p36, %p37
    %p39 = scmp.ne.s32.totalorder %s25, %s26
    %p40 = scmp.eq.s32.totalorder %s18, 1
    %p41 = por %p39, %p40
    %p43 = scmp.ne.s32.totalorder %s26, %s42
    %p44 = scmp.eq.s32.totalorder %s18, 0
    %p45 = por %p43, %p44
    %s47 = sadd.s32 %s46, 1
    %p50 = scmp.eq.s32.totalorder %s12, 1
    %p51 = scmp.ne.s32.totalorder %s46, %s48
    %p52 = scmp.eq.s32.totalorder %s12, 0
    %p53 = por %p51, %p52
    %p54 = scmp.ne.s32.totalorder %s46, %s48
    %p55 = scmp.eq.s32.totalorder %s17, 1
    %p56 = por %p54, %p55
    %p57 = scmp.ne.s32.totalorder %s48, %s49
    %p58 = scmp.eq.s32.totalorder %s17, 0
    %p59 = por %p57, %p58
    %p60 = scmp.ne.s32.totalorder %s48, %s49
    %p61 = scmp.eq.s32.totalorder %s18, 1
    %p62 = por %p60, %p61
    %p64 = scmp.ne.s32.totalorder %s49, %s63
    %p65 = scmp.eq.s32.totalorder %s18, 0
    %p66 = por %p64, %p65
    %s68 = sadd.s32 %s67, 1
    %p71 = scmp.eq.s32.totalorder %s12, 1
    %p72 = scmp.ne.s32.totalorder %s67, %s69
    %p73 = scmp.eq.s32.totalorder %s12, 0
    %p74 = por %p72, %p73
    %p75 = scmp.ne.s32.totalorder %s67, %s69
    %p76 = scmp.eq.s32.totalorder %s17, 1
    %p77 = por %p75, %p76
    %p78 = scmp.ne.s32.totalorder %s69, %s70
    %p79 = scmp.eq.s32.totalorder %s17, 0
    %p80 = por %p78, %p79
    %p81 = scmp.ne.s32.totalorder %s69, %s70
    %p82 = scmp.eq.s32.totalorder %s18, 1
    %p83 = por %p81, %p82
    %p85 = scmp.ne.s32.totalorder %s70, %s84
    %p86 = scmp.eq.s32.totalorder %s18, 0
    %p87 = por %p85, %p86
    %s89 = sadd.s32 %s88, 1
    %p92 = scmp.eq.s32.totalorder %s12, 1
    %p93 = scmp.ne.s32.totalorder %s88, %s90
    %p94 = scmp.eq.s32.totalorder %s12, 0
    %p95 = por %p93, %p94
    %p96 = scmp.ne.s32.totalorder %s88, %s90
    %p97 = scmp.eq.s32.totalorder %s17, 1
    %p98 = por %p96, %p97
    %p99 = scmp.ne.s32.totalorder %s90, %s91
    %p100 = scmp.eq.s32.totalorder %s17, 0
    %p101 = por %p99, %p100
    %p102 = scmp.ne.s32.totalorder %s90, %s91
    %p103 = scmp.eq.s32.totalorder %s18, 1
    %p104 = por %p102, %p103
    %p106 = scmp.ne.s32.totalorder %s91, %s105
    %p107 = scmp.eq.s32.totalorder %s18, 0
    %p108 = por %p106, %p107
    %s110 = sadd.s32 %s109, 1
    %p113 = scmp.eq.s32.totalorder %s12, 1
    %p114 = scmp.ne.s32.totalorder %s109, %s111
    %p115 = scmp.eq.s32.totalorder %s12, 0
    %p116 = por %p114, %p115
    %p117 = scmp.ne.s32.totalorder %s109, %s111
    %p118 = scmp.eq.s32.totalorder %s17, 1
    %p119 = por %p117, %p118
    %p120 = scmp.ne.s32.totalorder %s111, %s112
    %p121 = scmp.eq.s32.totalorder %s17, 0
    %p122 = por %p120, %p121
    %p123 = scmp.ne.s32.totalorder %s111, %s112
    %p124 = scmp.eq.s32.totalorder %s18, 1
    %p125 = por %p123, %p124
    %p127 = scmp.ne.s32.totalorder %s112, %s126
    %p128 = scmp.eq.s32.totalorder %s18, 0
    %p129 = por %p127, %p128
    %s131 = sadd.s32 %s130, 1
    %p134 = scmp.eq.s32.totalorder %s12, 1
    %p135 = scmp.ne.s32.totalorder %s130, %s132
    %p136 = scmp.eq.s32.totalorder %s12, 0
    %p137 = por %p135, %p136
    %p138 = scmp.ne.s32.totalorder %s130, %s132
    %p139 = scmp.eq.s32.totalorder %s17, 1
    %p140 = por %p138, %p139
    %p141 = scmp.ne.s32.totalorder %s132, %s133
    %p142 = scmp.eq.s32.totalorder %s17, 0
    %p143 = por %p141, %p142
    %p144 = scmp.ne.s32.totalorder %s132, %s133
    %p145 = scmp.eq.s32.totalorder %s18, 1
    %p146 = por %p144, %p145
    %p148 = scmp.ne.s32.totalorder %s133, %s147
    %p149 = scmp.eq.s32.totalorder %s18, 0
    %p150 = por %p148, %p149
    %s151 = ssub.s32 %s12, %s19
    %p152 = scmp.eq.s32.totalorder %s151, 0
    %s154 = sadd.s32 %s153, 1
    %s155 = scalar_select %p152, %s153, %s154
    %p158 = pneg %p152
    %p159 = scmp.eq.s32.totalorder %s12, 1
    %p160 = por %p158, %p159
    %p161 = scmp.ne.s32.totalorder %s153, %s156
    %p162 = scmp.eq.s32.totalorder %s12, 0
    %p163 = por %p161, %p162
    %p164 = scmp.ne.s32.totalorder %s153, %s156
    %p165 = scmp.eq.s32.totalorder %s17, 1
    %p166 = por %p164, %p165
    %p167 = scmp.ne.s32.totalorder %s156, %s157
    %p168 = scmp.eq.s32.totalorder %s17, 0
    %p169 = por %p167, %p168
    %p170 = scmp.ne.s32.totalorder %s156, %s157
    %p171 = scmp.eq.s32.totalorder %s18, 1
    %p172 = por %p170, %p171
    %p174 = scmp.ne.s32.totalorder %s157, %s173
    %p175 = scmp.eq.s32.totalorder %s18, 0
    %p176 = por %p174, %p175
    %p177 = scmp.le.s32.totalorder 1, %s12
    %p178 = scmp.lt.s32.totalorder %s12, 3
    %p179 = pnand %p177, %p178
    %p180 = pneg %p179
    // Predicated region
    $region9: #{encoder_forward.1} parent=5 // pred_check
      _
    $region10: #{encoder_forward.1} parent=5 // pred_check_branch
      %182 = sbr.rel (%p179) target = $region12
    $region11: #{encoder_forward.1} parent=5 // pred_region
      %s183 = ssub.s32 %s12, 1
      // Predicated region
      $region13: #{encoder_forward.1} parent=11 // pred_check
        %p184 = pneg %p59
      $region14: #{encoder_forward.1} parent=11 // pred_check_branch
        %186 = sbr.rel (%p184) target = $region16
      $region15: #{encoder_forward.1} parent=11 // pred_region
        _
      $region16: #{encoder_forward.1} parent=11 // pred_fallthru
        _
      // Predicated region
      $region17: #{encoder_forward.1} parent=11 // pred_check
        %p187 = pneg %p80
      $region18: #{encoder_forward.1} parent=11 // pred_check_branch
        %189 = sbr.rel (%p187) target = $region20
      $region19: #{encoder_forward.1} parent=11 // pred_region
        _
      $region20: #{encoder_forward.1} parent=11 // pred_fallthru
        _
      // Predicated region
      $region21: #{encoder_forward.1} parent=11 // pred_check
        %p190 = pneg %p101
      $region22: #{encoder_forward.1} parent=11 // pred_check_branch
        %192 = sbr.rel (%p190) target = $region24
      $region23: #{encoder_forward.1} parent=11 // pred_region
        _
      $region24: #{encoder_forward.1} parent=11 // pred_fallthru
        _
      // Predicated region
      $region25: #{encoder_forward.1} parent=11 // pred_check
        %p193 = pneg %p122
      $region26: #{encoder_forward.1} parent=11 // pred_check_branch
        %195 = sbr.rel (%p193) target = $region28
      $region27: #{encoder_forward.1} parent=11 // pred_region
        _
      $region28: #{encoder_forward.1} parent=11 // pred_fallthru
        _
      // Predicated region
      $region29: #{encoder_forward.1} parent=11 // pred_check
        %p196 = pneg %p143
      $region30: #{encoder_forward.1} parent=11 // pred_check_branch
        %198 = sbr.rel (%p196) target = $region32
      $region31: #{encoder_forward.1} parent=11 // pred_region
        _
      $region32: #{encoder_forward.1} parent=11 // pred_fallthru
        _
    $region12: #{encoder_forward.1} parent=5 // pred_fallthru
      _
    %p199 = scmp.lt.s32.totalorder %s12, 2
    // Predicated region
    $region33: #{encoder_forward.1} parent=5 // pred_check
      %p200 = pneg %p199
    $region34: #{encoder_forward.1} parent=5 // pred_check_branch
      %202 = sbr.rel (%p200) target = $region36
    $region35: #{encoder_forward.1} parent=5 // pred_region
      // Predicated region
      $region37: #{encoder_forward.1} parent=35 // pred_check
        %p203 = pneg %p32
      $region38: #{encoder_forward.1} parent=35 // pred_check_branch
        %205 = sbr.rel (%p203) target = $region40
      $region39: #{encoder_forward.1} parent=35 // pred_region
        %p206 = scmp.lt.s32.totalorder %s12, 1
        %s207 = scalar_select %p206, %s12, 1
        %s208 = smul.addr %s207, 64
        %s209 = smul.addr %s208, 4
        %s210 = scalar_lea.vmem %s0, %s209
      $region40: #{encoder_forward.1} parent=35 // pred_fallthru
        _
    $region36: #{encoder_forward.1} parent=5 // pred_fallthru
      _
    %p211 = scmp.le.s32.totalorder 1, %s12
    %p212 = scmp.lt.s32.totalorder %s12, 3
    %p213 = pnand %p211, %p212
    %p214 = pneg %p213
    // Predicated region
    $region41: #{encoder_forward.1} parent=5 // pred_check
      _
    $region42: #{encoder_forward.1} parent=5 // pred_check_branch
      %216 = sbr.rel (%p213) target = $region44
    $region43: #{encoder_forward.1} parent=5 // pred_region
      %s217 = ssub.s32 %s12, 1
      %p218 = scmp.lt.s32.totalorder %s17, 1
      %s219 = scalar_select %p218, %s17, 1
      %s220 = smul.addr %s219, 64
      %s221 = smul.addr %s220, 4
      %s222 = scalar_lea.vmem %s0, %s221
      %p223 = pneg %p38
      %p224 = pneg %p35
      %p225 = pneg %p59
      %p226 = pneg %p56
      %p227 = pneg %p80
      %p228 = pneg %p77
      %p229 = pneg %p101
      %p230 = pneg %p98
      %p231 = pneg %p122
      %p232 = pneg %p119
      %p233 = pneg %p143
      %p234 = pneg %p140
      %p235 = pneg %p169
      %p236 = pneg %p166
      %p237 = scmp.lt.s32.totalorder %s17, 1
      %s238 = scalar_select %p237, %s17, 1
      %s239 = smul.addr %s238, 4
      %s240 = smul.addr %s239, 8
      %s241 = scalar_lea.vmem %s6, %s240
      %p242 = scmp.lt.s32.totalorder %s17, 1
      %s243 = scalar_select %p242, %s17, 1
      %s244 = smul.addr %s243, 64
      %s245 = smul.addr %s244, 4
      %s246 = scalar_lea.vmem %s0, %s245
      %p247 = scmp.lt.s32.totalorder %s17, 1
      %s248 = scalar_select %p247, %s17, 1
      %s249 = smul.addr %s248, 4
      %s250 = smul.addr %s249, 8
      %s251 = scalar_lea.vmem %s6, %s250
      %v253 = vld [vmem:[%s1] sm:$0xff]
      %v254 = vld [vmem:[%s246] sm:$0xff]
      %v255 = vld [vmem:[%s246 + $0x8] sm:$0xff]
      %v256 = vld [vmem:[%s246 + $0x10] sm:$0xff]
      %v257 = vld [vmem:[%s246 + $0x18] sm:$0xff]
      %v258 = vld [vmem:[%s246 + $0x20] sm:$0xff]
      %v259 = vld [vmem:[%s246 + $0x28] sm:$0xff]
      %v260 = vld [vmem:[%s246 + $0x30] sm:$0xff]
      %v261 = vld [vmem:[%s246 + $0x38] sm:$0xff]
      %v262 = vld [vmem:[%s246 + $0x40] sm:$0xff]
      %v263 = vld [vmem:[%s246 + $0x48] sm:$0xff]
      %v264 = vld [vmem:[%s246 + $0x50] sm:$0xff]
      %v265 = vld [vmem:[%s246 + $0x58] sm:$0xff]
      %v266 = vld [vmem:[%s246 + $0x60] sm:$0xff]
      %v267 = vld [vmem:[%s246 + $0x68] sm:$0xff]
      %v268 = vld [vmem:[%s246 + $0x70] sm:$0xff]
      %v269 = vld [vmem:[%s246 + $0x78] sm:$0xff]
      %v270 = vld [vmem:[%s246 + $0x80] sm:$0xff]
      %v271 = vld [vmem:[%s246 + $0x88] sm:$0xff]
      %v272 = vld [vmem:[%s246 + $0x90] sm:$0xff]
      %v273 = vld [vmem:[%s246 + $0x98] sm:$0xff]
      %v274 = vld [vmem:[%s246 + $0xa0] sm:$0xff]
      %v275 = vld [vmem:[%s246 + $0xa8] sm:$0xff]
      %v276 = vld [vmem:[%s246 + $0xb0] sm:$0xff]
      %v277 = vld [vmem:[%s246 + $0xb8] sm:$0xff]
      %v278 = vld [vmem:[%s246 + $0xc0] sm:$0xff]
      %v279 = vld [vmem:[%s246 + $0xc8] sm:$0xff]
      %v280 = vld [vmem:[%s246 + $0xd0] sm:$0xff]
      %v281 = vld [vmem:[%s246 + $0xd8] sm:$0xff]
      %v282 = vld [vmem:[%s246 + $0xe0] sm:$0xff]
      %v283 = vld [vmem:[%s246 + $0xe8] sm:$0xff]
      %v284 = vld [vmem:[%s246 + $0xf0] sm:$0xff]
      %v285 = vld [vmem:[%s246 + $0xf8] sm:$0xff]
      %v287 = vunpack.c.l.b16 %v253
      %v288 = vunpack.c.h.b16 %v253
      %v289 = vpack.c.b16 %v287, %v287
      %v290 = vpack.c.b16 %v288, %v288
      %v325 = vunpack.c.l.b16 %v254
      %v326 = vunpack.c.h.b16 %v254
      %v327 = vunpack.c.l.b16 %v255
      %v328 = vunpack.c.h.b16 %v255
      %v329 = vunpack.c.l.b16 %v256
      %v330 = vunpack.c.h.b16 %v256
      %v331 = vunpack.c.l.b16 %v257
      %v332 = vunpack.c.h.b16 %v257
      %v333 = vunpack.c.l.b16 %v258
      %v334 = vunpack.c.h.b16 %v258
      %v335 = vunpack.c.l.b16 %v259
      %v336 = vunpack.c.h.b16 %v259
      %v337 = vunpack.c.l.b16 %v260
      %v338 = vunpack.c.h.b16 %v260
      %v339 = vunpack.c.l.b16 %v261
      %v340 = vunpack.c.h.b16 %v261
      %v341 = vunpack.c.l.b16 %v262
      %v342 = vunpack.c.h.b16 %v262
      %v343 = vunpack.c.l.b16 %v263
      %v344 = vunpack.c.h.b16 %v263
      %v345 = vunpack.c.l.b16 %v264
      %v346 = vunpack.c.h.b16 %v264
      %v347 = vunpack.c.l.b16 %v265
      %v348 = vunpack.c.h.b16 %v265
      %v349 = vunpack.c.l.b16 %v266
      %v350 = vunpack.c.h.b16 %v266
      %v351 = vunpack.c.l.b16 %v267
      %v352 = vunpack.c.h.b16 %v267
      %v353 = vunpack.c.l.b16 %v268
      %v354 = vunpack.c.h.b16 %v268
      %v355 = vunpack.c.l.b16 %v269
      %v356 = vunpack.c.h.b16 %v269
      %v357 = vunpack.c.l.b16 %v270
      %v358 = vunpack.c.h.b16 %v270
      %v359 = vunpack.c.l.b16 %v271
      %v360 = vunpack.c.h.b16 %v271
      %v361 = vunpack.c.l.b16 %v272
      %v362 = vunpack.c.h.b16 %v272
      %v363 = vunpack.c.l.b16 %v273
      %v364 = vunpack.c.h.b16 %v273
      %v365 = vunpack.c.l.b16 %v274
      %v366 = vunpack.c.h.b16 %v274
      %v367 = vunpack.c.l.b16 %v275
      %v368 = vunpack.c.h.b16 %v275
      %v369 = vunpack.c.l.b16 %v276
      %v370 = vunpack.c.h.b16 %v276
      %v371 = vunpack.c.l.b16 %v277
      %v372 = vunpack.c.h.b16 %v277
      %v373 = vunpack.c.l.b16 %v278
      %v374 = vunpack.c.h.b16 %v278
      %v375 = vunpack.c.l.b16 %v279
      %v376 = vunpack.c.h.b16 %v279
      %v377 = vunpack.c.l.b16 %v280
      %v378 = vunpack.c.h.b16 %v280
      %v379 = vunpack.c.l.b16 %v281
      %v380 = vunpack.c.h.b16 %v281
      %v381 = vunpack.c.l.b16 %v282
      %v382 = vunpack.c.h.b16 %v282
      %v383 = vunpack.c.l.b16 %v283
      %v384 = vunpack.c.h.b16 %v283
      %v385 = vunpack.c.l.b16 %v284
      %v386 = vunpack.c.h.b16 %v284
      %v387 = vunpack.c.l.b16 %v285
      %v388 = vunpack.c.h.b16 %v285
      %v389 = vpack.c.b16 %v327, %v325
      %v390 = vpack.c.b16 %v328, %v326
      %v391 = vpack.c.b16 %v331, %v329
      %v392 = vpack.c.b16 %v332, %v330
      %v393 = vpack.c.b16 %v335, %v333
      %v394 = vpack.c.b16 %v336, %v334
      %v395 = vpack.c.b16 %v339, %v337
      %v396 = vpack.c.b16 %v340, %v338
      %v397 = vpack.c.b16 %v343, %v341
      %v398 = vpack.c.b16 %v344, %v342
      %v399 = vpack.c.b16 %v347, %v345
      %v400 = vpack.c.b16 %v348, %v346
      %v401 = vpack.c.b16 %v351, %v349
      %v402 = vpack.c.b16 %v352, %v350
      %v403 = vpack.c.b16 %v355, %v353
      %v404 = vpack.c.b16 %v356, %v354
      %v405 = vpack.c.b16 %v359, %v357
      %v406 = vpack.c.b16 %v360, %v358
      %v407 = vpack.c.b16 %v363, %v361
      %v408 = vpack.c.b16 %v364, %v362
      %v409 = vpack.c.b16 %v367, %v365
      %v410 = vpack.c.b16 %v368, %v366
      %v411 = vpack.c.b16 %v371, %v369
      %v412 = vpack.c.b16 %v372, %v370
      %v413 = vpack.c.b16 %v375, %v373
      %v414 = vpack.c.b16 %v376, %v374
      %v415 = vpack.c.b16 %v379, %v377
      %v416 = vpack.c.b16 %v380, %v378
      %v417 = vpack.c.b16 %v383, %v381
      %v418 = vpack.c.b16 %v384, %v382
      %v419 = vpack.c.b16 %v387, %v385
      %v420 = vpack.c.b16 %v388, %v386
      %453 = vmatpush.bf16.msra.mxu0 %v403
      %454 = vmatpush.bf16.msra.mxu0 %v401
      %455 = vmatpush.bf16.msra.mxu0 %v399
      %456 = vmatpush.bf16.msra.mxu0 %v397
      %457 = vmatpush.bf16.msra.mxu0 %v395
      %458 = vmatpush.bf16.msra.mxu0 %v393
      %459 = vmatpush.bf16.msra.mxu0 %v391
      %460 = vmatpush.bf16.msra.mxu0 %v389
      %461 = vmatmul.bf16.gmra.mxu0 %v289
      %v462 = vpop.f32.mrf.mxu0
      %v463 = vadd.f32 0.0, %v462
      %v464 = vpop.f32.mrf.mxu0
      %465 = vdwg.mxu0
      %466 = vmatpush.bf16.msra.mxu0 %v419
      %467 = vmatpush.bf16.msra.mxu0 %v417
      %468 = vmatpush.bf16.msra.mxu0 %v415
      %469 = vmatpush.bf16.msra.mxu0 %v413
      %470 = vmatpush.bf16.msra.mxu0 %v411
      %471 = vmatpush.bf16.msra.mxu0 %v409
      %472 = vmatpush.bf16.msra.mxu0 %v407
      %473 = vmatpush.bf16.msra.mxu0 %v405
      %474 = vmatmul.bf16.gmra.mxu0 %v290
      %v475 = vpop.f32.mrf.mxu0
      %v476 = vadd.f32 %v463, %v475
      %v477 = vpop.f32.mrf.mxu0
      %478 = vdwg.mxu0
      %479 = vmatpush.bf16.msra.mxu0 %v404
      %480 = vmatpush.bf16.msra.mxu0 %v402
      %481 = vmatpush.bf16.msra.mxu0 %v400
      %482 = vmatpush.bf16.msra.mxu0 %v398
      %483 = vmatpush.bf16.msra.mxu0 %v396
      %484 = vmatpush.bf16.msra.mxu0 %v394
      %485 = vmatpush.bf16.msra.mxu0 %v392
      %486 = vmatpush.bf16.msra.mxu0 %v390
      %487 = vmatmul.bf16.gmra.mxu0 %v289
      %v488 = vpop.f32.mrf.mxu0
      %v489 = vadd.f32 0.0, %v488
      %v490 = vpop.f32.mrf.mxu0
      %491 = vdwg.mxu0
      %492 = vmatpush.bf16.msra.mxu0 %v420
      %493 = vmatpush.bf16.msra.mxu0 %v418
      %494 = vmatpush.bf16.msra.mxu0 %v416
      %495 = vmatpush.bf16.msra.mxu0 %v414
      %496 = vmatpush.bf16.msra.mxu0 %v412
      %497 = vmatpush.bf16.msra.mxu0 %v410
      %498 = vmatpush.bf16.msra.mxu0 %v408
      %499 = vmatpush.bf16.msra.mxu0 %v406
      %500 = vmatmul.bf16.gmra.mxu0 %v290
      %v501 = vpop.f32.mrf.mxu0
      %v502 = vadd.f32 %v489, %v501
      %v503 = vpop.f32.mrf.mxu0
      %504 = vdwg.mxu0
      %v505 = vadd.f32 %v476, %v502
      %506 = vadd.xlane.f32.xlu0 %v505
      %v507 = vpop.xlane.xlu0 %506
      %v508 = vrcp.pop 256.0
      %v509 = vmul.f32 256.0, %v508
      %v510 = vsub.f32 1.0, %v509
      %v511 = vmul.f32 %v508, %v510
      %v512 = vadd.f32 %v508, %v511
      %vm513 = vweird.f32 %v508
      %v514 = vsel %vm513, %v508, %v512
      %v515 = vmul.f32 %v507, %v514
      %v516 = vsub.f32 %v476, %v515
      %v517 = vsub.f32 %v502, %v515
      %v518 = vmul.f32 %v516, %v516
      %v519 = vmul.f32 %v517, %v517
      %v520 = vadd.f32 %v518, %v519
      %521 = vadd.xlane.f32.xlu0 %v520
      %v522 = vpop.xlane.xlu0 %521
      %v523 = vmul.f32 %v522, %v514
      %v524 = vadd.f32 %v523, 1e-05
      %v525 = vrsqrt.pop %v524
      %v526 = vmul.f32 %v525, %v524
      %v527 = vmul.f32 %v526, %v525
      %v528 = vmul.f32 0.5, %v527
      %v529 = vsub.f32 1.5, %v528
      %v530 = vmul.f32 %v525, %v529
      %vm531 = vweird.f32 %v524
      %vm532 = vweird.f32 %v525
      %vm533 = vmor %vm531, %vm532
      %v534 = vsel %vm533, %v525, %v530
      %v535 = vmul.f32 %v516, %v534
      %v536 = vmul.f32 %v517, %v534
      %v537 = vmax.f32 %v535, 0.0
      %v538 = vmax.f32 %v536, 0.0
      %v539 = vpack.c.bf16 %v537, %v537
      %v540 = vpack.c.bf16 %v538, %v538
      %v541 = vld [vmem:[%s2] sm:$0xf]
      %v542 = vld [vmem:[%s2 + $0x4] sm:$0xf]
      %v543 = vld [vmem:[%s2 + $0x8] sm:$0xf]
      %v544 = vld [vmem:[%s2 + $0xc] sm:$0xf]
      %v545 = vld [vmem:[%s2 + $0x10] sm:$0xf]
      %v546 = vld [vmem:[%s2 + $0x14] sm:$0xf]
      %v547 = vld [vmem:[%s2 + $0x18] sm:$0xf]
      %v548 = vld [vmem:[%s2 + $0x1c] sm:$0xf]
      %v549 = vld [vmem:[%s2 + $0x20] sm:$0xf]
      %v550 = vld [vmem:[%s2 + $0x24] sm:$0xf]
      %v551 = vld [vmem:[%s2 + $0x28] sm:$0xf]
      %v552 = vld [vmem:[%s2 + $0x2c] sm:$0xf]
      %v553 = vld [vmem:[%s2 + $0x30] sm:$0xf]
      %v554 = vld [vmem:[%s2 + $0x34] sm:$0xf]
      %v555 = vld [vmem:[%s2 + $0x38] sm:$0xf]
      %v556 = vld [vmem:[%s2 + $0x3c] sm:$0xf]
      %v557 = vld [vmem:[%s2 + $0x40] sm:$0xf]
      %v558 = vld [vmem:[%s2 + $0x44] sm:$0xf]
      %v559 = vld [vmem:[%s2 + $0x48] sm:$0xf]
      %v560 = vld [vmem:[%s2 + $0x4c] sm:$0xf]
      %v561 = vld [vmem:[%s2 + $0x50] sm:$0xf]
      %v562 = vld [vmem:[%s2 + $0x54] sm:$0xf]
      %v563 = vld [vmem:[%s2 + $0x58] sm:$0xf]
      %v564 = vld [vmem:[%s2 + $0x5c] sm:$0xf]
      %v565 = vld [vmem:[%s2 + $0x60] sm:$0xf]
      %v566 = vld [vmem:[%s2 + $0x64] sm:$0xf]
      %v567 = vld [vmem:[%s2 + $0x68] sm:$0xf]
      %v568 = vld [vmem:[%s2 + $0x6c] sm:$0xf]
      %v569 = vld [vmem:[%s2 + $0x70] sm:$0xf]
      %v570 = vld [vmem:[%s2 + $0x74] sm:$0xf]
      %v571 = vld [vmem:[%s2 + $0x78] sm:$0xf]
      %v572 = vld [vmem:[%s2 + $0x7c] sm:$0xf]
      %v605 = vunpack.c.l.b16 %v541
      %v606 = vunpack.c.l.b16 %v542
      %v607 = vunpack.c.l.b16 %v543
      %v608 = vunpack.c.l.b16 %v544
      %v609 = vunpack.c.l.b16 %v545
      %v610 = vunpack.c.l.b16 %v546
      %v611 = vunpack.c.l.b16 %v547
      %v612 = vunpack.c.l.b16 %v548
      %v613 = vunpack.c.l.b16 %v549
      %v614 = vunpack.c.l.b16 %v550
      %v615 = vunpack.c.l.b16 %v551
      %v616 = vunpack.c.l.b16 %v552
      %v617 = vunpack.c.l.b16 %v553
      %v618 = vunpack.c.l.b16 %v554
      %v619 = vunpack.c.l.b16 %v555
      %v620 = vunpack.c.l.b16 %v556
      %v621 = vunpack.c.l.b16 %v557
      %v622 = vunpack.c.l.b16 %v558
      %v623 = vunpack.c.l.b16 %v559
      %v624 = vunpack.c.l.b16 %v560
      %v625 = vunpack.c.l.b16 %v561
      %v626 = vunpack.c.l.b16 %v562
      %v627 = vunpack.c.l.b16 %v563
      %v628 = vunpack.c.l.b16 %v564
      %v629 = vunpack.c.l.b16 %v565
      %v630 = vunpack.c.l.b16 %v566
      %v631 = vunpack.c.l.b16 %v567
      %v632 = vunpack.c.l.b16 %v568
      %v633 = vunpack.c.l.b16 %v569
      %v634 = vunpack.c.l.b16 %v570
      %v635 = vunpack.c.l.b16 %v571
      %v636 = vunpack.c.l.b16 %v572
      %v637 = vpack.c.b16 %v606, %v605
      %v638 = vpack.c.b16 %v608, %v607
      %v639 = vpack.c.b16 %v610, %v609
      %v640 = vpack.c.b16 %v612, %v611
      %v641 = vpack.c.b16 %v614, %v613
      %v642 = vpack.c.b16 %v616, %v615
      %v643 = vpack.c.b16 %v618, %v617
      %v644 = vpack.c.b16 %v620, %v619
      %v645 = vpack.c.b16 %v622, %v621
      %v646 = vpack.c.b16 %v624, %v623
      %v647 = vpack.c.b16 %v626, %v625
      %v648 = vpack.c.b16 %v628, %v627
      %v649 = vpack.c.b16 %v630, %v629
      %v650 = vpack.c.b16 %v632, %v631
      %v651 = vpack.c.b16 %v634, %v633
      %v652 = vpack.c.b16 %v636, %v635
      %669 = vmatpush.bf16.msra.mxu0 %v644
      %670 = vmatpush.bf16.msra.mxu0 %v643
      %671 = vmatpush.bf16.msra.mxu0 %v642
      %672 = vmatpush.bf16.msra.mxu0 %v641
      %673 = vmatpush.bf16.msra.mxu0 %v640
      %674 = vmatpush.bf16.msra.mxu0 %v639
      %675 = vmatpush.bf16.msra.mxu0 %v638
      %676 = vmatpush.bf16.msra.mxu0 %v637
      %677 = vmatmul.bf16.gmra.mxu0 %v539
      %v678 = vpop.f32.mrf.mxu0
      %v679 = vadd.f32 0.0, %v678
      %v680 = vpop.f32.mrf.mxu0
      %681 = vdwg.mxu0
      %682 = vmatpush.bf16.msra.mxu0 %v652
      %683 = vmatpush.bf16.msra.mxu0 %v651
      %684 = vmatpush.bf16.msra.mxu0 %v650
      %685 = vmatpush.bf16.msra.mxu0 %v649
      %686 = vmatpush.bf16.msra.mxu0 %v648
      %687 = vmatpush.bf16.msra.mxu0 %v647
      %688 = vmatpush.bf16.msra.mxu0 %v646
      %689 = vmatpush.bf16.msra.mxu0 %v645
      %690 = vmatmul.bf16.gmra.mxu0 %v540
      %v691 = vpop.f32.mrf.mxu0
      %v692 = vadd.f32 %v679, %v691
      %v693 = vpop.f32.mrf.mxu0
      %694 = vdwg.mxu0
      %v695 = vld [vmem:[%s3] sm:$0xf]
      %v696 = vld [vmem:[%s3 + $0x4] sm:$0xf]
      %v697 = vpack.c.bf16 %v692, %v692
      %s698 = scalar_lea.vmem %s2, 128
      %v699 = vld [vmem:[%s698] sm:$0xf]
      %v700 = vld [vmem:[%s698 + $0x4] sm:$0xf]
      %v701 = vld [vmem:[%s698 + $0x8] sm:$0xf]
      %v702 = vld [vmem:[%s698 + $0xc] sm:$0xf]
      %v703 = vld [vmem:[%s698 + $0x10] sm:$0xf]
      %v704 = vld [vmem:[%s698 + $0x14] sm:$0xf]
      %v705 = vld [vmem:[%s698 + $0x18] sm:$0xf]
      %v706 = vld [vmem:[%s698 + $0x1c] sm:$0xf]
      %v707 = vld [vmem:[%s698 + $0x20] sm:$0xf]
      %v708 = vld [vmem:[%s698 + $0x24] sm:$0xf]
      %v709 = vld [vmem:[%s698 + $0x28] sm:$0xf]
      %v710 = vld [vmem:[%s698 + $0x2c] sm:$0xf]
      %v711 = vld [vmem:[%s698 + $0x30] sm:$0xf]
      %v712 = vld [vmem:[%s698 + $0x34] sm:$0xf]
      %v713 = vld [vmem:[%s698 + $0x38] sm:$0xf]
      %v714 = vld [vmem:[%s698 + $0x3c] sm:$0xf]
      %v715 = vld [vmem:[%s698 + $0x40] sm:$0xf]
      %v716 = vld [vmem:[%s698 + $0x44] sm:$0xf]
      %v717 = vld [vmem:[%s698 + $0x48] sm:$0xf]
      %v718 = vld [vmem:[%s698 + $0x4c] sm:$0xf]
      %v719 = vld [vmem:[%s698 + $0x50] sm:$0xf]
      %v720 = vld [vmem:[%s698 + $0x54] sm:$0xf]
      %v721 = vld [vmem:[%s698 + $0x58] sm:$0xf]
      %v722 = vld [vmem:[%s698 + $0x5c] sm:$0xf]
      %v723 = vld [vmem:[%s698 + $0x60] sm:$0xf]
      %v724 = vld [vmem:[%s698 + $0x64] sm:$0xf]
      %v725 = vld [vmem:[%s698 + $0x68] sm:$0xf]
      %v726 = vld [vmem:[%s698 + $0x6c] sm:$0xf]
      %v727 = vld [vmem:[%s698 + $0x70] sm:$0xf]
      %v728 = vld [vmem:[%s698 + $0x74] sm:$0xf]
      %v729 = vld [vmem:[%s698 + $0x78] sm:$0xf]
      %v730 = vld [vmem:[%s698 + $0x7c] sm:$0xf]
      %v763 = vunpack.c.l.b16 %v699
      %v764 = vunpack.c.l.b16 %v700
      %v765 = vunpack.c.l.b16 %v701
      %v766 = vunpack.c.l.b16 %v702
      %v767 = vunpack.c.l.b16 %v703
      %v768 = vunpack.c.l.b16 %v704
      %v769 = vunpack.c.l.b16 %v705
      %v770 = vunpack.c.l.b16 %v706
      %v771 = vunpack.c.l.b16 %v707
      %v772 = vunpack.c.l.b16 %v708
      %v773 = vunpack.c.l.b16 %v709
      %v774 = vunpack.c.l.b16 %v710
      %v775 = vunpack.c.l.b16 %v711
      %v776 = vunpack.c.l.b16 %v712
      %v777 = vunpack.c.l.b16 %v713
      %v778 = vunpack.c.l.b16 %v714
      %v779 = vunpack.c.l.b16 %v715
      %v780 = vunpack.c.l.b16 %v716
      %v781 = vunpack.c.l.b16 %v717
      %v782 = vunpack.c.l.b16 %v718
      %v783 = vunpack.c.l.b16 %v719
      %v784 = vunpack.c.l.b16 %v720
      %v785 = vunpack.c.l.b16 %v721
      %v786 = vunpack.c.l.b16 %v722
      %v787 = vunpack.c.l.b16 %v723
      %v788 = vunpack.c.l.b16 %v724
      %v789 = vunpack.c.l.b16 %v725
      %v790 = vunpack.c.l.b16 %v726
      %v791 = vunpack.c.l.b16 %v727
      %v792 = vunpack.c.l.b16 %v728
      %v793 = vunpack.c.l.b16 %v729
      %v794 = vunpack.c.l.b16 %v730
      %v795 = vpack.c.b16 %v764, %v763
      %v796 = vpack.c.b16 %v766, %v765
      %v797 = vpack.c.b16 %v768, %v767
      %v798 = vpack.c.b16 %v770, %v769
      %v799 = vpack.c.b16 %v772, %v771
      %v800 = vpack.c.b16 %v774, %v773
      %v801 = vpack.c.b16 %v776, %v775
      %v802 = vpack.c.b16 %v778, %v777
      %v803 = vpack.c.b16 %v780, %v779
      %v804 = vpack.c.b16 %v782, %v781
      %v805 = vpack.c.b16 %v784, %v783
      %v806 = vpack.c.b16 %v786, %v785
      %v807 = vpack.c.b16 %v788, %v787
      %v808 = vpack.c.b16 %v790, %v789
      %v809 = vpack.c.b16 %v792, %v791
      %v810 = vpack.c.b16 %v794, %v793
      %827 = vmatpush.bf16.msra.mxu0 %v802
      %828 = vmatpush.bf16.msra.mxu0 %v801
      %829 = vmatpush.bf16.msra.mxu0 %v800
      %830 = vmatpush.bf16.msra.mxu0 %v799
      %831 = vmatpush.bf16.msra.mxu0 %v798
      %832 = vmatpush.bf16.msra.mxu0 %v797
      %833 = vmatpush.bf16.msra.mxu0 %v796
      %834 = vmatpush.bf16.msra.mxu0 %v795
      %835 = vmatmul.bf16.gmra.mxu0 %v539
      %v836 = vpop.f32.mrf.mxu0
      %v837 = vadd.f32 0.0, %v836
      %v838 = vpop.f32.mrf.mxu0
      %839 = vdwg.mxu0
      %840 = vmatpush.bf16.msra.mxu0 %v810
      %841 = vmatpush.bf16.msra.mxu0 %v809
      %842 = vmatpush.bf16.msra.mxu0 %v808
      %843 = vmatpush.bf16.msra.mxu0 %v807
      %844 = vmatpush.bf16.msra.mxu0 %v806
      %845 = vmatpush.bf16.msra.mxu0 %v805
      %846 = vmatpush.bf16.msra.mxu0 %v804
      %847 = vmatpush.bf16.msra.mxu0 %v803
      %848 = vmatmul.bf16.gmra.mxu0 %v540
      %v849 = vpop.f32.mrf.mxu0
      %v850 = vadd.f32 %v837, %v849
      %v851 = vpop.f32.mrf.mxu0
      %852 = vdwg.mxu0
      %s853 = scalar_lea.vmem %s3, 8
      %v854 = vld [vmem:[%s853] sm:$0xf]
      %v855 = vld [vmem:[%s853 + $0x4] sm:$0xf]
      %v856 = vpack.c.bf16 %v850, %v850
      %v859 = vunpack.c.l.b16 %v854
      %v860 = vunpack.c.l.b16 %v855
      %v861 = vpack.c.b16 %v860, %v859
      %vm862 = vcmask 64512
      %v864 = vsel %vm862, %v861, 0
      %vm866 = vcmask 1043456
      %v868 = vsel %vm866, %v856, 0
      %870 = vmatpush.bf16.msra.mxu0 0
      %871 = vmatpush.bf16.msra.mxu0 0
      %872 = vmatpush.bf16.msra.mxu0 0
      %873 = vmatpush.bf16.msra.mxu0 0
      %874 = vmatpush.bf16.msra.mxu0 0
      %875 = vmatpush.bf16.msra.mxu0 0
      %876 = vmatpush.bf16.msra.mxu0 0
      %877 = vmatpush.bf16.msra.mxu0 %v868
      %878 = vmatmul.bf16.gmra.mxu0 %v864
      %v879 = vpop.f32.mrf.mxu0
      %v880 = vadd.f32 0.0, %v879
      %v881 = vpop.f32.mrf.mxu0
      %v882 = vadd.f32 0.0, %v881
      %883 = vdwg.mxu0
      %v886 = vunpack.c.l.b16 %v695
      %v887 = vunpack.c.l.b16 %v696
      %v888 = vpack.c.b16 %v887, %v886
      %v890 = vsel %vm862, %v888, 0
      %v893 = vsel %vm866, %v697, 0
      %895 = vmatpush.bf16.msra.mxu0 0
      %896 = vmatpush.bf16.msra.mxu0 0
      %897 = vmatpush.bf16.msra.mxu0 0
      %898 = vmatpush.bf16.msra.mxu0 0
      %899 = vmatpush.bf16.msra.mxu0 0
      %900 = vmatpush.bf16.msra.mxu0 0
      %901 = vmatpush.bf16.msra.mxu0 0
      %902 = vmatpush.bf16.msra.mxu0 %v893
      %903 = vmatmul.bf16.gmra.mxu0 %v890
      %v904 = vpop.f32.mrf.mxu0
      %v905 = vadd.f32 %v880, %v904
      %v906 = vpop.f32.mrf.mxu0
      %v907 = vadd.f32 %v882, %v906
      %908 = vdwg.mxu0
      %s909 = scalar_lea.vmem %s2, 256
      %v910 = vld [vmem:[%s909] sm:$0xf]
      %v911 = vld [vmem:[%s909 + $0x4] sm:$0xf]
      %v912 = vld [vmem:[%s909 + $0x8] sm:$0xf]
      %v913 = vld [vmem:[%s909 + $0xc] sm:$0xf]
      %v914 = vld [vmem:[%s909 + $0x10] sm:$0xf]
      %v915 = vld [vmem:[%s909 + $0x14] sm:$0xf]
      %v916 = vld [vmem:[%s909 + $0x18] sm:$0xf]
      %v917 = vld [vmem:[%s909 + $0x1c] sm:$0xf]
      %v918 = vld [vmem:[%s909 + $0x20] sm:$0xf]
      %v919 = vld [vmem:[%s909 + $0x24] sm:$0xf]
      %v920 = vld [vmem:[%s909 + $0x28] sm:$0xf]
      %v921 = vld [vmem:[%s909 + $0x2c] sm:$0xf]
      %v922 = vld [vmem:[%s909 + $0x30] sm:$0xf]
      %v923 = vld [vmem:[%s909 + $0x34] sm:$0xf]
      %v924 = vld [vmem:[%s909 + $0x38] sm:$0xf]
      %v925 = vld [vmem:[%s909 + $0x3c] sm:$0xf]
      %v926 = vld [vmem:[%s909 + $0x40] sm:$0xf]
      %v927 = vld [vmem:[%s909 + $0x44] sm:$0xf]
      %v928 = vld [vmem:[%s909 + $0x48] sm:$0xf]
      %v929 = vld [vmem:[%s909 + $0x4c] sm:$0xf]
      %v930 = vld [vmem:[%s909 + $0x50] sm:$0xf]
      %v931 = vld [vmem:[%s909 + $0x54] sm:$0xf]
      %v932 = vld [vmem:[%s909 + $0x58] sm:$0xf]
      %v933 = vld [vmem:[%s909 + $0x5c] sm:$0xf]
      %v934 = vld [vmem:[%s909 + $0x60] sm:$0xf]
      %v935 = vld [vmem:[%s909 + $0x64] sm:$0xf]
      %v936 = vld [vmem:[%s909 + $0x68] sm:$0xf]
      %v937 = vld [vmem:[%s909 + $0x6c] sm:$0xf]
      %v938 = vld [vmem:[%s909 + $0x70] sm:$0xf]
      %v939 = vld [vmem:[%s909 + $0x74] sm:$0xf]
      %v940 = vld [vmem:[%s909 + $0x78] sm:$0xf]
      %v941 = vld [vmem:[%s909 + $0x7c] sm:$0xf]
      %v974 = vunpack.c.l.b16 %v910
      %v975 = vunpack.c.l.b16 %v911
      %v976 = vunpack.c.l.b16 %v912
      %v977 = vunpack.c.l.b16 %v913
      %v978 = vunpack.c.l.b16 %v914
      %v979 = vunpack.c.l.b16 %v915
      %v980 = vunpack.c.l.b16 %v916
      %v981 = vunpack.c.l.b16 %v917
      %v982 = vunpack.c.l.b16 %v918
      %v983 = vunpack.c.l.b16 %v919
      %v984 = vunpack.c.l.b16 %v920
      %v985 = vunpack.c.l.b16 %v921
      %v986 = vunpack.c.l.b16 %v922
      %v987 = vunpack.c.l.b16 %v923
      %v988 = vunpack.c.l.b16 %v924
      %v989 = vunpack.c.l.b16 %v925
      %v990 = vunpack.c.l.b16 %v926
      %v991 = vunpack.c.l.b16 %v927
      %v992 = vunpack.c.l.b16 %v928
      %v993 = vunpack.c.l.b16 %v929
      %v994 = vunpack.c.l.b16 %v930
      %v995 = vunpack.c.l.b16 %v931
      %v996 = vunpack.c.l.b16 %v932
      %v997 = vunpack.c.l.b16 %v933
      %v998 = vunpack.c.l.b16 %v934
      %v999 = vunpack.c.l.b16 %v935
      %v1000 = vunpack.c.l.b16 %v936
      %v1001 = vunpack.c.l.b16 %v937
      %v1002 = vunpack.c.l.b16 %v938
      %v1003 = vunpack.c.l.b16 %v939
      %v1004 = vunpack.c.l.b16 %v940
      %v1005 = vunpack.c.l.b16 %v941
      %v1006 = vpack.c.b16 %v975, %v974
      %v1007 = vpack.c.b16 %v977, %v976
      %v1008 = vpack.c.b16 %v979, %v978
      %v1009 = vpack.c.b16 %v981, %v980
      %v1010 = vpack.c.b16 %v983, %v982
      %v1011 = vpack.c.b16 %v985, %v984
      %v1012 = vpack.c.b16 %v987, %v986
      %v1013 = vpack.c.b16 %v989, %v988
      %v1014 = vpack.c.b16 %v991, %v990
      %v1015 = vpack.c.b16 %v993, %v992
      %v1016 = vpack.c.b16 %v995, %v994
      %v1017 = vpack.c.b16 %v997, %v996
      %v1018 = vpack.c.b16 %v999, %v998
      %v1019 = vpack.c.b16 %v1001, %v1000
      %v1020 = vpack.c.b16 %v1003, %v1002
      %v1021 = vpack.c.b16 %v1005, %v1004
      %1038 = vmatpush.bf16.msra.mxu0 %v1013
      %1039 = vmatpush.bf16.msra.mxu0 %v1012
      %1040 = vmatpush.bf16.msra.mxu0 %v1011
      %1041 = vmatpush.bf16.msra.mxu0 %v1010
      %1042 = vmatpush.bf16.msra.mxu0 %v1009
      %1043 = vmatpush.bf16.msra.mxu0 %v1008
      %1044 = vmatpush.bf16.msra.mxu0 %v1007
      %1045 = vmatpush.bf16.msra.mxu0 %v1006
      %1046 = vmatmul.bf16.gmra.mxu0 %v539
      %v1047 = vpop.f32.mrf.mxu0
      %v1048 = vadd.f32 0.0, %v1047
      %v1049 = vpop.f32.mrf.mxu0
      %1050 = vdwg.mxu0
      %1051 = vmatpush.bf16.msra.mxu0 %v1021
      %1052 = vmatpush.bf16.msra.mxu0 %v1020
      %1053 = vmatpush.bf16.msra.mxu0 %v1019
      %1054 = vmatpush.bf16.msra.mxu0 %v1018
      %1055 = vmatpush.bf16.msra.mxu0 %v1017
      %1056 = vmatpush.bf16.msra.mxu0 %v1016
      %1057 = vmatpush.bf16.msra.mxu0 %v1015
      %1058 = vmatpush.bf16.msra.mxu0 %v1014
      %1059 = vmatmul.bf16.gmra.mxu0 %v540
      %v1060 = vpop.f32.mrf.mxu0
      %v1061 = vadd.f32 %v1048, %v1060
      %v1062 = vpop.f32.mrf.mxu0
      %1063 = vdwg.mxu0
      %s1064 = scalar_lea.vmem %s3, 16
      %v1065 = vld [vmem:[%s1064] sm:$0xf]
      %v1066 = vld [vmem:[%s1064 + $0x4] sm:$0xf]
      %v1067 = vpack.c.bf16 %v1061, %v1061
      %v1070 = vunpack.c.l.b16 %v1065
      %v1071 = vunpack.c.l.b16 %v1066
      %v1072 = vpack.c.b16 %v1071, %v1070
      %v1074 = vsel %vm862, %v1072, 0
      %v1077 = vsel %vm866, %v1067, 0
      %1079 = vmatpush.bf16.msra.mxu0 0
      %1080 = vmatpush.bf16.msra.mxu0 0
      %1081 = vmatpush.bf16.msra.mxu0 0
      %1082 = vmatpush.bf16.msra.mxu0 0
      %1083 = vmatpush.bf16.msra.mxu0 0
      %1084 = vmatpush.bf16.msra.mxu0 0
      %1085 = vmatpush.bf16.msra.mxu0 0
      %1086 = vmatpush.bf16.msra.mxu0 %v1077
      %1087 = vmatmul.bf16.gmra.mxu0 %v1074
      %v1088 = vpop.f32.mrf.mxu0
      %v1089 = vadd.f32 0.0, %v1088
      %v1090 = vpop.f32.mrf.mxu0
      %v1091 = vadd.f32 0.0, %v1090
      %1092 = vdwg.mxu0
      %v1093 = vadd.f32 %v905, %v1089
      %v1094 = vadd.f32 %v907, %v1091
      %s1095 = scalar_lea.vmem %s2, 384
      %v1096 = vld [vmem:[%s1095] sm:$0xf]
      %v1097 = vld [vmem:[%s1095 + $0x4] sm:$0xf]
      %v1098 = vld [vmem:[%s1095 + $0x8] sm:$0xf]
      %v1099 = vld [vmem:[%s1095 + $0xc] sm:$0xf]
      %v1100 = vld [vmem:[%s1095 + $0x10] sm:$0xf]
      %v1101 = vld [vmem:[%s1095 + $0x14] sm:$0xf]
      %v1102 = vld [vmem:[%s1095 + $0x18] sm:$0xf]
      %v1103 = vld [vmem:[%s1095 + $0x1c] sm:$0xf]
      %v1104 = vld [vmem:[%s1095 + $0x20] sm:$0xf]
      %v1105 = vld [vmem:[%s1095 + $0x24] sm:$0xf]
      %v1106 = vld [vmem:[%s1095 + $0x28] sm:$0xf]
      %v1107 = vld [vmem:[%s1095 + $0x2c] sm:$0xf]
      %v1108 = vld [vmem:[%s1095 + $0x30] sm:$0xf]
      %v1109 = vld [vmem:[%s1095 + $0x34] sm:$0xf]
      %v1110 = vld [vmem:[%s1095 + $0x38] sm:$0xf]
      %v1111 = vld [vmem:[%s1095 + $0x3c] sm:$0xf]
      %v1112 = vld [vmem:[%s1095 + $0x40] sm:$0xf]
      %v1113 = vld [vmem:[%s1095 + $0x44] sm:$0xf]
      %v1114 = vld [vmem:[%s1095 + $0x48] sm:$0xf]
      %v1115 = vld [vmem:[%s1095 + $0x4c] sm:$0xf]
      %v1116 = vld [vmem:[%s1095 + $0x50] sm:$0xf]
      %v1117 = vld [vmem:[%s1095 + $0x54] sm:$0xf]
      %v1118 = vld [vmem:[%s1095 + $0x58] sm:$0xf]
      %v1119 = vld [vmem:[%s1095 + $0x5c] sm:$0xf]
      %v1120 = vld [vmem:[%s1095 + $0x60] sm:$0xf]
      %v1121 = vld [vmem:[%s1095 + $0x64] sm:$0xf]
      %v1122 = vld [vmem:[%s1095 + $0x68] sm:$0xf]
      %v1123 = vld [vmem:[%s1095 + $0x6c] sm:$0xf]
      %v1124 = vld [vmem:[%s1095 + $0x70] sm:$0xf]
      %v1125 = vld [vmem:[%s1095 + $0x74] sm:$0xf]
      %v1126 = vld [vmem:[%s1095 + $0x78] sm:$0xf]
      %v1127 = vld [vmem:[%s1095 + $0x7c] sm:$0xf]
      %v1160 = vunpack.c.l.b16 %v1096
      %v1161 = vunpack.c.l.b16 %v1097
      %v1162 = vunpack.c.l.b16 %v1098
      %v1163 = vunpack.c.l.b16 %v1099
      %v1164 = vunpack.c.l.b16 %v1100
      %v1165 = vunpack.c.l.b16 %v1101
      %v1166 = vunpack.c.l.b16 %v1102
      %v1167 = vunpack.c.l.b16 %v1103
      %v1168 = vunpack.c.l.b16 %v1104
      %v1169 = vunpack.c.l.b16 %v1105
      %v1170 = vunpack.c.l.b16 %v1106
      %v1171 = vunpack.c.l.b16 %v1107
      %v1172 = vunpack.c.l.b16 %v1108
      %v1173 = vunpack.c.l.b16 %v1109
      %v1174 = vunpack.c.l.b16 %v1110
      %v1175 = vunpack.c.l.b16 %v1111
      %v1176 = vunpack.c.l.b16 %v1112
      %v1177 = vunpack.c.l.b16 %v1113
      %v1178 = vunpack.c.l.b16 %v1114
      %v1179 = vunpack.c.l.b16 %v1115
      %v1180 = vunpack.c.l.b16 %v1116
      %v1181 = vunpack.c.l.b16 %v1117
      %v1182 = vunpack.c.l.b16 %v1118
      %v1183 = vunpack.c.l.b16 %v1119
      %v1184 = vunpack.c.l.b16 %v1120
      %v1185 = vunpack.c.l.b16 %v1121
      %v1186 = vunpack.c.l.b16 %v1122
      %v1187 = vunpack.c.l.b16 %v1123
      %v1188 = vunpack.c.l.b16 %v1124
      %v1189 = vunpack.c.l.b16 %v1125
      %v1190 = vunpack.c.l.b16 %v1126
      %v1191 = vunpack.c.l.b16 %v1127
      %v1192 = vpack.c.b16 %v1161, %v1160
      %v1193 = vpack.c.b16 %v1163, %v1162
      %v1194 = vpack.c.b16 %v1165, %v1164
      %v1195 = vpack.c.b16 %v1167, %v1166
      %v1196 = vpack.c.b16 %v1169, %v1168
      %v1197 = vpack.c.b16 %v1171, %v1170
      %v1198 = vpack.c.b16 %v1173, %v1172
      %v1199 = vpack.c.b16 %v1175, %v1174
      %v1200 = vpack.c.b16 %v1177, %v1176
      %v1201 = vpack.c.b16 %v1179, %v1178
      %v1202 = vpack.c.b16 %v1181, %v1180
      %v1203 = vpack.c.b16 %v1183, %v1182
      %v1204 = vpack.c.b16 %v1185, %v1184
      %v1205 = vpack.c.b16 %v1187, %v1186
      %v1206 = vpack.c.b16 %v1189, %v1188
      %v1207 = vpack.c.b16 %v1191, %v1190
      %1224 = vmatpush.bf16.msra.mxu0 %v1199
      %1225 = vmatpush.bf16.msra.mxu0 %v1198
      %1226 = vmatpush.bf16.msra.mxu0 %v1197
      %1227 = vmatpush.bf16.msra.mxu0 %v1196
      %1228 = vmatpush.bf16.msra.mxu0 %v1195
      %1229 = vmatpush.bf16.msra.mxu0 %v1194
      %1230 = vmatpush.bf16.msra.mxu0 %v1193
      %1231 = vmatpush.bf16.msra.mxu0 %v1192
      %1232 = vmatmul.bf16.gmra.mxu0 %v539
      %v1233 = vpop.f32.mrf.mxu0
      %v1234 = vadd.f32 0.0, %v1233
      %v1235 = vpop.f32.mrf.mxu0
      %1236 = vdwg.mxu0
      %1237 = vmatpush.bf16.msra.mxu0 %v1207
      %1238 = vmatpush.bf16.msra.mxu0 %v1206
      %1239 = vmatpush.bf16.msra.mxu0 %v1205
      %1240 = vmatpush.bf16.msra.mxu0 %v1204
      %1241 = vmatpush.bf16.msra.mxu0 %v1203
      %1242 = vmatpush.bf16.msra.mxu0 %v1202
      %1243 = vmatpush.bf16.msra.mxu0 %v1201
      %1244 = vmatpush.bf16.msra.mxu0 %v1200
      %1245 = vmatmul.bf16.gmra.mxu0 %v540
      %v1246 = vpop.f32.mrf.mxu0
      %v1247 = vadd.f32 %v1234, %v1246
      %v1248 = vpop.f32.mrf.mxu0
      %1249 = vdwg.mxu0
      %s1250 = scalar_lea.vmem %s3, 24
      %v1251 = vld [vmem:[%s1250] sm:$0xf]
      %v1252 = vld [vmem:[%s1250 + $0x4] sm:$0xf]
      %v1253 = vpack.c.bf16 %v1247, %v1247
      %v1256 = vunpack.c.l.b16 %v1251
      %v1257 = vunpack.c.l.b16 %v1252
      %v1258 = vpack.c.b16 %v1257, %v1256
      %v1260 = vsel %vm862, %v1258, 0
      %v1263 = vsel %vm866, %v1253, 0
      %1265 = vmatpush.bf16.msra.mxu0 0
      %1266 = vmatpush.bf16.msra.mxu0 0
      %1267 = vmatpush.bf16.msra.mxu0 0
      %1268 = vmatpush.bf16.msra.mxu0 0
      %1269 = vmatpush.bf16.msra.mxu0 0
      %1270 = vmatpush.bf16.msra.mxu0 0
      %1271 = vmatpush.bf16.msra.mxu0 0
      %1272 = vmatpush.bf16.msra.mxu0 %v1263
      %1273 = vmatmul.bf16.gmra.mxu0 %v1260
      %v1274 = vpop.f32.mrf.mxu0
      %v1275 = vadd.f32 0.0, %v1274
      %v1276 = vpop.f32.mrf.mxu0
      %v1277 = vadd.f32 0.0, %v1276
      %1278 = vdwg.mxu0
      %v1279 = vadd.f32 %v1093, %v1275
      %v1280 = vadd.f32 %v1094, %v1277
      %s1281 = scalar_lea.vmem %s2, 512
      %v1282 = vld [vmem:[%s1281] sm:$0xf]
      %v1283 = vld [vmem:[%s1281 + $0x4] sm:$0xf]
      %v1284 = vld [vmem:[%s1281 + $0x8] sm:$0xf]
      %v1285 = vld [vmem:[%s1281 + $0xc] sm:$0xf]
      %v1286 = vld [vmem:[%s1281 + $0x10] sm:$0xf]
      %v1287 = vld [vmem:[%s1281 + $0x14] sm:$0xf]
      %v1288 = vld [vmem:[%s1281 + $0x18] sm:$0xf]
      %v1289 = vld [vmem:[%s1281 + $0x1c] sm:$0xf]
      %v1290 = vld [vmem:[%s1281 + $0x20] sm:$0xf]
      %v1291 = vld [vmem:[%s1281 + $0x24] sm:$0xf]
      %v1292 = vld [vmem:[%s1281 + $0x28] sm:$0xf]
      %v1293 = vld [vmem:[%s1281 + $0x2c] sm:$0xf]
      %v1294 = vld [vmem:[%s1281 + $0x30] sm:$0xf]
      %v1295 = vld [vmem:[%s1281 + $0x34] sm:$0xf]
      %v1296 = vld [vmem:[%s1281 + $0x38] sm:$0xf]
      %v1297 = vld [vmem:[%s1281 + $0x3c] sm:$0xf]
      %v1298 = vld [vmem:[%s1281 + $0x40] sm:$0xf]
      %v1299 = vld [vmem:[%s1281 + $0x44] sm:$0xf]
      %v1300 = vld [vmem:[%s1281 + $0x48] sm:$0xf]
      %v1301 = vld [vmem:[%s1281 + $0x4c] sm:$0xf]
      %v1302 = vld [vmem:[%s1281 + $0x50] sm:$0xf]
      %v1303 = vld [vmem:[%s1281 + $0x54] sm:$0xf]
      %v1304 = vld [vmem:[%s1281 + $0x58] sm:$0xf]
      %v1305 = vld [vmem:[%s1281 + $0x5c] sm:$0xf]
      %v1306 = vld [vmem:[%s1281 + $0x60] sm:$0xf]
      %v1307 = vld [vmem:[%s1281 + $0x64] sm:$0xf]
      %v1308 = vld [vmem:[%s1281 + $0x68] sm:$0xf]
      %v1309 = vld [vmem:[%s1281 + $0x6c] sm:$0xf]
      %v1310 = vld [vmem:[%s1281 + $0x70] sm:$0xf]
      %v1311 = vld [vmem:[%s1281 + $0x74] sm:$0xf]
      %v1312 = vld [vmem:[%s1281 + $0x78] sm:$0xf]
      %v1313 = vld [vmem:[%s1281 + $0x7c] sm:$0xf]
      %v1346 = vunpack.c.l.b16 %v1282
      %v1347 = vunpack.c.l.b16 %v1283
      %v1348 = vunpack.c.l.b16 %v1284
      %v1349 = vunpack.c.l.b16 %v1285
      %v1350 = vunpack.c.l.b16 %v1286
      %v1351 = vunpack.c.l.b16 %v1287
      %v1352 = vunpack.c.l.b16 %v1288
      %v1353 = vunpack.c.l.b16 %v1289
      %v1354 = vunpack.c.l.b16 %v1290
      %v1355 = vunpack.c.l.b16 %v1291
      %v1356 = vunpack.c.l.b16 %v1292
      %v1357 = vunpack.c.l.b16 %v1293
      %v1358 = vunpack.c.l.b16 %v1294
      %v1359 = vunpack.c.l.b16 %v1295
      %v1360 = vunpack.c.l.b16 %v1296
      %v1361 = vunpack.c.l.b16 %v1297
      %v1362 = vunpack.c.l.b16 %v1298
      %v1363 = vunpack.c.l.b16 %v1299
      %v1364 = vunpack.c.l.b16 %v1300
      %v1365 = vunpack.c.l.b16 %v1301
      %v1366 = vunpack.c.l.b16 %v1302
      %v1367 = vunpack.c.l.b16 %v1303
      %v1368 = vunpack.c.l.b16 %v1304
      %v1369 = vunpack.c.l.b16 %v1305
      %v1370 = vunpack.c.l.b16 %v1306
      %v1371 = vunpack.c.l.b16 %v1307
      %v1372 = vunpack.c.l.b16 %v1308
      %v1373 = vunpack.c.l.b16 %v1309
      %v1374 = vunpack.c.l.b16 %v1310
      %v1375 = vunpack.c.l.b16 %v1311
      %v1376 = vunpack.c.l.b16 %v1312
      %v1377 = vunpack.c.l.b16 %v1313
      %v1378 = vpack.c.b16 %v1347, %v1346
      %v1379 = vpack.c.b16 %v1349, %v1348
      %v1380 = vpack.c.b16 %v1351, %v1350
      %v1381 = vpack.c.b16 %v1353, %v1352
      %v1382 = vpack.c.b16 %v1355, %v1354
      %v1383 = vpack.c.b16 %v1357, %v1356
      %v1384 = vpack.c.b16 %v1359, %v1358
      %v1385 = vpack.c.b16 %v1361, %v1360
      %v1386 = vpack.c.b16 %v1363, %v1362
      %v1387 = vpack.c.b16 %v1365, %v1364
      %v1388 = vpack.c.b16 %v1367, %v1366
      %v1389 = vpack.c.b16 %v1369, %v1368
      %v1390 = vpack.c.b16 %v1371, %v1370
      %v1391 = vpack.c.b16 %v1373, %v1372
      %v1392 = vpack.c.b16 %v1375, %v1374
      %v1393 = vpack.c.b16 %v1377, %v1376
      %1410 = vmatpush.bf16.msra.mxu0 %v1385
      %1411 = vmatpush.bf16.msra.mxu0 %v1384
      %1412 = vmatpush.bf16.msra.mxu0 %v1383
      %1413 = vmatpush.bf16.msra.mxu0 %v1382
      %1414 = vmatpush.bf16.msra.mxu0 %v1381
      %1415 = vmatpush.bf16.msra.mxu0 %v1380
      %1416 = vmatpush.bf16.msra.mxu0 %v1379
      %1417 = vmatpush.bf16.msra.mxu0 %v1378
      %1418 = vmatmul.bf16.gmra.mxu0 %v539
      %v1419 = vpop.f32.mrf.mxu0
      %v1420 = vadd.f32 0.0, %v1419
      %v1421 = vpop.f32.mrf.mxu0
      %1422 = vdwg.mxu0
      %1423 = vmatpush.bf16.msra.mxu0 %v1393
      %1424 = vmatpush.bf16.msra.mxu0 %v1392
      %1425 = vmatpush.bf16.msra.mxu0 %v1391
      %1426 = vmatpush.bf16.msra.mxu0 %v1390
      %1427 = vmatpush.bf16.msra.mxu0 %v1389
      %1428 = vmatpush.bf16.msra.mxu0 %v1388
      %1429 = vmatpush.bf16.msra.mxu0 %v1387
      %1430 = vmatpush.bf16.msra.mxu0 %v1386
      %1431 = vmatmul.bf16.gmra.mxu0 %v540
      %v1432 = vpop.f32.mrf.mxu0
      %v1433 = vadd.f32 %v1420, %v1432
      %v1434 = vpop.f32.mrf.mxu0
      %1435 = vdwg.mxu0
      %s1436 = scalar_lea.vmem %s3, 32
      %v1437 = vld [vmem:[%s1436] sm:$0xf]
      %v1438 = vld [vmem:[%s1436 + $0x4] sm:$0xf]
      %v1439 = vpack.c.bf16 %v1433, %v1433
      %v1442 = vunpack.c.l.b16 %v1437
      %v1443 = vunpack.c.l.b16 %v1438
      %v1444 = vpack.c.b16 %v1443, %v1442
      %v1446 = vsel %vm862, %v1444, 0
      %v1449 = vsel %vm866, %v1439, 0
      %1451 = vmatpush.bf16.msra.mxu0 0
      %1452 = vmatpush.bf16.msra.mxu0 0
      %1453 = vmatpush.bf16.msra.mxu0 0
      %1454 = vmatpush.bf16.msra.mxu0 0
      %1455 = vmatpush.bf16.msra.mxu0 0
      %1456 = vmatpush.bf16.msra.mxu0 0
      %1457 = vmatpush.bf16.msra.mxu0 0
      %1458 = vmatpush.bf16.msra.mxu0 %v1449
      %1459 = vmatmul.bf16.gmra.mxu0 %v1446
      %v1460 = vpop.f32.mrf.mxu0
      %v1461 = vadd.f32 0.0, %v1460
      %v1462 = vpop.f32.mrf.mxu0
      %v1463 = vadd.f32 0.0, %v1462
      %1464 = vdwg.mxu0
      %v1465 = vadd.f32 %v1279, %v1461
      %v1466 = vadd.f32 %v1280, %v1463
      %s1467 = scalar_lea.vmem %s2, 640
      %v1468 = vld [vmem:[%s1467] sm:$0xf]
      %v1469 = vld [vmem:[%s1467 + $0x4] sm:$0xf]
      %v1470 = vld [vmem:[%s1467 + $0x8] sm:$0xf]
      %v1471 = vld [vmem:[%s1467 + $0xc] sm:$0xf]
      %v1472 = vld [vmem:[%s1467 + $0x10] sm:$0xf]
      %v1473 = vld [vmem:[%s1467 + $0x14] sm:$0xf]
      %v1474 = vld [vmem:[%s1467 + $0x18] sm:$0xf]
      %v1475 = vld [vmem:[%s1467 + $0x1c] sm:$0xf]
      %v1476 = vld [vmem:[%s1467 + $0x20] sm:$0xf]
      %v1477 = vld [vmem:[%s1467 + $0x24] sm:$0xf]
      %v1478 = vld [vmem:[%s1467 + $0x28] sm:$0xf]
      %v1479 = vld [vmem:[%s1467 + $0x2c] sm:$0xf]
      %v1480 = vld [vmem:[%s1467 + $0x30] sm:$0xf]
      %v1481 = vld [vmem:[%s1467 + $0x34] sm:$0xf]
      %v1482 = vld [vmem:[%s1467 + $0x38] sm:$0xf]
      %v1483 = vld [vmem:[%s1467 + $0x3c] sm:$0xf]
      %v1484 = vld [vmem:[%s1467 + $0x40] sm:$0xf]
      %v1485 = vld [vmem:[%s1467 + $0x44] sm:$0xf]
      %v1486 = vld [vmem:[%s1467 + $0x48] sm:$0xf]
      %v1487 = vld [vmem:[%s1467 + $0x4c] sm:$0xf]
      %v1488 = vld [vmem:[%s1467 + $0x50] sm:$0xf]
      %v1489 = vld [vmem:[%s1467 + $0x54] sm:$0xf]
      %v1490 = vld [vmem:[%s1467 + $0x58] sm:$0xf]
      %v1491 = vld [vmem:[%s1467 + $0x5c] sm:$0xf]
      %v1492 = vld [vmem:[%s1467 + $0x60] sm:$0xf]
      %v1493 = vld [vmem:[%s1467 + $0x64] sm:$0xf]
      %v1494 = vld [vmem:[%s1467 + $0x68] sm:$0xf]
      %v1495 = vld [vmem:[%s1467 + $0x6c] sm:$0xf]
      %v1496 = vld [vmem:[%s1467 + $0x70] sm:$0xf]
      %v1497 = vld [vmem:[%s1467 + $0x74] sm:$0xf]
      %v1498 = vld [vmem:[%s1467 + $0x78] sm:$0xf]
      %v1499 = vld [vmem:[%s1467 + $0x7c] sm:$0xf]
      %v1532 = vunpack.c.l.b16 %v1468
      %v1533 = vunpack.c.l.b16 %v1469
      %v1534 = vunpack.c.l.b16 %v1470
      %v1535 = vunpack.c.l.b16 %v1471
      %v1536 = vunpack.c.l.b16 %v1472
      %v1537 = vunpack.c.l.b16 %v1473
      %v1538 = vunpack.c.l.b16 %v1474
      %v1539 = vunpack.c.l.b16 %v1475
      %v1540 = vunpack.c.l.b16 %v1476
      %v1541 = vunpack.c.l.b16 %v1477
      %v1542 = vunpack.c.l.b16 %v1478
      %v1543 = vunpack.c.l.b16 %v1479
      %v1544 = vunpack.c.l.b16 %v1480
      %v1545 = vunpack.c.l.b16 %v1481
      %v1546 = vunpack.c.l.b16 %v1482
      %v1547 = vunpack.c.l.b16 %v1483
      %v1548 = vunpack.c.l.b16 %v1484
      %v1549 = vunpack.c.l.b16 %v1485
      %v1550 = vunpack.c.l.b16 %v1486
      %v1551 = vunpack.c.l.b16 %v1487
      %v1552 = vunpack.c.l.b16 %v1488
      %v1553 = vunpack.c.l.b16 %v1489
      %v1554 = vunpack.c.l.b16 %v1490
      %v1555 = vunpack.c.l.b16 %v1491
      %v1556 = vunpack.c.l.b16 %v1492
      %v1557 = vunpack.c.l.b16 %v1493
      %v1558 = vunpack.c.l.b16 %v1494
      %v1559 = vunpack.c.l.b16 %v1495
      %v1560 = vunpack.c.l.b16 %v1496
      %v1561 = vunpack.c.l.b16 %v1497
      %v1562 = vunpack.c.l.b16 %v1498
      %v1563 = vunpack.c.l.b16 %v1499
      %v1564 = vpack.c.b16 %v1533, %v1532
      %v1565 = vpack.c.b16 %v1535, %v1534
      %v1566 = vpack.c.b16 %v1537, %v1536
      %v1567 = vpack.c.b16 %v1539, %v1538
      %v1568 = vpack.c.b16 %v1541, %v1540
      %v1569 = vpack.c.b16 %v1543, %v1542
      %v1570 = vpack.c.b16 %v1545, %v1544
      %v1571 = vpack.c.b16 %v1547, %v1546
      %v1572 = vpack.c.b16 %v1549, %v1548
      %v1573 = vpack.c.b16 %v1551, %v1550
      %v1574 = vpack.c.b16 %v1553, %v1552
      %v1575 = vpack.c.b16 %v1555, %v1554
      %v1576 = vpack.c.b16 %v1557, %v1556
      %v1577 = vpack.c.b16 %v1559, %v1558
      %v1578 = vpack.c.b16 %v1561, %v1560
      %v1579 = vpack.c.b16 %v1563, %v1562
      %1596 = vmatpush.bf16.msra.mxu0 %v1571
      %1597 = vmatpush.bf16.msra.mxu0 %v1570
      %1598 = vmatpush.bf16.msra.mxu0 %v1569
      %1599 = vmatpush.bf16.msra.mxu0 %v1568
      %1600 = vmatpush.bf16.msra.mxu0 %v1567
      %1601 = vmatpush.bf16.msra.mxu0 %v1566
      %1602 = vmatpush.bf16.msra.mxu0 %v1565
      %1603 = vmatpush.bf16.msra.mxu0 %v1564
      %1604 = vmatmul.bf16.gmra.mxu0 %v539
      %v1605 = vpop.f32.mrf.mxu0
      %v1606 = vadd.f32 0.0, %v1605
      %v1607 = vpop.f32.mrf.mxu0
      %1608 = vdwg.mxu0
      %1609 = vmatpush.bf16.msra.mxu0 %v1579
      %1610 = vmatpush.bf16.msra.mxu0 %v1578
      %1611 = vmatpush.bf16.msra.mxu0 %v1577
      %1612 = vmatpush.bf16.msra.mxu0 %v1576
      %1613 = vmatpush.bf16.msra.mxu0 %v1575
      %1614 = vmatpush.bf16.msra.mxu0 %v1574
      %1615 = vmatpush.bf16.msra.mxu0 %v1573
      %1616 = vmatpush.bf16.msra.mxu0 %v1572
      %1617 = vmatmul.bf16.gmra.mxu0 %v540
      %v1618 = vpop.f32.mrf.mxu0
      %v1619 = vadd.f32 %v1606, %v1618
      %v1620 = vpop.f32.mrf.mxu0
      %1621 = vdwg.mxu0
      %s1622 = scalar_lea.vmem %s3, 40
      %v1623 = vld [vmem:[%s1622] sm:$0xf]
      %v1624 = vld [vmem:[%s1622 + $0x4] sm:$0xf]
      %v1625 = vpack.c.bf16 %v1619, %v1619
      %v1628 = vunpack.c.l.b16 %v1623
      %v1629 = vunpack.c.l.b16 %v1624
      %v1630 = vpack.c.b16 %v1629, %v1628
      %v1632 = vsel %vm862, %v1630, 0
      %v1635 = vsel %vm866, %v1625, 0
      %1637 = vmatpush.bf16.msra.mxu0 0
      %1638 = vmatpush.bf16.msra.mxu0 0
      %1639 = vmatpush.bf16.msra.mxu0 0
      %1640 = vmatpush.bf16.msra.mxu0 0
      %1641 = vmatpush.bf16.msra.mxu0 0
      %1642 = vmatpush.bf16.msra.mxu0 0
      %1643 = vmatpush.bf16.msra.mxu0 0
      %1644 = vmatpush.bf16.msra.mxu0 %v1635
      %1645 = vmatmul.bf16.gmra.mxu0 %v1632
      %v1646 = vpop.f32.mrf.mxu0
      %v1647 = vadd.f32 0.0, %v1646
      %v1648 = vpop.f32.mrf.mxu0
      %v1649 = vadd.f32 0.0, %v1648
      %1650 = vdwg.mxu0
      %v1651 = vadd.f32 %v1465, %v1647
      %v1652 = vadd.f32 %v1466, %v1649
      %s1653 = scalar_lea.vmem %s2, 768
      %v1654 = vld [vmem:[%s1653] sm:$0xf]
      %v1655 = vld [vmem:[%s1653 + $0x4] sm:$0xf]
      %v1656 = vld [vmem:[%s1653 + $0x8] sm:$0xf]
      %v1657 = vld [vmem:[%s1653 + $0xc] sm:$0xf]
      %v1658 = vld [vmem:[%s1653 + $0x10] sm:$0xf]
      %v1659 = vld [vmem:[%s1653 + $0x14] sm:$0xf]
      %v1660 = vld [vmem:[%s1653 + $0x18] sm:$0xf]
      %v1661 = vld [vmem:[%s1653 + $0x1c] sm:$0xf]
      %v1662 = vld [vmem:[%s1653 + $0x20] sm:$0xf]
      %v1663 = vld [vmem:[%s1653 + $0x24] sm:$0xf]
      %v1664 = vld [vmem:[%s1653 + $0x28] sm:$0xf]
      %v1665 = vld [vmem:[%s1653 + $0x2c] sm:$0xf]
      %v1666 = vld [vmem:[%s1653 + $0x30] sm:$0xf]
      %v1667 = vld [vmem:[%s1653 + $0x34] sm:$0xf]
      %v1668 = vld [vmem:[%s1653 + $0x38] sm:$0xf]
      %v1669 = vld [vmem:[%s1653 + $0x3c] sm:$0xf]
      %v1670 = vld [vmem:[%s1653 + $0x40] sm:$0xf]
      %v1671 = vld [vmem:[%s1653 + $0x44] sm:$0xf]
      %v1672 = vld [vmem:[%s1653 + $0x48] sm:$0xf]
      %v1673 = vld [vmem:[%s1653 + $0x4c] sm:$0xf]
      %v1674 = vld [vmem:[%s1653 + $0x50] sm:$0xf]
      %v1675 = vld [vmem:[%s1653 + $0x54] sm:$0xf]
      %v1676 = vld [vmem:[%s1653 + $0x58] sm:$0xf]
      %v1677 = vld [vmem:[%s1653 + $0x5c] sm:$0xf]
      %v1678 = vld [vmem:[%s1653 + $0x60] sm:$0xf]
      %v1679 = vld [vmem:[%s1653 + $0x64] sm:$0xf]
      %v1680 = vld [vmem:[%s1653 + $0x68] sm:$0xf]
      %v1681 = vld [vmem:[%s1653 + $0x6c] sm:$0xf]
      %v1682 = vld [vmem:[%s1653 + $0x70] sm:$0xf]
      %v1683 = vld [vmem:[%s1653 + $0x74] sm:$0xf]
      %v1684 = vld [vmem:[%s1653 + $0x78] sm:$0xf]
      %v1685 = vld [vmem:[%s1653 + $0x7c] sm:$0xf]
      %v1718 = vunpack.c.l.b16 %v1654
      %v1719 = vunpack.c.l.b16 %v1655
      %v1720 = vunpack.c.l.b16 %v1656
      %v1721 = vunpack.c.l.b16 %v1657
      %v1722 = vunpack.c.l.b16 %v1658
      %v1723 = vunpack.c.l.b16 %v1659
      %v1724 = vunpack.c.l.b16 %v1660
      %v1725 = vunpack.c.l.b16 %v1661
      %v1726 = vunpack.c.l.b16 %v1662
      %v1727 = vunpack.c.l.b16 %v1663
      %v1728 = vunpack.c.l.b16 %v1664
      %v1729 = vunpack.c.l.b16 %v1665
      %v1730 = vunpack.c.l.b16 %v1666
      %v1731 = vunpack.c.l.b16 %v1667
      %v1732 = vunpack.c.l.b16 %v1668
      %v1733 = vunpack.c.l.b16 %v1669
      %v1734 = vunpack.c.l.b16 %v1670
      %v1735 = vunpack.c.l.b16 %v1671
      %v1736 = vunpack.c.l.b16 %v1672
      %v1737 = vunpack.c.l.b16 %v1673
      %v1738 = vunpack.c.l.b16 %v1674
      %v1739 = vunpack.c.l.b16 %v1675
      %v1740 = vunpack.c.l.b16 %v1676
      %v1741 = vunpack.c.l.b16 %v1677
      %v1742 = vunpack.c.l.b16 %v1678
      %v1743 = vunpack.c.l.b16 %v1679
      %v1744 = vunpack.c.l.b16 %v1680
      %v1745 = vunpack.c.l.b16 %v1681
      %v1746 = vunpack.c.l.b16 %v1682
      %v1747 = vunpack.c.l.b16 %v1683
      %v1748 = vunpack.c.l.b16 %v1684
      %v1749 = vunpack.c.l.b16 %v1685
      %v1750 = vpack.c.b16 %v1719, %v1718
      %v1751 = vpack.c.b16 %v1721, %v1720
      %v1752 = vpack.c.b16 %v1723, %v1722
      %v1753 = vpack.c.b16 %v1725, %v1724
      %v1754 = vpack.c.b16 %v1727, %v1726
      %v1755 = vpack.c.b16 %v1729, %v1728
      %v1756 = vpack.c.b16 %v1731, %v1730
      %v1757 = vpack.c.b16 %v1733, %v1732
      %v1758 = vpack.c.b16 %v1735, %v1734
      %v1759 = vpack.c.b16 %v1737, %v1736
      %v1760 = vpack.c.b16 %v1739, %v1738
      %v1761 = vpack.c.b16 %v1741, %v1740
      %v1762 = vpack.c.b16 %v1743, %v1742
      %v1763 = vpack.c.b16 %v1745, %v1744
      %v1764 = vpack.c.b16 %v1747, %v1746
      %v1765 = vpack.c.b16 %v1749, %v1748
      %1782 = vmatpush.bf16.msra.mxu0 %v1757
      %1783 = vmatpush.bf16.msra.mxu0 %v1756
      %1784 = vmatpush.bf16.msra.mxu0 %v1755
      %1785 = vmatpush.bf16.msra.mxu0 %v1754
      %1786 = vmatpush.bf16.msra.mxu0 %v1753
      %1787 = vmatpush.bf16.msra.mxu0 %v1752
      %1788 = vmatpush.bf16.msra.mxu0 %v1751
      %1789 = vmatpush.bf16.msra.mxu0 %v1750
      %1790 = vmatmul.bf16.gmra.mxu0 %v539
      %v1791 = vpop.f32.mrf.mxu0
      %v1792 = vadd.f32 0.0, %v1791
      %v1793 = vpop.f32.mrf.mxu0
      %1794 = vdwg.mxu0
      %1795 = vmatpush.bf16.msra.mxu0 %v1765
      %1796 = vmatpush.bf16.msra.mxu0 %v1764
      %1797 = vmatpush.bf16.msra.mxu0 %v1763
      %1798 = vmatpush.bf16.msra.mxu0 %v1762
      %1799 = vmatpush.bf16.msra.mxu0 %v1761
      %1800 = vmatpush.bf16.msra.mxu0 %v1760
      %1801 = vmatpush.bf16.msra.mxu0 %v1759
      %1802 = vmatpush.bf16.msra.mxu0 %v1758
      %1803 = vmatmul.bf16.gmra.mxu0 %v540
      %v1804 = vpop.f32.mrf.mxu0
      %v1805 = vadd.f32 %v1792, %v1804
      %v1806 = vpop.f32.mrf.mxu0
      %1807 = vdwg.mxu0
      %s1808 = scalar_lea.vmem %s3, 48
      %v1809 = vld [vmem:[%s1808] sm:$0xf]
      %v1810 = vld [vmem:[%s1808 + $0x4] sm:$0xf]
      %v1811 = vpack.c.bf16 %v1805, %v1805
      %v1814 = vunpack.c.l.b16 %v1809
      %v1815 = vunpack.c.l.b16 %v1810
      %v1816 = vpack.c.b16 %v1815, %v1814
      %v1818 = vsel %vm862, %v1816, 0
      %v1821 = vsel %vm866, %v1811, 0
      %1823 = vmatpush.bf16.msra.mxu0 0
      %1824 = vmatpush.bf16.msra.mxu0 0
      %1825 = vmatpush.bf16.msra.mxu0 0
      %1826 = vmatpush.bf16.msra.mxu0 0
      %1827 = vmatpush.bf16.msra.mxu0 0
      %1828 = vmatpush.bf16.msra.mxu0 0
      %1829 = vmatpush.bf16.msra.mxu0 0
      %1830 = vmatpush.bf16.msra.mxu0 %v1821
      %1831 = vmatmul.bf16.gmra.mxu0 %v1818
      %v1832 = vpop.f32.mrf.mxu0
      %v1833 = vadd.f32 0.0, %v1832
      %v1834 = vpop.f32.mrf.mxu0
      %v1835 = vadd.f32 0.0, %v1834
      %1836 = vdwg.mxu0
      %v1837 = vadd.f32 %v1651, %v1833
      %v1838 = vadd.f32 %v1652, %v1835
      %s1839 = scalar_lea.vmem %s2, 896
      %v1840 = vld [vmem:[%s1839] sm:$0xf]
      %v1841 = vld [vmem:[%s1839 + $0x4] sm:$0xf]
      %v1842 = vld [vmem:[%s1839 + $0x8] sm:$0xf]
      %v1843 = vld [vmem:[%s1839 + $0xc] sm:$0xf]
      %v1844 = vld [vmem:[%s1839 + $0x10] sm:$0xf]
      %v1845 = vld [vmem:[%s1839 + $0x14] sm:$0xf]
      %v1846 = vld [vmem:[%s1839 + $0x18] sm:$0xf]
      %v1847 = vld [vmem:[%s1839 + $0x1c] sm:$0xf]
      %v1848 = vld [vmem:[%s1839 + $0x20] sm:$0xf]
      %v1849 = vld [vmem:[%s1839 + $0x24] sm:$0xf]
      %v1850 = vld [vmem:[%s1839 + $0x28] sm:$0xf]
      %v1851 = vld [vmem:[%s1839 + $0x2c] sm:$0xf]
      %v1852 = vld [vmem:[%s1839 + $0x30] sm:$0xf]
      %v1853 = vld [vmem:[%s1839 + $0x34] sm:$0xf]
      %v1854 = vld [vmem:[%s1839 + $0x38] sm:$0xf]
      %v1855 = vld [vmem:[%s1839 + $0x3c] sm:$0xf]
      %v1856 = vld [vmem:[%s1839 + $0x40] sm:$0xf]
      %v1857 = vld [vmem:[%s1839 + $0x44] sm:$0xf]
      %v1858 = vld [vmem:[%s1839 + $0x48] sm:$0xf]
      %v1859 = vld [vmem:[%s1839 + $0x4c] sm:$0xf]
      %v1860 = vld [vmem:[%s1839 + $0x50] sm:$0xf]
      %v1861 = vld [vmem:[%s1839 + $0x54] sm:$0xf]
      %v1862 = vld [vmem:[%s1839 + $0x58] sm:$0xf]
      %v1863 = vld [vmem:[%s1839 + $0x5c] sm:$0xf]
      %v1864 = vld [vmem:[%s1839 + $0x60] sm:$0xf]
      %v1865 = vld [vmem:[%s1839 + $0x64] sm:$0xf]
      %v1866 = vld [vmem:[%s1839 + $0x68] sm:$0xf]
      %v1867 = vld [vmem:[%s1839 + $0x6c] sm:$0xf]
      %v1868 = vld [vmem:[%s1839 + $0x70] sm:$0xf]
      %v1869 = vld [vmem:[%s1839 + $0x74] sm:$0xf]
      %v1870 = vld [vmem:[%s1839 + $0x78] sm:$0xf]
      %v1871 = vld [vmem:[%s1839 + $0x7c] sm:$0xf]
      %v1904 = vunpack.c.l.b16 %v1840
      %v1905 = vunpack.c.l.b16 %v1841
      %v1906 = vunpack.c.l.b16 %v1842
      %v1907 = vunpack.c.l.b16 %v1843
      %v1908 = vunpack.c.l.b16 %v1844
      %v1909 = vunpack.c.l.b16 %v1845
      %v1910 = vunpack.c.l.b16 %v1846
      %v1911 = vunpack.c.l.b16 %v1847
      %v1912 = vunpack.c.l.b16 %v1848
      %v1913 = vunpack.c.l.b16 %v1849
      %v1914 = vunpack.c.l.b16 %v1850
      %v1915 = vunpack.c.l.b16 %v1851
      %v1916 = vunpack.c.l.b16 %v1852
      %v1917 = vunpack.c.l.b16 %v1853
      %v1918 = vunpack.c.l.b16 %v1854
      %v1919 = vunpack.c.l.b16 %v1855
      %v1920 = vunpack.c.l.b16 %v1856
      %v1921 = vunpack.c.l.b16 %v1857
      %v1922 = vunpack.c.l.b16 %v1858
      %v1923 = vunpack.c.l.b16 %v1859
      %v1924 = vunpack.c.l.b16 %v1860
      %v1925 = vunpack.c.l.b16 %v1861
      %v1926 = vunpack.c.l.b16 %v1862
      %v1927 = vunpack.c.l.b16 %v1863
      %v1928 = vunpack.c.l.b16 %v1864
      %v1929 = vunpack.c.l.b16 %v1865
      %v1930 = vunpack.c.l.b16 %v1866
      %v1931 = vunpack.c.l.b16 %v1867
      %v1932 = vunpack.c.l.b16 %v1868
      %v1933 = vunpack.c.l.b16 %v1869
      %v1934 = vunpack.c.l.b16 %v1870
      %v1935 = vunpack.c.l.b16 %v1871
      %v1936 = vpack.c.b16 %v1905, %v1904
      %v1937 = vpack.c.b16 %v1907, %v1906
      %v1938 = vpack.c.b16 %v1909, %v1908
      %v1939 = vpack.c.b16 %v1911, %v1910
      %v1940 = vpack.c.b16 %v1913, %v1912
      %v1941 = vpack.c.b16 %v1915, %v1914
      %v1942 = vpack.c.b16 %v1917, %v1916
      %v1943 = vpack.c.b16 %v1919, %v1918
      %v1944 = vpack.c.b16 %v1921, %v1920
      %v1945 = vpack.c.b16 %v1923, %v1922
      %v1946 = vpack.c.b16 %v1925, %v1924
      %v1947 = vpack.c.b16 %v1927, %v1926
      %v1948 = vpack.c.b16 %v1929, %v1928
      %v1949 = vpack.c.b16 %v1931, %v1930
      %v1950 = vpack.c.b16 %v1933, %v1932
      %v1951 = vpack.c.b16 %v1935, %v1934
      %1968 = vmatpush.bf16.msra.mxu0 %v1943
      %1969 = vmatpush.bf16.msra.mxu0 %v1942
      %1970 = vmatpush.bf16.msra.mxu0 %v1941
      %1971 = vmatpush.bf16.msra.mxu0 %v1940
      %1972 = vmatpush.bf16.msra.mxu0 %v1939
      %1973 = vmatpush.bf16.msra.mxu0 %v1938
      %1974 = vmatpush.bf16.msra.mxu0 %v1937
      %1975 = vmatpush.bf16.msra.mxu0 %v1936
      %1976 = vmatmul.bf16.gmra.mxu0 %v539
      %v1977 = vpop.f32.mrf.mxu0
      %v1978 = vadd.f32 0.0, %v1977
      %v1979 = vpop.f32.mrf.mxu0
      %1980 = vdwg.mxu0
      %1981 = vmatpush.bf16.msra.mxu0 %v1951
      %1982 = vmatpush.bf16.msra.mxu0 %v1950
      %1983 = vmatpush.bf16.msra.mxu0 %v1949
      %1984 = vmatpush.bf16.msra.mxu0 %v1948
      %1985 = vmatpush.bf16.msra.mxu0 %v1947
      %1986 = vmatpush.bf16.msra.mxu0 %v1946
      %1987 = vmatpush.bf16.msra.mxu0 %v1945
      %1988 = vmatpush.bf16.msra.mxu0 %v1944
      %1989 = vmatmul.bf16.gmra.mxu0 %v540
      %v1990 = vpop.f32.mrf.mxu0
      %v1991 = vadd.f32 %v1978, %v1990
      %v1992 = vpop.f32.mrf.mxu0
      %1993 = vdwg.mxu0
      %s1994 = scalar_lea.vmem %s3, 56
      %v1995 = vld [vmem:[%s1994] sm:$0xf]
      %v1996 = vld [vmem:[%s1994 + $0x4] sm:$0xf]
      %v1997 = vpack.c.bf16 %v1991, %v1991
      %v2000 = vunpack.c.l.b16 %v1995
      %v2001 = vunpack.c.l.b16 %v1996
      %v2002 = vpack.c.b16 %v2001, %v2000
      %v2004 = vsel %vm862, %v2002, 0
      %v2007 = vsel %vm866, %v1997, 0
      %2009 = vmatpush.bf16.msra.mxu0 0
      %2010 = vmatpush.bf16.msra.mxu0 0
      %2011 = vmatpush.bf16.msra.mxu0 0
      %2012 = vmatpush.bf16.msra.mxu0 0
      %2013 = vmatpush.bf16.msra.mxu0 0
      %2014 = vmatpush.bf16.msra.mxu0 0
      %2015 = vmatpush.bf16.msra.mxu0 0
      %2016 = vmatpush.bf16.msra.mxu0 %v2007
      %2017 = vmatmul.bf16.gmra.mxu0 %v2004
      %v2018 = vpop.f32.mrf.mxu0
      %v2019 = vadd.f32 0.0, %v2018
      %v2020 = vpop.f32.mrf.mxu0
      %v2021 = vadd.f32 0.0, %v2020
      %2022 = vdwg.mxu0
      %v2023 = vadd.f32 %v1837, %v2019
      %v2024 = vadd.f32 %v1838, %v2021
      %s2025 = scalar_lea.vmem %s2, 1024
      %v2026 = vld [vmem:[%s2025] sm:$0xf]
      %v2027 = vld [vmem:[%s2025 + $0x4] sm:$0xf]
      %v2028 = vld [vmem:[%s2025 + $0x8] sm:$0xf]
      %v2029 = vld [vmem:[%s2025 + $0xc] sm:$0xf]
      %v2030 = vld [vmem:[%s2025 + $0x10] sm:$0xf]
      %v2031 = vld [vmem:[%s2025 + $0x14] sm:$0xf]
      %v2032 = vld [vmem:[%s2025 + $0x18] sm:$0xf]
      %v2033 = vld [vmem:[%s2025 + $0x1c] sm:$0xf]
      %v2034 = vld [vmem:[%s2025 + $0x20] sm:$0xf]
      %v2035 = vld [vmem:[%s2025 + $0x24] sm:$0xf]
      %v2036 = vld [vmem:[%s2025 + $0x28] sm:$0xf]
      %v2037 = vld [vmem:[%s2025 + $0x2c] sm:$0xf]
      %v2038 = vld [vmem:[%s2025 + $0x30] sm:$0xf]
      %v2039 = vld [vmem:[%s2025 + $0x34] sm:$0xf]
      %v2040 = vld [vmem:[%s2025 + $0x38] sm:$0xf]
      %v2041 = vld [vmem:[%s2025 + $0x3c] sm:$0xf]
      %v2042 = vld [vmem:[%s2025 + $0x40] sm:$0xf]
      %v2043 = vld [vmem:[%s2025 + $0x44] sm:$0xf]
      %v2044 = vld [vmem:[%s2025 + $0x48] sm:$0xf]
      %v2045 = vld [vmem:[%s2025 + $0x4c] sm:$0xf]
      %v2046 = vld [vmem:[%s2025 + $0x50] sm:$0xf]
      %v2047 = vld [vmem:[%s2025 + $0x54] sm:$0xf]
      %v2048 = vld [vmem:[%s2025 + $0x58] sm:$0xf]
      %v2049 = vld [vmem:[%s2025 + $0x5c] sm:$0xf]
      %v2050 = vld [vmem:[%s2025 + $0x60] sm:$0xf]
      %v2051 = vld [vmem:[%s2025 + $0x64] sm:$0xf]
      %v2052 = vld [vmem:[%s2025 + $0x68] sm:$0xf]
      %v2053 = vld [vmem:[%s2025 + $0x6c] sm:$0xf]
      %v2054 = vld [vmem:[%s2025 + $0x70] sm:$0xf]
      %v2055 = vld [vmem:[%s2025 + $0x74] sm:$0xf]
      %v2056 = vld [vmem:[%s2025 + $0x78] sm:$0xf]
      %v2057 = vld [vmem:[%s2025 + $0x7c] sm:$0xf]
      %v2090 = vunpack.c.l.b16 %v2026
      %v2091 = vunpack.c.l.b16 %v2027
      %v2092 = vunpack.c.l.b16 %v2028
      %v2093 = vunpack.c.l.b16 %v2029
      %v2094 = vunpack.c.l.b16 %v2030
      %v2095 = vunpack.c.l.b16 %v2031
      %v2096 = vunpack.c.l.b16 %v2032
      %v2097 = vunpack.c.l.b16 %v2033
      %v2098 = vunpack.c.l.b16 %v2034
      %v2099 = vunpack.c.l.b16 %v2035
      %v2100 = vunpack.c.l.b16 %v2036
      %v2101 = vunpack.c.l.b16 %v2037
      %v2102 = vunpack.c.l.b16 %v2038
      %v2103 = vunpack.c.l.b16 %v2039
      %v2104 = vunpack.c.l.b16 %v2040
      %v2105 = vunpack.c.l.b16 %v2041
      %v2106 = vunpack.c.l.b16 %v2042
      %v2107 = vunpack.c.l.b16 %v2043
      %v2108 = vunpack.c.l.b16 %v2044
      %v2109 = vunpack.c.l.b16 %v2045
      %v2110 = vunpack.c.l.b16 %v2046
      %v2111 = vunpack.c.l.b16 %v2047
      %v2112 = vunpack.c.l.b16 %v2048
      %v2113 = vunpack.c.l.b16 %v2049
      %v2114 = vunpack.c.l.b16 %v2050
      %v2115 = vunpack.c.l.b16 %v2051
      %v2116 = vunpack.c.l.b16 %v2052
      %v2117 = vunpack.c.l.b16 %v2053
      %v2118 = vunpack.c.l.b16 %v2054
      %v2119 = vunpack.c.l.b16 %v2055
      %v2120 = vunpack.c.l.b16 %v2056
      %v2121 = vunpack.c.l.b16 %v2057
      %v2122 = vpack.c.b16 %v2091, %v2090
      %v2123 = vpack.c.b16 %v2093, %v2092
      %v2124 = vpack.c.b16 %v2095, %v2094
      %v2125 = vpack.c.b16 %v2097, %v2096
      %v2126 = vpack.c.b16 %v2099, %v2098
      %v2127 = vpack.c.b16 %v2101, %v2100
      %v2128 = vpack.c.b16 %v2103, %v2102
      %v2129 = vpack.c.b16 %v2105, %v2104
      %v2130 = vpack.c.b16 %v2107, %v2106
      %v2131 = vpack.c.b16 %v2109, %v2108
      %v2132 = vpack.c.b16 %v2111, %v2110
      %v2133 = vpack.c.b16 %v2113, %v2112
      %v2134 = vpack.c.b16 %v2115, %v2114
      %v2135 = vpack.c.b16 %v2117, %v2116
      %v2136 = vpack.c.b16 %v2119, %v2118
      %v2137 = vpack.c.b16 %v2121, %v2120
      %2154 = vmatpush.bf16.msra.mxu0 %v2129
      %2155 = vmatpush.bf16.msra.mxu0 %v2128
      %2156 = vmatpush.bf16.msra.mxu0 %v2127
      %2157 = vmatpush.bf16.msra.mxu0 %v2126
      %2158 = vmatpush.bf16.msra.mxu0 %v2125
      %2159 = vmatpush.bf16.msra.mxu0 %v2124
      %2160 = vmatpush.bf16.msra.mxu0 %v2123
      %2161 = vmatpush.bf16.msra.mxu0 %v2122
      %2162 = vmatmul.bf16.gmra.mxu0 %v539
      %v2163 = vpop.f32.mrf.mxu0
      %v2164 = vadd.f32 0.0, %v2163
      %v2165 = vpop.f32.mrf.mxu0
      %2166 = vdwg.mxu0
      %2167 = vmatpush.bf16.msra.mxu0 %v2137
      %2168 = vmatpush.bf16.msra.mxu0 %v2136
      %2169 = vmatpush.bf16.msra.mxu0 %v2135
      %2170 = vmatpush.bf16.msra.mxu0 %v2134
      %2171 = vmatpush.bf16.msra.mxu0 %v2133
      %2172 = vmatpush.bf16.msra.mxu0 %v2132
      %2173 = vmatpush.bf16.msra.mxu0 %v2131
      %2174 = vmatpush.bf16.msra.mxu0 %v2130
      %2175 = vmatmul.bf16.gmra.mxu0 %v540
      %v2176 = vpop.f32.mrf.mxu0
      %v2177 = vadd.f32 %v2164, %v2176
      %v2178 = vpop.f32.mrf.mxu0
      %2179 = vdwg.mxu0
      %s2180 = scalar_lea.vmem %s3, 64
      %v2181 = vld [vmem:[%s2180] sm:$0xf]
      %v2182 = vld [vmem:[%s2180 + $0x4] sm:$0xf]
      %v2183 = vpack.c.bf16 %v2177, %v2177
      %v2186 = vunpack.c.l.b16 %v2181
      %v2187 = vunpack.c.l.b16 %v2182
      %v2188 = vpack.c.b16 %v2187, %v2186
      %v2190 = vsel %vm862, %v2188, 0
      %v2193 = vsel %vm866, %v2183, 0
      %2195 = vmatpush.bf16.msra.mxu0 0
      %2196 = vmatpush.bf16.msra.mxu0 0
      %2197 = vmatpush.bf16.msra.mxu0 0
      %2198 = vmatpush.bf16.msra.mxu0 0
      %2199 = vmatpush.bf16.msra.mxu0 0
      %2200 = vmatpush.bf16.msra.mxu0 0
      %2201 = vmatpush.bf16.msra.mxu0 0
      %2202 = vmatpush.bf16.msra.mxu0 %v2193
      %2203 = vmatmul.bf16.gmra.mxu0 %v2190
      %v2204 = vpop.f32.mrf.mxu0
      %v2205 = vadd.f32 0.0, %v2204
      %v2206 = vpop.f32.mrf.mxu0
      %v2207 = vadd.f32 0.0, %v2206
      %2208 = vdwg.mxu0
      %v2209 = vadd.f32 %v2023, %v2205
      %v2210 = vadd.f32 %v2024, %v2207
      %s2211 = scalar_lea.vmem %s2, 1152
      %v2212 = vld [vmem:[%s2211] sm:$0xf]
      %v2213 = vld [vmem:[%s2211 + $0x4] sm:$0xf]
      %v2214 = vld [vmem:[%s2211 + $0x8] sm:$0xf]
      %v2215 = vld [vmem:[%s2211 + $0xc] sm:$0xf]
      %v2216 = vld [vmem:[%s2211 + $0x10] sm:$0xf]
      %v2217 = vld [vmem:[%s2211 + $0x14] sm:$0xf]
      %v2218 = vld [vmem:[%s2211 + $0x18] sm:$0xf]
      %v2219 = vld [vmem:[%s2211 + $0x1c] sm:$0xf]
      %v2220 = vld [vmem:[%s2211 + $0x20] sm:$0xf]
      %v2221 = vld [vmem:[%s2211 + $0x24] sm:$0xf]
      %v2222 = vld [vmem:[%s2211 + $0x28] sm:$0xf]
      %v2223 = vld [vmem:[%s2211 + $0x2c] sm:$0xf]
      %v2224 = vld [vmem:[%s2211 + $0x30] sm:$0xf]
      %v2225 = vld [vmem:[%s2211 + $0x34] sm:$0xf]
      %v2226 = vld [vmem:[%s2211 + $0x38] sm:$0xf]
      %v2227 = vld [vmem:[%s2211 + $0x3c] sm:$0xf]
      %v2228 = vld [vmem:[%s2211 + $0x40] sm:$0xf]
      %v2229 = vld [vmem:[%s2211 + $0x44] sm:$0xf]
      %v2230 = vld [vmem:[%s2211 + $0x48] sm:$0xf]
      %v2231 = vld [vmem:[%s2211 + $0x4c] sm:$0xf]
      %v2232 = vld [vmem:[%s2211 + $0x50] sm:$0xf]
      %v2233 = vld [vmem:[%s2211 + $0x54] sm:$0xf]
      %v2234 = vld [vmem:[%s2211 + $0x58] sm:$0xf]
      %v2235 = vld [vmem:[%s2211 + $0x5c] sm:$0xf]
      %v2236 = vld [vmem:[%s2211 + $0x60] sm:$0xf]
      %v2237 = vld [vmem:[%s2211 + $0x64] sm:$0xf]
      %v2238 = vld [vmem:[%s2211 + $0x68] sm:$0xf]
      %v2239 = vld [vmem:[%s2211 + $0x6c] sm:$0xf]
      %v2240 = vld [vmem:[%s2211 + $0x70] sm:$0xf]
      %v2241 = vld [vmem:[%s2211 + $0x74] sm:$0xf]
      %v2242 = vld [vmem:[%s2211 + $0x78] sm:$0xf]
      %v2243 = vld [vmem:[%s2211 + $0x7c] sm:$0xf]
      %v2276 = vunpack.c.l.b16 %v2212
      %v2277 = vunpack.c.l.b16 %v2213
      %v2278 = vunpack.c.l.b16 %v2214
      %v2279 = vunpack.c.l.b16 %v2215
      %v2280 = vunpack.c.l.b16 %v2216
      %v2281 = vunpack.c.l.b16 %v2217
      %v2282 = vunpack.c.l.b16 %v2218
      %v2283 = vunpack.c.l.b16 %v2219
      %v2284 = vunpack.c.l.b16 %v2220
      %v2285 = vunpack.c.l.b16 %v2221
      %v2286 = vunpack.c.l.b16 %v2222
      %v2287 = vunpack.c.l.b16 %v2223
      %v2288 = vunpack.c.l.b16 %v2224
      %v2289 = vunpack.c.l.b16 %v2225
      %v2290 = vunpack.c.l.b16 %v2226
      %v2291 = vunpack.c.l.b16 %v2227
      %v2292 = vunpack.c.l.b16 %v2228
      %v2293 = vunpack.c.l.b16 %v2229
      %v2294 = vunpack.c.l.b16 %v2230
      %v2295 = vunpack.c.l.b16 %v2231
      %v2296 = vunpack.c.l.b16 %v2232
      %v2297 = vunpack.c.l.b16 %v2233
      %v2298 = vunpack.c.l.b16 %v2234
      %v2299 = vunpack.c.l.b16 %v2235
      %v2300 = vunpack.c.l.b16 %v2236
      %v2301 = vunpack.c.l.b16 %v2237
      %v2302 = vunpack.c.l.b16 %v2238
      %v2303 = vunpack.c.l.b16 %v2239
      %v2304 = vunpack.c.l.b16 %v2240
      %v2305 = vunpack.c.l.b16 %v2241
      %v2306 = vunpack.c.l.b16 %v2242
      %v2307 = vunpack.c.l.b16 %v2243
      %v2308 = vpack.c.b16 %v2277, %v2276
      %v2309 = vpack.c.b16 %v2279, %v2278
      %v2310 = vpack.c.b16 %v2281, %v2280
      %v2311 = vpack.c.b16 %v2283, %v2282
      %v2312 = vpack.c.b16 %v2285, %v2284
      %v2313 = vpack.c.b16 %v2287, %v2286
      %v2314 = vpack.c.b16 %v2289, %v2288
      %v2315 = vpack.c.b16 %v2291, %v2290
      %v2316 = vpack.c.b16 %v2293, %v2292
      %v2317 = vpack.c.b16 %v2295, %v2294
      %v2318 = vpack.c.b16 %v2297, %v2296
      %v2319 = vpack.c.b16 %v2299, %v2298
      %v2320 = vpack.c.b16 %v2301, %v2300
      %v2321 = vpack.c.b16 %v2303, %v2302
      %v2322 = vpack.c.b16 %v2305, %v2304
      %v2323 = vpack.c.b16 %v2307, %v2306
      %2340 = vmatpush.bf16.msra.mxu0 %v2315
      %2341 = vmatpush.bf16.msra.mxu0 %v2314
      %2342 = vmatpush.bf16.msra.mxu0 %v2313
      %2343 = vmatpush.bf16.msra.mxu0 %v2312
      %2344 = vmatpush.bf16.msra.mxu0 %v2311
      %2345 = vmatpush.bf16.msra.mxu0 %v2310
      %2346 = vmatpush.bf16.msra.mxu0 %v2309
      %2347 = vmatpush.bf16.msra.mxu0 %v2308
      %2348 = vmatmul.bf16.gmra.mxu0 %v539
      %v2349 = vpop.f32.mrf.mxu0
      %v2350 = vadd.f32 0.0, %v2349
      %v2351 = vpop.f32.mrf.mxu0
      %2352 = vdwg.mxu0
      %2353 = vmatpush.bf16.msra.mxu0 %v2323
      %2354 = vmatpush.bf16.msra.mxu0 %v2322
      %2355 = vmatpush.bf16.msra.mxu0 %v2321
      %2356 = vmatpush.bf16.msra.mxu0 %v2320
      %2357 = vmatpush.bf16.msra.mxu0 %v2319
      %2358 = vmatpush.bf16.msra.mxu0 %v2318
      %2359 = vmatpush.bf16.msra.mxu0 %v2317
      %2360 = vmatpush.bf16.msra.mxu0 %v2316
      %2361 = vmatmul.bf16.gmra.mxu0 %v540
      %v2362 = vpop.f32.mrf.mxu0
      %v2363 = vadd.f32 %v2350, %v2362
      %v2364 = vpop.f32.mrf.mxu0
      %2365 = vdwg.mxu0
      %s2366 = scalar_lea.vmem %s3, 72
      %v2367 = vld [vmem:[%s2366] sm:$0xf]
      %v2368 = vld [vmem:[%s2366 + $0x4] sm:$0xf]
      %v2369 = vpack.c.bf16 %v2363, %v2363
      %v2372 = vunpack.c.l.b16 %v2367
      %v2373 = vunpack.c.l.b16 %v2368
      %v2374 = vpack.c.b16 %v2373, %v2372
      %v2376 = vsel %vm862, %v2374, 0
      %v2379 = vsel %vm866, %v2369, 0
      %2381 = vmatpush.bf16.msra.mxu0 0
      %2382 = vmatpush.bf16.msra.mxu0 0
      %2383 = vmatpush.bf16.msra.mxu0 0
      %2384 = vmatpush.bf16.msra.mxu0 0
      %2385 = vmatpush.bf16.msra.mxu0 0
      %2386 = vmatpush.bf16.msra.mxu0 0
      %2387 = vmatpush.bf16.msra.mxu0 0
      %2388 = vmatpush.bf16.msra.mxu0 %v2379
      %2389 = vmatmul.bf16.gmra.mxu0 %v2376
      %v2390 = vpop.f32.mrf.mxu0
      %v2391 = vadd.f32 0.0, %v2390
      %v2392 = vpop.f32.mrf.mxu0
      %v2393 = vadd.f32 0.0, %v2392
      %2394 = vdwg.mxu0
      %v2395 = vadd.f32 %v2209, %v2391
      %v2396 = vadd.f32 %v2210, %v2393
      %s2397 = scalar_lea.vmem %s2, 1280
      %v2398 = vld [vmem:[%s2397] sm:$0xf]
      %v2399 = vld [vmem:[%s2397 + $0x4] sm:$0xf]
      %v2400 = vld [vmem:[%s2397 + $0x8] sm:$0xf]
      %v2401 = vld [vmem:[%s2397 + $0xc] sm:$0xf]
      %v2402 = vld [vmem:[%s2397 + $0x10] sm:$0xf]
      %v2403 = vld [vmem:[%s2397 + $0x14] sm:$0xf]
      %v2404 = vld [vmem:[%s2397 + $0x18] sm:$0xf]
      %v2405 = vld [vmem:[%s2397 + $0x1c] sm:$0xf]
      %v2406 = vld [vmem:[%s2397 + $0x20] sm:$0xf]
      %v2407 = vld [vmem:[%s2397 + $0x24] sm:$0xf]
      %v2408 = vld [vmem:[%s2397 + $0x28] sm:$0xf]
      %v2409 = vld [vmem:[%s2397 + $0x2c] sm:$0xf]
      %v2410 = vld [vmem:[%s2397 + $0x30] sm:$0xf]
      %v2411 = vld [vmem:[%s2397 + $0x34] sm:$0xf]
      %v2412 = vld [vmem:[%s2397 + $0x38] sm:$0xf]
      %v2413 = vld [vmem:[%s2397 + $0x3c] sm:$0xf]
      %v2414 = vld [vmem:[%s2397 + $0x40] sm:$0xf]
      %v2415 = vld [vmem:[%s2397 + $0x44] sm:$0xf]
      %v2416 = vld [vmem:[%s2397 + $0x48] sm:$0xf]
      %v2417 = vld [vmem:[%s2397 + $0x4c] sm:$0xf]
      %v2418 = vld [vmem:[%s2397 + $0x50] sm:$0xf]
      %v2419 = vld [vmem:[%s2397 + $0x54] sm:$0xf]
      %v2420 = vld [vmem:[%s2397 + $0x58] sm:$0xf]
      %v2421 = vld [vmem:[%s2397 + $0x5c] sm:$0xf]
      %v2422 = vld [vmem:[%s2397 + $0x60] sm:$0xf]
      %v2423 = vld [vmem:[%s2397 + $0x64] sm:$0xf]
      %v2424 = vld [vmem:[%s2397 + $0x68] sm:$0xf]
      %v2425 = vld [vmem:[%s2397 + $0x6c] sm:$0xf]
      %v2426 = vld [vmem:[%s2397 + $0x70] sm:$0xf]
      %v2427 = vld [vmem:[%s2397 + $0x74] sm:$0xf]
      %v2428 = vld [vmem:[%s2397 + $0x78] sm:$0xf]
      %v2429 = vld [vmem:[%s2397 + $0x7c] sm:$0xf]
      %v2462 = vunpack.c.l.b16 %v2398
      %v2463 = vunpack.c.l.b16 %v2399
      %v2464 = vunpack.c.l.b16 %v2400
      %v2465 = vunpack.c.l.b16 %v2401
      %v2466 = vunpack.c.l.b16 %v2402
      %v2467 = vunpack.c.l.b16 %v2403
      %v2468 = vunpack.c.l.b16 %v2404
      %v2469 = vunpack.c.l.b16 %v2405
      %v2470 = vunpack.c.l.b16 %v2406
      %v2471 = vunpack.c.l.b16 %v2407
      %v2472 = vunpack.c.l.b16 %v2408
      %v2473 = vunpack.c.l.b16 %v2409
      %v2474 = vunpack.c.l.b16 %v2410
      %v2475 = vunpack.c.l.b16 %v2411
      %v2476 = vunpack.c.l.b16 %v2412
      %v2477 = vunpack.c.l.b16 %v2413
      %v2478 = vunpack.c.l.b16 %v2414
      %v2479 = vunpack.c.l.b16 %v2415
      %v2480 = vunpack.c.l.b16 %v2416
      %v2481 = vunpack.c.l.b16 %v2417
      %v2482 = vunpack.c.l.b16 %v2418
      %v2483 = vunpack.c.l.b16 %v2419
      %v2484 = vunpack.c.l.b16 %v2420
      %v2485 = vunpack.c.l.b16 %v2421
      %v2486 = vunpack.c.l.b16 %v2422
      %v2487 = vunpack.c.l.b16 %v2423
      %v2488 = vunpack.c.l.b16 %v2424
      %v2489 = vunpack.c.l.b16 %v2425
      %v2490 = vunpack.c.l.b16 %v2426
      %v2491 = vunpack.c.l.b16 %v2427
      %v2492 = vunpack.c.l.b16 %v2428
      %v2493 = vunpack.c.l.b16 %v2429
      %v2494 = vpack.c.b16 %v2463, %v2462
      %v2495 = vpack.c.b16 %v2465, %v2464
      %v2496 = vpack.c.b16 %v2467, %v2466
      %v2497 = vpack.c.b16 %v2469, %v2468
      %v2498 = vpack.c.b16 %v2471, %v2470
      %v2499 = vpack.c.b16 %v2473, %v2472
      %v2500 = vpack.c.b16 %v2475, %v2474
      %v2501 = vpack.c.b16 %v2477, %v2476
      %v2502 = vpack.c.b16 %v2479, %v2478
      %v2503 = vpack.c.b16 %v2481, %v2480
      %v2504 = vpack.c.b16 %v2483, %v2482
      %v2505 = vpack.c.b16 %v2485, %v2484
      %v2506 = vpack.c.b16 %v2487, %v2486
      %v2507 = vpack.c.b16 %v2489, %v2488
      %v2508 = vpack.c.b16 %v2491, %v2490
      %v2509 = vpack.c.b16 %v2493, %v2492
      %2526 = vmatpush.bf16.msra.mxu0 %v2501
      %2527 = vmatpush.bf16.msra.mxu0 %v2500
      %2528 = vmatpush.bf16.msra.mxu0 %v2499
      %2529 = vmatpush.bf16.msra.mxu0 %v2498
      %2530 = vmatpush.bf16.msra.mxu0 %v2497
      %2531 = vmatpush.bf16.msra.mxu0 %v2496
      %2532 = vmatpush.bf16.msra.mxu0 %v2495
      %2533 = vmatpush.bf16.msra.mxu0 %v2494
      %2534 = vmatmul.bf16.gmra.mxu0 %v539
      %v2535 = vpop.f32.mrf.mxu0
      %v2536 = vadd.f32 0.0, %v2535
      %v2537 = vpop.f32.mrf.mxu0
      %2538 = vdwg.mxu0
      %2539 = vmatpush.bf16.msra.mxu0 %v2509
      %2540 = vmatpush.bf16.msra.mxu0 %v2508
      %2541 = vmatpush.bf16.msra.mxu0 %v2507
      %2542 = vmatpush.bf16.msra.mxu0 %v2506
      %2543 = vmatpush.bf16.msra.mxu0 %v2505
      %2544 = vmatpush.bf16.msra.mxu0 %v2504
      %2545 = vmatpush.bf16.msra.mxu0 %v2503
      %2546 = vmatpush.bf16.msra.mxu0 %v2502
      %2547 = vmatmul.bf16.gmra.mxu0 %v540
      %v2548 = vpop.f32.mrf.mxu0
      %v2549 = vadd.f32 %v2536, %v2548
      %v2550 = vpop.f32.mrf.mxu0
      %2551 = vdwg.mxu0
      %s2552 = scalar_lea.vmem %s3, 80
      %v2553 = vld [vmem:[%s2552] sm:$0xf]
      %v2554 = vld [vmem:[%s2552 + $0x4] sm:$0xf]
      %v2555 = vpack.c.bf16 %v2549, %v2549
      %v2558 = vunpack.c.l.b16 %v2553
      %v2559 = vunpack.c.l.b16 %v2554
      %v2560 = vpack.c.b16 %v2559, %v2558
      %v2562 = vsel %vm862, %v2560, 0
      %v2565 = vsel %vm866, %v2555, 0
      %2567 = vmatpush.bf16.msra.mxu0 0
      %2568 = vmatpush.bf16.msra.mxu0 0
      %2569 = vmatpush.bf16.msra.mxu0 0
      %2570 = vmatpush.bf16.msra.mxu0 0
      %2571 = vmatpush.bf16.msra.mxu0 0
      %2572 = vmatpush.bf16.msra.mxu0 0
      %2573 = vmatpush.bf16.msra.mxu0 0
      %2574 = vmatpush.bf16.msra.mxu0 %v2565
      %2575 = vmatmul.bf16.gmra.mxu0 %v2562
      %v2576 = vpop.f32.mrf.mxu0
      %v2577 = vadd.f32 0.0, %v2576
      %v2578 = vpop.f32.mrf.mxu0
      %v2579 = vadd.f32 0.0, %v2578
      %2580 = vdwg.mxu0
      %v2581 = vadd.f32 %v2395, %v2577
      %v2582 = vadd.f32 %v2396, %v2579
      %s2583 = scalar_lea.vmem %s2, 1408
      %v2584 = vld [vmem:[%s2583] sm:$0xf]
      %v2585 = vld [vmem:[%s2583 + $0x4] sm:$0xf]
      %v2586 = vld [vmem:[%s2583 + $0x8] sm:$0xf]
      %v2587 = vld [vmem:[%s2583 + $0xc] sm:$0xf]
      %v2588 = vld [vmem:[%s2583 + $0x10] sm:$0xf]
      %v2589 = vld [vmem:[%s2583 + $0x14] sm:$0xf]
      %v2590 = vld [vmem:[%s2583 + $0x18] sm:$0xf]
      %v2591 = vld [vmem:[%s2583 + $0x1c] sm:$0xf]
      %v2592 = vld [vmem:[%s2583 + $0x20] sm:$0xf]
      %v2593 = vld [vmem:[%s2583 + $0x24] sm:$0xf]
      %v2594 = vld [vmem:[%s2583 + $0x28] sm:$0xf]
      %v2595 = vld [vmem:[%s2583 + $0x2c] sm:$0xf]
      %v2596 = vld [vmem:[%s2583 + $0x30] sm:$0xf]
      %v2597 = vld [vmem:[%s2583 + $0x34] sm:$0xf]
      %v2598 = vld [vmem:[%s2583 + $0x38] sm:$0xf]
      %v2599 = vld [vmem:[%s2583 + $0x3c] sm:$0xf]
      %v2600 = vld [vmem:[%s2583 + $0x40] sm:$0xf]
      %v2601 = vld [vmem:[%s2583 + $0x44] sm:$0xf]
      %v2602 = vld [vmem:[%s2583 + $0x48] sm:$0xf]
      %v2603 = vld [vmem:[%s2583 + $0x4c] sm:$0xf]
      %v2604 = vld [vmem:[%s2583 + $0x50] sm:$0xf]
      %v2605 = vld [vmem:[%s2583 + $0x54] sm:$0xf]
      %v2606 = vld [vmem:[%s2583 + $0x58] sm:$0xf]
      %v2607 = vld [vmem:[%s2583 + $0x5c] sm:$0xf]
      %v2608 = vld [vmem:[%s2583 + $0x60] sm:$0xf]
      %v2609 = vld [vmem:[%s2583 + $0x64] sm:$0xf]
      %v2610 = vld [vmem:[%s2583 + $0x68] sm:$0xf]
      %v2611 = vld [vmem:[%s2583 + $0x6c] sm:$0xf]
      %v2612 = vld [vmem:[%s2583 + $0x70] sm:$0xf]
      %v2613 = vld [vmem:[%s2583 + $0x74] sm:$0xf]
      %v2614 = vld [vmem:[%s2583 + $0x78] sm:$0xf]
      %v2615 = vld [vmem:[%s2583 + $0x7c] sm:$0xf]
      %v2648 = vunpack.c.l.b16 %v2584
      %v2649 = vunpack.c.l.b16 %v2585
      %v2650 = vunpack.c.l.b16 %v2586
      %v2651 = vunpack.c.l.b16 %v2587
      %v2652 = vunpack.c.l.b16 %v2588
      %v2653 = vunpack.c.l.b16 %v2589
      %v2654 = vunpack.c.l.b16 %v2590
      %v2655 = vunpack.c.l.b16 %v2591
      %v2656 = vunpack.c.l.b16 %v2592
      %v2657 = vunpack.c.l.b16 %v2593
      %v2658 = vunpack.c.l.b16 %v2594
      %v2659 = vunpack.c.l.b16 %v2595
      %v2660 = vunpack.c.l.b16 %v2596
      %v2661 = vunpack.c.l.b16 %v2597
      %v2662 = vunpack.c.l.b16 %v2598
      %v2663 = vunpack.c.l.b16 %v2599
      %v2664 = vunpack.c.l.b16 %v2600
      %v2665 = vunpack.c.l.b16 %v2601
      %v2666 = vunpack.c.l.b16 %v2602
      %v2667 = vunpack.c.l.b16 %v2603
      %v2668 = vunpack.c.l.b16 %v2604
      %v2669 = vunpack.c.l.b16 %v2605
      %v2670 = vunpack.c.l.b16 %v2606
      %v2671 = vunpack.c.l.b16 %v2607
      %v2672 = vunpack.c.l.b16 %v2608
      %v2673 = vunpack.c.l.b16 %v2609
      %v2674 = vunpack.c.l.b16 %v2610
      %v2675 = vunpack.c.l.b16 %v2611
      %v2676 = vunpack.c.l.b16 %v2612
      %v2677 = vunpack.c.l.b16 %v2613
      %v2678 = vunpack.c.l.b16 %v2614
      %v2679 = vunpack.c.l.b16 %v2615
      %v2680 = vpack.c.b16 %v2649, %v2648
      %v2681 = vpack.c.b16 %v2651, %v2650
      %v2682 = vpack.c.b16 %v2653, %v2652
      %v2683 = vpack.c.b16 %v2655, %v2654
      %v2684 = vpack.c.b16 %v2657, %v2656
      %v2685 = vpack.c.b16 %v2659, %v2658
      %v2686 = vpack.c.b16 %v2661, %v2660
      %v2687 = vpack.c.b16 %v2663, %v2662
      %v2688 = vpack.c.b16 %v2665, %v2664
      %v2689 = vpack.c.b16 %v2667, %v2666
      %v2690 = vpack.c.b16 %v2669, %v2668
      %v2691 = vpack.c.b16 %v2671, %v2670
      %v2692 = vpack.c.b16 %v2673, %v2672
      %v2693 = vpack.c.b16 %v2675, %v2674
      %v2694 = vpack.c.b16 %v2677, %v2676
      %v2695 = vpack.c.b16 %v2679, %v2678
      %2712 = vmatpush.bf16.msra.mxu0 %v2687
      %2713 = vmatpush.bf16.msra.mxu0 %v2686
      %2714 = vmatpush.bf16.msra.mxu0 %v2685
      %2715 = vmatpush.bf16.msra.mxu0 %v2684
      %2716 = vmatpush.bf16.msra.mxu0 %v2683
      %2717 = vmatpush.bf16.msra.mxu0 %v2682
      %2718 = vmatpush.bf16.msra.mxu0 %v2681
      %2719 = vmatpush.bf16.msra.mxu0 %v2680
      %2720 = vmatmul.bf16.gmra.mxu0 %v539
      %v2721 = vpop.f32.mrf.mxu0
      %v2722 = vadd.f32 0.0, %v2721
      %v2723 = vpop.f32.mrf.mxu0
      %2724 = vdwg.mxu0
      %2725 = vmatpush.bf16.msra.mxu0 %v2695
      %2726 = vmatpush.bf16.msra.mxu0 %v2694
      %2727 = vmatpush.bf16.msra.mxu0 %v2693
      %2728 = vmatpush.bf16.msra.mxu0 %v2692
      %2729 = vmatpush.bf16.msra.mxu0 %v2691
      %2730 = vmatpush.bf16.msra.mxu0 %v2690
      %2731 = vmatpush.bf16.msra.mxu0 %v2689
      %2732 = vmatpush.bf16.msra.mxu0 %v2688
      %2733 = vmatmul.bf16.gmra.mxu0 %v540
      %v2734 = vpop.f32.mrf.mxu0
      %v2735 = vadd.f32 %v2722, %v2734
      %v2736 = vpop.f32.mrf.mxu0
      %2737 = vdwg.mxu0
      %s2738 = scalar_lea.vmem %s3, 88
      %v2739 = vld [vmem:[%s2738] sm:$0xf]
      %v2740 = vld [vmem:[%s2738 + $0x4] sm:$0xf]
      %v2741 = vpack.c.bf16 %v2735, %v2735
      %v2744 = vunpack.c.l.b16 %v2739
      %v2745 = vunpack.c.l.b16 %v2740
      %v2746 = vpack.c.b16 %v2745, %v2744
      %v2748 = vsel %vm862, %v2746, 0
      %v2751 = vsel %vm866, %v2741, 0
      %2753 = vmatpush.bf16.msra.mxu0 0
      %2754 = vmatpush.bf16.msra.mxu0 0
      %2755 = vmatpush.bf16.msra.mxu0 0
      %2756 = vmatpush.bf16.msra.mxu0 0
      %2757 = vmatpush.bf16.msra.mxu0 0
      %2758 = vmatpush.bf16.msra.mxu0 0
      %2759 = vmatpush.bf16.msra.mxu0 0
      %2760 = vmatpush.bf16.msra.mxu0 %v2751
      %2761 = vmatmul.bf16.gmra.mxu0 %v2748
      %v2762 = vpop.f32.mrf.mxu0
      %v2763 = vadd.f32 0.0, %v2762
      %v2764 = vpop.f32.mrf.mxu0
      %v2765 = vadd.f32 0.0, %v2764
      %2766 = vdwg.mxu0
      %v2767 = vadd.f32 %v2581, %v2763
      %v2768 = vadd.f32 %v2582, %v2765
      %s2769 = scalar_lea.vmem %s2, 1536
      %v2770 = vld [vmem:[%s2769] sm:$0xf]
      %v2771 = vld [vmem:[%s2769 + $0x4] sm:$0xf]
      %v2772 = vld [vmem:[%s2769 + $0x8] sm:$0xf]
      %v2773 = vld [vmem:[%s2769 + $0xc] sm:$0xf]
      %v2774 = vld [vmem:[%s2769 + $0x10] sm:$0xf]
      %v2775 = vld [vmem:[%s2769 + $0x14] sm:$0xf]
      %v2776 = vld [vmem:[%s2769 + $0x18] sm:$0xf]
      %v2777 = vld [vmem:[%s2769 + $0x1c] sm:$0xf]
      %v2778 = vld [vmem:[%s2769 + $0x20] sm:$0xf]
      %v2779 = vld [vmem:[%s2769 + $0x24] sm:$0xf]
      %v2780 = vld [vmem:[%s2769 + $0x28] sm:$0xf]
      %v2781 = vld [vmem:[%s2769 + $0x2c] sm:$0xf]
      %v2782 = vld [vmem:[%s2769 + $0x30] sm:$0xf]
      %v2783 = vld [vmem:[%s2769 + $0x34] sm:$0xf]
      %v2784 = vld [vmem:[%s2769 + $0x38] sm:$0xf]
      %v2785 = vld [vmem:[%s2769 + $0x3c] sm:$0xf]
      %v2786 = vld [vmem:[%s2769 + $0x40] sm:$0xf]
      %v2787 = vld [vmem:[%s2769 + $0x44] sm:$0xf]
      %v2788 = vld [vmem:[%s2769 + $0x48] sm:$0xf]
      %v2789 = vld [vmem:[%s2769 + $0x4c] sm:$0xf]
      %v2790 = vld [vmem:[%s2769 + $0x50] sm:$0xf]
      %v2791 = vld [vmem:[%s2769 + $0x54] sm:$0xf]
      %v2792 = vld [vmem:[%s2769 + $0x58] sm:$0xf]
      %v2793 = vld [vmem:[%s2769 + $0x5c] sm:$0xf]
      %v2794 = vld [vmem:[%s2769 + $0x60] sm:$0xf]
      %v2795 = vld [vmem:[%s2769 + $0x64] sm:$0xf]
      %v2796 = vld [vmem:[%s2769 + $0x68] sm:$0xf]
      %v2797 = vld [vmem:[%s2769 + $0x6c] sm:$0xf]
      %v2798 = vld [vmem:[%s2769 + $0x70] sm:$0xf]
      %v2799 = vld [vmem:[%s2769 + $0x74] sm:$0xf]
      %v2800 = vld [vmem:[%s2769 + $0x78] sm:$0xf]
      %v2801 = vld [vmem:[%s2769 + $0x7c] sm:$0xf]
      %v2834 = vunpack.c.l.b16 %v2770
      %v2835 = vunpack.c.l.b16 %v2771
      %v2836 = vunpack.c.l.b16 %v2772
      %v2837 = vunpack.c.l.b16 %v2773
      %v2838 = vunpack.c.l.b16 %v2774
      %v2839 = vunpack.c.l.b16 %v2775
      %v2840 = vunpack.c.l.b16 %v2776
      %v2841 = vunpack.c.l.b16 %v2777
      %v2842 = vunpack.c.l.b16 %v2778
      %v2843 = vunpack.c.l.b16 %v2779
      %v2844 = vunpack.c.l.b16 %v2780
      %v2845 = vunpack.c.l.b16 %v2781
      %v2846 = vunpack.c.l.b16 %v2782
      %v2847 = vunpack.c.l.b16 %v2783
      %v2848 = vunpack.c.l.b16 %v2784
      %v2849 = vunpack.c.l.b16 %v2785
      %v2850 = vunpack.c.l.b16 %v2786
      %v2851 = vunpack.c.l.b16 %v2787
      %v2852 = vunpack.c.l.b16 %v2788
      %v2853 = vunpack.c.l.b16 %v2789
      %v2854 = vunpack.c.l.b16 %v2790
      %v2855 = vunpack.c.l.b16 %v2791
      %v2856 = vunpack.c.l.b16 %v2792
      %v2857 = vunpack.c.l.b16 %v2793
      %v2858 = vunpack.c.l.b16 %v2794
      %v2859 = vunpack.c.l.b16 %v2795
      %v2860 = vunpack.c.l.b16 %v2796
      %v2861 = vunpack.c.l.b16 %v2797
      %v2862 = vunpack.c.l.b16 %v2798
      %v2863 = vunpack.c.l.b16 %v2799
      %v2864 = vunpack.c.l.b16 %v2800
      %v2865 = vunpack.c.l.b16 %v2801
      %v2866 = vpack.c.b16 %v2835, %v2834
      %v2867 = vpack.c.b16 %v2837, %v2836
      %v2868 = vpack.c.b16 %v2839, %v2838
      %v2869 = vpack.c.b16 %v2841, %v2840
      %v2870 = vpack.c.b16 %v2843, %v2842
      %v2871 = vpack.c.b16 %v2845, %v2844
      %v2872 = vpack.c.b16 %v2847, %v2846
      %v2873 = vpack.c.b16 %v2849, %v2848
      %v2874 = vpack.c.b16 %v2851, %v2850
      %v2875 = vpack.c.b16 %v2853, %v2852
      %v2876 = vpack.c.b16 %v2855, %v2854
      %v2877 = vpack.c.b16 %v2857, %v2856
      %v2878 = vpack.c.b16 %v2859, %v2858
      %v2879 = vpack.c.b16 %v2861, %v2860
      %v2880 = vpack.c.b16 %v2863, %v2862
      %v2881 = vpack.c.b16 %v2865, %v2864
      %2898 = vmatpush.bf16.msra.mxu0 %v2873
      %2899 = vmatpush.bf16.msra.mxu0 %v2872
      %2900 = vmatpush.bf16.msra.mxu0 %v2871
      %2901 = vmatpush.bf16.msra.mxu0 %v2870
      %2902 = vmatpush.bf16.msra.mxu0 %v2869
      %2903 = vmatpush.bf16.msra.mxu0 %v2868
      %2904 = vmatpush.bf16.msra.mxu0 %v2867
      %2905 = vmatpush.bf16.msra.mxu0 %v2866
      %2906 = vmatmul.bf16.gmra.mxu0 %v539
      %v2907 = vpop.f32.mrf.mxu0
      %v2908 = vadd.f32 0.0, %v2907
      %v2909 = vpop.f32.mrf.mxu0
      %2910 = vdwg.mxu0
      %2911 = vmatpush.bf16.msra.mxu0 %v2881
      %2912 = vmatpush.bf16.msra.mxu0 %v2880
      %2913 = vmatpush.bf16.msra.mxu0 %v2879
      %2914 = vmatpush.bf16.msra.mxu0 %v2878
      %2915 = vmatpush.bf16.msra.mxu0 %v2877
      %2916 = vmatpush.bf16.msra.mxu0 %v2876
      %2917 = vmatpush.bf16.msra.mxu0 %v2875
      %2918 = vmatpush.bf16.msra.mxu0 %v2874
      %2919 = vmatmul.bf16.gmra.mxu0 %v540
      %v2920 = vpop.f32.mrf.mxu0
      %v2921 = vadd.f32 %v2908, %v2920
      %v2922 = vpop.f32.mrf.mxu0
      %2923 = vdwg.mxu0
      %s2924 = scalar_lea.vmem %s3, 96
      %v2925 = vld [vmem:[%s2924] sm:$0xf]
      %v2926 = vld [vmem:[%s2924 + $0x4] sm:$0xf]
      %v2927 = vpack.c.bf16 %v2921, %v2921
      %v2930 = vunpack.c.l.b16 %v2925
      %v2931 = vunpack.c.l.b16 %v2926
      %v2932 = vpack.c.b16 %v2931, %v2930
      %v2934 = vsel %vm862, %v2932, 0
      %v2937 = vsel %vm866, %v2927, 0
      %2939 = vmatpush.bf16.msra.mxu0 0
      %2940 = vmatpush.bf16.msra.mxu0 0
      %2941 = vmatpush.bf16.msra.mxu0 0
      %2942 = vmatpush.bf16.msra.mxu0 0
      %2943 = vmatpush.bf16.msra.mxu0 0
      %2944 = vmatpush.bf16.msra.mxu0 0
      %2945 = vmatpush.bf16.msra.mxu0 0
      %2946 = vmatpush.bf16.msra.mxu0 %v2937
      %2947 = vmatmul.bf16.gmra.mxu0 %v2934
      %v2948 = vpop.f32.mrf.mxu0
      %v2949 = vadd.f32 0.0, %v2948
      %v2950 = vpop.f32.mrf.mxu0
      %v2951 = vadd.f32 0.0, %v2950
      %2952 = vdwg.mxu0
      %v2953 = vadd.f32 %v2767, %v2949
      %v2954 = vadd.f32 %v2768, %v2951
      %s2955 = scalar_lea.vmem %s2, 1664
      %v2956 = vld [vmem:[%s2955] sm:$0xf]
      %v2957 = vld [vmem:[%s2955 + $0x4] sm:$0xf]
      %v2958 = vld [vmem:[%s2955 + $0x8] sm:$0xf]
      %v2959 = vld [vmem:[%s2955 + $0xc] sm:$0xf]
      %v2960 = vld [vmem:[%s2955 + $0x10] sm:$0xf]
      %v2961 = vld [vmem:[%s2955 + $0x14] sm:$0xf]
      %v2962 = vld [vmem:[%s2955 + $0x18] sm:$0xf]
      %v2963 = vld [vmem:[%s2955 + $0x1c] sm:$0xf]
      %v2964 = vld [vmem:[%s2955 + $0x20] sm:$0xf]
      %v2965 = vld [vmem:[%s2955 + $0x24] sm:$0xf]
      %v2966 = vld [vmem:[%s2955 + $0x28] sm:$0xf]
      %v2967 = vld [vmem:[%s2955 + $0x2c] sm:$0xf]
      %v2968 = vld [vmem:[%s2955 + $0x30] sm:$0xf]
      %v2969 = vld [vmem:[%s2955 + $0x34] sm:$0xf]
      %v2970 = vld [vmem:[%s2955 + $0x38] sm:$0xf]
      %v2971 = vld [vmem:[%s2955 + $0x3c] sm:$0xf]
      %v2972 = vld [vmem:[%s2955 + $0x40] sm:$0xf]
      %v2973 = vld [vmem:[%s2955 + $0x44] sm:$0xf]
      %v2974 = vld [vmem:[%s2955 + $0x48] sm:$0xf]
      %v2975 = vld [vmem:[%s2955 + $0x4c] sm:$0xf]
      %v2976 = vld [vmem:[%s2955 + $0x50] sm:$0xf]
      %v2977 = vld [vmem:[%s2955 + $0x54] sm:$0xf]
      %v2978 = vld [vmem:[%s2955 + $0x58] sm:$0xf]
      %v2979 = vld [vmem:[%s2955 + $0x5c] sm:$0xf]
      %v2980 = vld [vmem:[%s2955 + $0x60] sm:$0xf]
      %v2981 = vld [vmem:[%s2955 + $0x64] sm:$0xf]
      %v2982 = vld [vmem:[%s2955 + $0x68] sm:$0xf]
      %v2983 = vld [vmem:[%s2955 + $0x6c] sm:$0xf]
      %v2984 = vld [vmem:[%s2955 + $0x70] sm:$0xf]
      %v2985 = vld [vmem:[%s2955 + $0x74] sm:$0xf]
      %v2986 = vld [vmem:[%s2955 + $0x78] sm:$0xf]
      %v2987 = vld [vmem:[%s2955 + $0x7c] sm:$0xf]
      %v3020 = vunpack.c.l.b16 %v2956
      %v3021 = vunpack.c.l.b16 %v2957
      %v3022 = vunpack.c.l.b16 %v2958
      %v3023 = vunpack.c.l.b16 %v2959
      %v3024 = vunpack.c.l.b16 %v2960
      %v3025 = vunpack.c.l.b16 %v2961
      %v3026 = vunpack.c.l.b16 %v2962
      %v3027 = vunpack.c.l.b16 %v2963
      %v3028 = vunpack.c.l.b16 %v2964
      %v3029 = vunpack.c.l.b16 %v2965
      %v3030 = vunpack.c.l.b16 %v2966
      %v3031 = vunpack.c.l.b16 %v2967
      %v3032 = vunpack.c.l.b16 %v2968
      %v3033 = vunpack.c.l.b16 %v2969
      %v3034 = vunpack.c.l.b16 %v2970
      %v3035 = vunpack.c.l.b16 %v2971
      %v3036 = vunpack.c.l.b16 %v2972
      %v3037 = vunpack.c.l.b16 %v2973
      %v3038 = vunpack.c.l.b16 %v2974
      %v3039 = vunpack.c.l.b16 %v2975
      %v3040 = vunpack.c.l.b16 %v2976
      %v3041 = vunpack.c.l.b16 %v2977
      %v3042 = vunpack.c.l.b16 %v2978
      %v3043 = vunpack.c.l.b16 %v2979
      %v3044 = vunpack.c.l.b16 %v2980
      %v3045 = vunpack.c.l.b16 %v2981
      %v3046 = vunpack.c.l.b16 %v2982
      %v3047 = vunpack.c.l.b16 %v2983
      %v3048 = vunpack.c.l.b16 %v2984
      %v3049 = vunpack.c.l.b16 %v2985
      %v3050 = vunpack.c.l.b16 %v2986
      %v3051 = vunpack.c.l.b16 %v2987
      %v3052 = vpack.c.b16 %v3021, %v3020
      %v3053 = vpack.c.b16 %v3023, %v3022
      %v3054 = vpack.c.b16 %v3025, %v3024
      %v3055 = vpack.c.b16 %v3027, %v3026
      %v3056 = vpack.c.b16 %v3029, %v3028
      %v3057 = vpack.c.b16 %v3031, %v3030
      %v3058 = vpack.c.b16 %v3033, %v3032
      %v3059 = vpack.c.b16 %v3035, %v3034
      %v3060 = vpack.c.b16 %v3037, %v3036
      %v3061 = vpack.c.b16 %v3039, %v3038
      %v3062 = vpack.c.b16 %v3041, %v3040
      %v3063 = vpack.c.b16 %v3043, %v3042
      %v3064 = vpack.c.b16 %v3045, %v3044
      %v3065 = vpack.c.b16 %v3047, %v3046
      %v3066 = vpack.c.b16 %v3049, %v3048
      %v3067 = vpack.c.b16 %v3051, %v3050
      %3084 = vmatpush.bf16.msra.mxu0 %v3059
      %3085 = vmatpush.bf16.msra.mxu0 %v3058
      %3086 = vmatpush.bf16.msra.mxu0 %v3057
      %3087 = vmatpush.bf16.msra.mxu0 %v3056
      %3088 = vmatpush.bf16.msra.mxu0 %v3055
      %3089 = vmatpush.bf16.msra.mxu0 %v3054
      %3090 = vmatpush.bf16.msra.mxu0 %v3053
      %3091 = vmatpush.bf16.msra.mxu0 %v3052
      %3092 = vmatmul.bf16.gmra.mxu0 %v539
      %v3093 = vpop.f32.mrf.mxu0
      %v3094 = vadd.f32 0.0, %v3093
      %v3095 = vpop.f32.mrf.mxu0
      %3096 = vdwg.mxu0
      %3097 = vmatpush.bf16.msra.mxu0 %v3067
      %3098 = vmatpush.bf16.msra.mxu0 %v3066
      %3099 = vmatpush.bf16.msra.mxu0 %v3065
      %3100 = vmatpush.bf16.msra.mxu0 %v3064
      %3101 = vmatpush.bf16.msra.mxu0 %v3063
      %3102 = vmatpush.bf16.msra.mxu0 %v3062
      %3103 = vmatpush.bf16.msra.mxu0 %v3061
      %3104 = vmatpush.bf16.msra.mxu0 %v3060
      %3105 = vmatmul.bf16.gmra.mxu0 %v540
      %v3106 = vpop.f32.mrf.mxu0
      %v3107 = vadd.f32 %v3094, %v3106
      %v3108 = vpop.f32.mrf.mxu0
      %3109 = vdwg.mxu0
      %s3110 = scalar_lea.vmem %s3, 104
      %v3111 = vld [vmem:[%s3110] sm:$0xf]
      %v3112 = vld [vmem:[%s3110 + $0x4] sm:$0xf]
      %v3113 = vpack.c.bf16 %v3107, %v3107
      %v3116 = vunpack.c.l.b16 %v3111
      %v3117 = vunpack.c.l.b16 %v3112
      %v3118 = vpack.c.b16 %v3117, %v3116
      %v3120 = vsel %vm862, %v3118, 0
      %v3123 = vsel %vm866, %v3113, 0
      %3125 = vmatpush.bf16.msra.mxu0 0
      %3126 = vmatpush.bf16.msra.mxu0 0
      %3127 = vmatpush.bf16.msra.mxu0 0
      %3128 = vmatpush.bf16.msra.mxu0 0
      %3129 = vmatpush.bf16.msra.mxu0 0
      %3130 = vmatpush.bf16.msra.mxu0 0
      %3131 = vmatpush.bf16.msra.mxu0 0
      %3132 = vmatpush.bf16.msra.mxu0 %v3123
      %3133 = vmatmul.bf16.gmra.mxu0 %v3120
      %v3134 = vpop.f32.mrf.mxu0
      %v3135 = vadd.f32 0.0, %v3134
      %v3136 = vpop.f32.mrf.mxu0
      %v3137 = vadd.f32 0.0, %v3136
      %3138 = vdwg.mxu0
      %v3139 = vadd.f32 %v2953, %v3135
      %v3140 = vadd.f32 %v2954, %v3137
      %s3141 = scalar_lea.vmem %s2, 1792
      %v3142 = vld [vmem:[%s3141] sm:$0xf]
      %v3143 = vld [vmem:[%s3141 + $0x4] sm:$0xf]
      %v3144 = vld [vmem:[%s3141 + $0x8] sm:$0xf]
      %v3145 = vld [vmem:[%s3141 + $0xc] sm:$0xf]
      %v3146 = vld [vmem:[%s3141 + $0x10] sm:$0xf]
      %v3147 = vld [vmem:[%s3141 + $0x14] sm:$0xf]
      %v3148 = vld [vmem:[%s3141 + $0x18] sm:$0xf]
      %v3149 = vld [vmem:[%s3141 + $0x1c] sm:$0xf]
      %v3150 = vld [vmem:[%s3141 + $0x20] sm:$0xf]
      %v3151 = vld [vmem:[%s3141 + $0x24] sm:$0xf]
      %v3152 = vld [vmem:[%s3141 + $0x28] sm:$0xf]
      %v3153 = vld [vmem:[%s3141 + $0x2c] sm:$0xf]
      %v3154 = vld [vmem:[%s3141 + $0x30] sm:$0xf]
      %v3155 = vld [vmem:[%s3141 + $0x34] sm:$0xf]
      %v3156 = vld [vmem:[%s3141 + $0x38] sm:$0xf]
      %v3157 = vld [vmem:[%s3141 + $0x3c] sm:$0xf]
      %v3158 = vld [vmem:[%s3141 + $0x40] sm:$0xf]
      %v3159 = vld [vmem:[%s3141 + $0x44] sm:$0xf]
      %v3160 = vld [vmem:[%s3141 + $0x48] sm:$0xf]
      %v3161 = vld [vmem:[%s3141 + $0x4c] sm:$0xf]
      %v3162 = vld [vmem:[%s3141 + $0x50] sm:$0xf]
      %v3163 = vld [vmem:[%s3141 + $0x54] sm:$0xf]
      %v3164 = vld [vmem:[%s3141 + $0x58] sm:$0xf]
      %v3165 = vld [vmem:[%s3141 + $0x5c] sm:$0xf]
      %v3166 = vld [vmem:[%s3141 + $0x60] sm:$0xf]
      %v3167 = vld [vmem:[%s3141 + $0x64] sm:$0xf]
      %v3168 = vld [vmem:[%s3141 + $0x68] sm:$0xf]
      %v3169 = vld [vmem:[%s3141 + $0x6c] sm:$0xf]
      %v3170 = vld [vmem:[%s3141 + $0x70] sm:$0xf]
      %v3171 = vld [vmem:[%s3141 + $0x74] sm:$0xf]
      %v3172 = vld [vmem:[%s3141 + $0x78] sm:$0xf]
      %v3173 = vld [vmem:[%s3141 + $0x7c] sm:$0xf]
      %v3206 = vunpack.c.l.b16 %v3142
      %v3207 = vunpack.c.l.b16 %v3143
      %v3208 = vunpack.c.l.b16 %v3144
      %v3209 = vunpack.c.l.b16 %v3145
      %v3210 = vunpack.c.l.b16 %v3146
      %v3211 = vunpack.c.l.b16 %v3147
      %v3212 = vunpack.c.l.b16 %v3148
      %v3213 = vunpack.c.l.b16 %v3149
      %v3214 = vunpack.c.l.b16 %v3150
      %v3215 = vunpack.c.l.b16 %v3151
      %v3216 = vunpack.c.l.b16 %v3152
      %v3217 = vunpack.c.l.b16 %v3153
      %v3218 = vunpack.c.l.b16 %v3154
      %v3219 = vunpack.c.l.b16 %v3155
      %v3220 = vunpack.c.l.b16 %v3156
      %v3221 = vunpack.c.l.b16 %v3157
      %v3222 = vunpack.c.l.b16 %v3158
      %v3223 = vunpack.c.l.b16 %v3159
      %v3224 = vunpack.c.l.b16 %v3160
      %v3225 = vunpack.c.l.b16 %v3161
      %v3226 = vunpack.c.l.b16 %v3162
      %v3227 = vunpack.c.l.b16 %v3163
      %v3228 = vunpack.c.l.b16 %v3164
      %v3229 = vunpack.c.l.b16 %v3165
      %v3230 = vunpack.c.l.b16 %v3166
      %v3231 = vunpack.c.l.b16 %v3167
      %v3232 = vunpack.c.l.b16 %v3168
      %v3233 = vunpack.c.l.b16 %v3169
      %v3234 = vunpack.c.l.b16 %v3170
      %v3235 = vunpack.c.l.b16 %v3171
      %v3236 = vunpack.c.l.b16 %v3172
      %v3237 = vunpack.c.l.b16 %v3173
      %v3238 = vpack.c.b16 %v3207, %v3206
      %v3239 = vpack.c.b16 %v3209, %v3208
      %v3240 = vpack.c.b16 %v3211, %v3210
      %v3241 = vpack.c.b16 %v3213, %v3212
      %v3242 = vpack.c.b16 %v3215, %v3214
      %v3243 = vpack.c.b16 %v3217, %v3216
      %v3244 = vpack.c.b16 %v3219, %v3218
      %v3245 = vpack.c.b16 %v3221, %v3220
      %v3246 = vpack.c.b16 %v3223, %v3222
      %v3247 = vpack.c.b16 %v3225, %v3224
      %v3248 = vpack.c.b16 %v3227, %v3226
      %v3249 = vpack.c.b16 %v3229, %v3228
      %v3250 = vpack.c.b16 %v3231, %v3230
      %v3251 = vpack.c.b16 %v3233, %v3232
      %v3252 = vpack.c.b16 %v3235, %v3234
      %v3253 = vpack.c.b16 %v3237, %v3236
      %3270 = vmatpush.bf16.msra.mxu0 %v3245
      %3271 = vmatpush.bf16.msra.mxu0 %v3244
      %3272 = vmatpush.bf16.msra.mxu0 %v3243
      %3273 = vmatpush.bf16.msra.mxu0 %v3242
      %3274 = vmatpush.bf16.msra.mxu0 %v3241
      %3275 = vmatpush.bf16.msra.mxu0 %v3240
      %3276 = vmatpush.bf16.msra.mxu0 %v3239
      %3277 = vmatpush.bf16.msra.mxu0 %v3238
      %3278 = vmatmul.bf16.gmra.mxu0 %v539
      %v3279 = vpop.f32.mrf.mxu0
      %v3280 = vadd.f32 0.0, %v3279
      %v3281 = vpop.f32.mrf.mxu0
      %3282 = vdwg.mxu0
      %3283 = vmatpush.bf16.msra.mxu0 %v3253
      %3284 = vmatpush.bf16.msra.mxu0 %v3252
      %3285 = vmatpush.bf16.msra.mxu0 %v3251
      %3286 = vmatpush.bf16.msra.mxu0 %v3250
      %3287 = vmatpush.bf16.msra.mxu0 %v3249
      %3288 = vmatpush.bf16.msra.mxu0 %v3248
      %3289 = vmatpush.bf16.msra.mxu0 %v3247
      %3290 = vmatpush.bf16.msra.mxu0 %v3246
      %3291 = vmatmul.bf16.gmra.mxu0 %v540
      %v3292 = vpop.f32.mrf.mxu0
      %v3293 = vadd.f32 %v3280, %v3292
      %v3294 = vpop.f32.mrf.mxu0
      %3295 = vdwg.mxu0
      %s3296 = scalar_lea.vmem %s3, 112
      %v3297 = vld [vmem:[%s3296] sm:$0xf]
      %v3298 = vld [vmem:[%s3296 + $0x4] sm:$0xf]
      %v3299 = vpack.c.bf16 %v3293, %v3293
      %v3302 = vunpack.c.l.b16 %v3297
      %v3303 = vunpack.c.l.b16 %v3298
      %v3304 = vpack.c.b16 %v3303, %v3302
      %v3306 = vsel %vm862, %v3304, 0
      %v3309 = vsel %vm866, %v3299, 0
      %3311 = vmatpush.bf16.msra.mxu0 0
      %3312 = vmatpush.bf16.msra.mxu0 0
      %3313 = vmatpush.bf16.msra.mxu0 0
      %3314 = vmatpush.bf16.msra.mxu0 0
      %3315 = vmatpush.bf16.msra.mxu0 0
      %3316 = vmatpush.bf16.msra.mxu0 0
      %3317 = vmatpush.bf16.msra.mxu0 0
      %3318 = vmatpush.bf16.msra.mxu0 %v3309
      %3319 = vmatmul.bf16.gmra.mxu0 %v3306
      %v3320 = vpop.f32.mrf.mxu0
      %v3321 = vadd.f32 0.0, %v3320
      %v3322 = vpop.f32.mrf.mxu0
      %v3323 = vadd.f32 0.0, %v3322
      %3324 = vdwg.mxu0
      %v3325 = vadd.f32 %v3139, %v3321
      %v3326 = vadd.f32 %v3140, %v3323
      %s3327 = scalar_lea.vmem %s2, 1920
      %v3328 = vld [vmem:[%s3327] sm:$0xf]
      %v3329 = vld [vmem:[%s3327 + $0x4] sm:$0xf]
      %v3330 = vld [vmem:[%s3327 + $0x8] sm:$0xf]
      %v3331 = vld [vmem:[%s3327 + $0xc] sm:$0xf]
      %v3332 = vld [vmem:[%s3327 + $0x10] sm:$0xf]
      %v3333 = vld [vmem:[%s3327 + $0x14] sm:$0xf]
      %v3334 = vld [vmem:[%s3327 + $0x18] sm:$0xf]
      %v3335 = vld [vmem:[%s3327 + $0x1c] sm:$0xf]
      %v3336 = vld [vmem:[%s3327 + $0x20] sm:$0xf]
      %v3337 = vld [vmem:[%s3327 + $0x24] sm:$0xf]
      %v3338 = vld [vmem:[%s3327 + $0x28] sm:$0xf]
      %v3339 = vld [vmem:[%s3327 + $0x2c] sm:$0xf]
      %v3340 = vld [vmem:[%s3327 + $0x30] sm:$0xf]
      %v3341 = vld [vmem:[%s3327 + $0x34] sm:$0xf]
      %v3342 = vld [vmem:[%s3327 + $0x38] sm:$0xf]
      %v3343 = vld [vmem:[%s3327 + $0x3c] sm:$0xf]
      %v3344 = vld [vmem:[%s3327 + $0x40] sm:$0xf]
      %v3345 = vld [vmem:[%s3327 + $0x44] sm:$0xf]
      %v3346 = vld [vmem:[%s3327 + $0x48] sm:$0xf]
      %v3347 = vld [vmem:[%s3327 + $0x4c] sm:$0xf]
      %v3348 = vld [vmem:[%s3327 + $0x50] sm:$0xf]
      %v3349 = vld [vmem:[%s3327 + $0x54] sm:$0xf]
      %v3350 = vld [vmem:[%s3327 + $0x58] sm:$0xf]
      %v3351 = vld [vmem:[%s3327 + $0x5c] sm:$0xf]
      %v3352 = vld [vmem:[%s3327 + $0x60] sm:$0xf]
      %v3353 = vld [vmem:[%s3327 + $0x64] sm:$0xf]
      %v3354 = vld [vmem:[%s3327 + $0x68] sm:$0xf]
      %v3355 = vld [vmem:[%s3327 + $0x6c] sm:$0xf]
      %v3356 = vld [vmem:[%s3327 + $0x70] sm:$0xf]
      %v3357 = vld [vmem:[%s3327 + $0x74] sm:$0xf]
      %v3358 = vld [vmem:[%s3327 + $0x78] sm:$0xf]
      %v3359 = vld [vmem:[%s3327 + $0x7c] sm:$0xf]
      %v3392 = vunpack.c.l.b16 %v3328
      %v3393 = vunpack.c.l.b16 %v3329
      %v3394 = vunpack.c.l.b16 %v3330
      %v3395 = vunpack.c.l.b16 %v3331
      %v3396 = vunpack.c.l.b16 %v3332
      %v3397 = vunpack.c.l.b16 %v3333
      %v3398 = vunpack.c.l.b16 %v3334
      %v3399 = vunpack.c.l.b16 %v3335
      %v3400 = vunpack.c.l.b16 %v3336
      %v3401 = vunpack.c.l.b16 %v3337
      %v3402 = vunpack.c.l.b16 %v3338
      %v3403 = vunpack.c.l.b16 %v3339
      %v3404 = vunpack.c.l.b16 %v3340
      %v3405 = vunpack.c.l.b16 %v3341
      %v3406 = vunpack.c.l.b16 %v3342
      %v3407 = vunpack.c.l.b16 %v3343
      %v3408 = vunpack.c.l.b16 %v3344
      %v3409 = vunpack.c.l.b16 %v3345
      %v3410 = vunpack.c.l.b16 %v3346
      %v3411 = vunpack.c.l.b16 %v3347
      %v3412 = vunpack.c.l.b16 %v3348
      %v3413 = vunpack.c.l.b16 %v3349
      %v3414 = vunpack.c.l.b16 %v3350
      %v3415 = vunpack.c.l.b16 %v3351
      %v3416 = vunpack.c.l.b16 %v3352
      %v3417 = vunpack.c.l.b16 %v3353
      %v3418 = vunpack.c.l.b16 %v3354
      %v3419 = vunpack.c.l.b16 %v3355
      %v3420 = vunpack.c.l.b16 %v3356
      %v3421 = vunpack.c.l.b16 %v3357
      %v3422 = vunpack.c.l.b16 %v3358
      %v3423 = vunpack.c.l.b16 %v3359
      %v3424 = vpack.c.b16 %v3393, %v3392
      %v3425 = vpack.c.b16 %v3395, %v3394
      %v3426 = vpack.c.b16 %v3397, %v3396
      %v3427 = vpack.c.b16 %v3399, %v3398
      %v3428 = vpack.c.b16 %v3401, %v3400
      %v3429 = vpack.c.b16 %v3403, %v3402
      %v3430 = vpack.c.b16 %v3405, %v3404
      %v3431 = vpack.c.b16 %v3407, %v3406
      %v3432 = vpack.c.b16 %v3409, %v3408
      %v3433 = vpack.c.b16 %v3411, %v3410
      %v3434 = vpack.c.b16 %v3413, %v3412
      %v3435 = vpack.c.b16 %v3415, %v3414
      %v3436 = vpack.c.b16 %v3417, %v3416
      %v3437 = vpack.c.b16 %v3419, %v3418
      %v3438 = vpack.c.b16 %v3421, %v3420
      %v3439 = vpack.c.b16 %v3423, %v3422
      %3456 = vmatpush.bf16.msra.mxu0 %v3431
      %3457 = vmatpush.bf16.msra.mxu0 %v3430
      %3458 = vmatpush.bf16.msra.mxu0 %v3429
      %3459 = vmatpush.bf16.msra.mxu0 %v3428
      %3460 = vmatpush.bf16.msra.mxu0 %v3427
      %3461 = vmatpush.bf16.msra.mxu0 %v3426
      %3462 = vmatpush.bf16.msra.mxu0 %v3425
      %3463 = vmatpush.bf16.msra.mxu0 %v3424
      %3464 = vmatmul.bf16.gmra.mxu0 %v539
      %v3465 = vpop.f32.mrf.mxu0
      %v3466 = vadd.f32 0.0, %v3465
      %v3467 = vpop.f32.mrf.mxu0
      %3468 = vdwg.mxu0
      %3469 = vmatpush.bf16.msra.mxu0 %v3439
      %3470 = vmatpush.bf16.msra.mxu0 %v3438
      %3471 = vmatpush.bf16.msra.mxu0 %v3437
      %3472 = vmatpush.bf16.msra.mxu0 %v3436
      %3473 = vmatpush.bf16.msra.mxu0 %v3435
      %3474 = vmatpush.bf16.msra.mxu0 %v3434
      %3475 = vmatpush.bf16.msra.mxu0 %v3433
      %3476 = vmatpush.bf16.msra.mxu0 %v3432
      %3477 = vmatmul.bf16.gmra.mxu0 %v540
      %v3478 = vpop.f32.mrf.mxu0
      %v3479 = vadd.f32 %v3466, %v3478
      %v3480 = vpop.f32.mrf.mxu0
      %3481 = vdwg.mxu0
      %s3482 = scalar_lea.vmem %s3, 120
      %v3483 = vld [vmem:[%s3482] sm:$0xf]
      %v3484 = vld [vmem:[%s3482 + $0x4] sm:$0xf]
      %v3485 = vpack.c.bf16 %v3479, %v3479
      %v3488 = vunpack.c.l.b16 %v3483
      %v3489 = vunpack.c.l.b16 %v3484
      %v3490 = vpack.c.b16 %v3489, %v3488
      %v3492 = vsel %vm862, %v3490, 0
      %v3495 = vsel %vm866, %v3485, 0
      %3497 = vmatpush.bf16.msra.mxu0 0
      %3498 = vmatpush.bf16.msra.mxu0 0
      %3499 = vmatpush.bf16.msra.mxu0 0
      %3500 = vmatpush.bf16.msra.mxu0 0
      %3501 = vmatpush.bf16.msra.mxu0 0
      %3502 = vmatpush.bf16.msra.mxu0 0
      %3503 = vmatpush.bf16.msra.mxu0 0
      %3504 = vmatpush.bf16.msra.mxu0 %v3495
      %3505 = vmatmul.bf16.gmra.mxu0 %v3492
      %v3506 = vpop.f32.mrf.mxu0
      %v3507 = vadd.f32 0.0, %v3506
      %v3508 = vpop.f32.mrf.mxu0
      %v3509 = vadd.f32 0.0, %v3508
      %3510 = vdwg.mxu0
      %v3511 = vadd.f32 %v3325, %v3507
      %v3512 = vadd.f32 %v3326, %v3509
      %vm3513 = vcmask 523264
      %v3514 = vsel %vm3513, %v3511, 0.0
      %3515 = vadd.xlane.f32.xlu0 %v3514
      %v3516 = vpop.xlane.xlu0 %3515
      %v3517 = vsel %vm3513, %v3512, 0.0
      %3518 = vadd.xlane.f32.xlu0 %v3517
      %v3519 = vpop.xlane.xlu0 %3518
      %v3520 = vrcp.pop 64.0
      %v3521 = vmul.f32 64.0, %v3520
      %v3522 = vsub.f32 1.0, %v3521
      %v3523 = vmul.f32 %v3520, %v3522
      %v3524 = vadd.f32 %v3520, %v3523
      %vm3525 = vweird.f32 %v3520
      %v3526 = vsel %vm3525, %v3520, %v3524
      %v3527 = vmul.f32 %v3516, %v3526
      %v3528 = vmul.f32 %v3519, %v3526
      %v3529 = vsub.f32 %v3511, %v3527
      %v3530 = vsub.f32 %v3512, %v3528
      %v3531 = vmul.f32 %v3529, %v3529
      %v3532 = vmul.f32 %v3530, %v3530
      %v3533 = vsel %vm3513, %v3531, 0.0
      %3534 = vadd.xlane.f32.xlu0 %v3533
      %v3535 = vpop.xlane.xlu0 %3534
      %v3536 = vsel %vm3513, %v3532, 0.0
      %3537 = vadd.xlane.f32.xlu0 %v3536
      %v3538 = vpop.xlane.xlu0 %3537
      %v3539 = vmul.f32 %v3535, %v3526
      %v3540 = vmul.f32 %v3538, %v3526
      %v3541 = vadd.f32 %v3539, 1e-05
      %v3542 = vadd.f32 %v3540, 1e-05
      %v3543 = vrsqrt.pop %v3541
      %v3544 = vmul.f32 %v3543, %v3541
      %v3545 = vmul.f32 %v3544, %v3543
      %v3546 = vmul.f32 0.5, %v3545
      %v3547 = vsub.f32 1.5, %v3546
      %v3548 = vmul.f32 %v3543, %v3547
      %vm3549 = vweird.f32 %v3541
      %vm3550 = vweird.f32 %v3543
      %vm3551 = vmor %vm3549, %vm3550
      %v3552 = vsel %vm3551, %v3543, %v3548
      %v3553 = vrsqrt.pop %v3542
      %v3554 = vmul.f32 %v3553, %v3542
      %v3555 = vmul.f32 %v3554, %v3553
      %v3556 = vmul.f32 0.5, %v3555
      %v3557 = vsub.f32 1.5, %v3556
      %v3558 = vmul.f32 %v3553, %v3557
      %vm3559 = vweird.f32 %v3542
      %vm3560 = vweird.f32 %v3553
      %vm3561 = vmor %vm3559, %vm3560
      %v3562 = vsel %vm3561, %v3553, %v3558
      %v3563 = vmul.f32 %v3529, %v3552
      %v3564 = vmul.f32 %v3530, %v3562
      %v3565 = vmax.f32 %v3563, 0.0
      %v3566 = vmax.f32 %v3564, 0.0
      %v3567 = vpack.c.bf16 %v3566, %v3565
      %v3568 = vld [vmem:[%s4] sm:$0xf]
      %v3569 = vld [vmem:[%s4 + $0x4] sm:$0xf]
      %v3570 = vld [vmem:[%s4 + $0x8] sm:$0xf]
      %v3571 = vld [vmem:[%s4 + $0xc] sm:$0xf]
      %v3572 = vld [vmem:[%s4 + $0x10] sm:$0xf]
      %v3573 = vld [vmem:[%s4 + $0x14] sm:$0xf]
      %v3574 = vld [vmem:[%s4 + $0x18] sm:$0xf]
      %v3575 = vld [vmem:[%s4 + $0x1c] sm:$0xf]
      %v3584 = vunpack.c.l.b16 %v3568
      %v3585 = vunpack.c.l.b16 %v3569
      %v3586 = vunpack.c.l.b16 %v3570
      %v3587 = vunpack.c.l.b16 %v3571
      %v3588 = vunpack.c.l.b16 %v3572
      %v3589 = vunpack.c.l.b16 %v3573
      %v3590 = vunpack.c.l.b16 %v3574
      %v3591 = vunpack.c.l.b16 %v3575
      %v3592 = vpack.c.b16 %v3585, %v3584
      %v3593 = vpack.c.b16 %v3587, %v3586
      %v3594 = vpack.c.b16 %v3589, %v3588
      %v3595 = vpack.c.b16 %v3591, %v3590
      %v3601 = vsel %vm3513, %v3567, 0
      %3603 = vmatpush.bf16.msra.mxu0 0
      %3604 = vmatpush.bf16.msra.mxu0 0
      %3605 = vmatpush.bf16.msra.mxu0 0
      %3606 = vmatpush.bf16.msra.mxu0 0
      %3607 = vmatpush.bf16.msra.mxu0 %v3595
      %3608 = vmatpush.bf16.msra.mxu0 %v3594
      %3609 = vmatpush.bf16.msra.mxu0 %v3593
      %3610 = vmatpush.bf16.msra.mxu0 %v3592
      %3611 = vmatmul.bf16.gmra.mxu0 %v3601
      %v3612 = vpop.f32.mrf.mxu0
      %v3613 = vadd.f32 0.0, %v3612
      %v3614 = vpop.f32.mrf.mxu0
      %v3615 = vadd.f32 0.0, %v3614
      %3616 = vdwg.mxu0
      %v3617 = vld [vmem:[%s5] sm:$0xf]
      %v3618 = vld [vmem:[%s5 + $0x4] sm:$0xf]
      %v3619 = vld [vmem:[%s5 + $0x8] sm:$0xf]
      %v3620 = vld [vmem:[%s5 + $0xc] sm:$0xf]
      %v3621 = vpack.c.bf16 %v3615, %v3613
      %s3622 = scalar_lea.vmem %s4, 32
      %v3623 = vld [vmem:[%s3622] sm:$0xf]
      %v3624 = vld [vmem:[%s3622 + $0x4] sm:$0xf]
      %v3625 = vld [vmem:[%s3622 + $0x8] sm:$0xf]
      %v3626 = vld [vmem:[%s3622 + $0xc] sm:$0xf]
      %v3627 = vld [vmem:[%s3622 + $0x10] sm:$0xf]
      %v3628 = vld [vmem:[%s3622 + $0x14] sm:$0xf]
      %v3629 = vld [vmem:[%s3622 + $0x18] sm:$0xf]
      %v3630 = vld [vmem:[%s3622 + $0x1c] sm:$0xf]
      %v3639 = vunpack.c.l.b16 %v3623
      %v3640 = vunpack.c.l.b16 %v3624
      %v3641 = vunpack.c.l.b16 %v3625
      %v3642 = vunpack.c.l.b16 %v3626
      %v3643 = vunpack.c.l.b16 %v3627
      %v3644 = vunpack.c.l.b16 %v3628
      %v3645 = vunpack.c.l.b16 %v3629
      %v3646 = vunpack.c.l.b16 %v3630
      %v3647 = vpack.c.b16 %v3640, %v3639
      %v3648 = vpack.c.b16 %v3642, %v3641
      %v3649 = vpack.c.b16 %v3644, %v3643
      %v3650 = vpack.c.b16 %v3646, %v3645
      %3655 = vmatpush.bf16.msra.mxu0 0
      %3656 = vmatpush.bf16.msra.mxu0 0
      %3657 = vmatpush.bf16.msra.mxu0 0
      %3658 = vmatpush.bf16.msra.mxu0 0
      %3659 = vmatpush.bf16.msra.mxu0 %v3650
      %3660 = vmatpush.bf16.msra.mxu0 %v3649
      %3661 = vmatpush.bf16.msra.mxu0 %v3648
      %3662 = vmatpush.bf16.msra.mxu0 %v3647
      %3663 = vmatmul.bf16.gmra.mxu0 %v3601
      %v3664 = vpop.f32.mrf.mxu0
      %v3665 = vadd.f32 0.0, %v3664
      %v3666 = vpop.f32.mrf.mxu0
      %v3667 = vadd.f32 0.0, %v3666
      %3668 = vdwg.mxu0
      %s3669 = scalar_lea.vmem %s5, 16
      %v3670 = vld [vmem:[%s3669] sm:$0xf]
      %v3671 = vld [vmem:[%s3669 + $0x4] sm:$0xf]
      %v3672 = vld [vmem:[%s3669 + $0x8] sm:$0xf]
      %v3673 = vld [vmem:[%s3669 + $0xc] sm:$0xf]
      %v3674 = vpack.c.bf16 %v3667, %v3665
      %v3679 = vunpack.c.l.b16 %v3670
      %v3680 = vunpack.c.l.b16 %v3671
      %v3681 = vunpack.c.l.b16 %v3672
      %v3682 = vunpack.c.l.b16 %v3673
      %v3683 = vpack.c.b16 %v3680, %v3679
      %v3684 = vpack.c.b16 %v3682, %v3681
      %vm3685 = vcmask 130048
      %v3687 = vsel %vm3685, %v3683, 0
      %v3690 = vsel %vm3685, %v3684, 0
      %3692 = vmatpush.bf16.msra.mxu0 0
      %3693 = vmatpush.bf16.msra.mxu0 0
      %3694 = vmatpush.bf16.msra.mxu0 0
      %3695 = vmatpush.bf16.msra.mxu0 0
      %3696 = vmatpush.bf16.msra.mxu0 0
      %3697 = vmatpush.bf16.msra.mxu0 0
      %3698 = vmatpush.bf16.msra.mxu0 0
      %3699 = vmatpush.bf16.msra.mxu0 %v3674
      %3700 = vmatmul.bf16.gmra.mxu0 %v3687
      %v3701 = vpop.f32.mrf.mxu0
      %v3702 = vadd.f32 0.0, %v3701
      %v3703 = vpop.f32.mrf.mxu0
      %v3704 = vadd.f32 0.0, %v3703
      %3705 = vmatmul.bf16.gmra.mxu0 %v3690
      %v3706 = vpop.f32.mrf.mxu0
      %v3707 = vadd.f32 0.0, %v3706
      %v3708 = vpop.f32.mrf.mxu0
      %v3709 = vadd.f32 0.0, %v3708
      %3710 = vdwg.mxu0
      %v3715 = vunpack.c.l.b16 %v3617
      %v3716 = vunpack.c.l.b16 %v3618
      %v3717 = vunpack.c.l.b16 %v3619
      %v3718 = vunpack.c.l.b16 %v3620
      %v3719 = vpack.c.b16 %v3716, %v3715
      %v3720 = vpack.c.b16 %v3718, %v3717
      %v3722 = vsel %vm3685, %v3719, 0
      %v3725 = vsel %vm3685, %v3720, 0
      %3727 = vmatpush.bf16.msra.mxu0 0
      %3728 = vmatpush.bf16.msra.mxu0 0
      %3729 = vmatpush.bf16.msra.mxu0 0
      %3730 = vmatpush.bf16.msra.mxu0 0
      %3731 = vmatpush.bf16.msra.mxu0 0
      %3732 = vmatpush.bf16.msra.mxu0 0
      %3733 = vmatpush.bf16.msra.mxu0 0
      %3734 = vmatpush.bf16.msra.mxu0 %v3621
      %3735 = vmatmul.bf16.gmra.mxu0 %v3722
      %v3736 = vpop.f32.mrf.mxu0
      %v3737 = vadd.f32 %v3702, %v3736
      %v3738 = vpop.f32.mrf.mxu0
      %v3739 = vadd.f32 %v3704, %v3738
      %3740 = vmatmul.bf16.gmra.mxu0 %v3725
      %v3741 = vpop.f32.mrf.mxu0
      %v3742 = vadd.f32 %v3707, %v3741
      %v3743 = vpop.f32.mrf.mxu0
      %v3744 = vadd.f32 %v3709, %v3743
      %3745 = vdwg.mxu0
      %s3746 = scalar_lea.vmem %s4, 64
      %v3747 = vld [vmem:[%s3746] sm:$0xf]
      %v3748 = vld [vmem:[%s3746 + $0x4] sm:$0xf]
      %v3749 = vld [vmem:[%s3746 + $0x8] sm:$0xf]
      %v3750 = vld [vmem:[%s3746 + $0xc] sm:$0xf]
      %v3751 = vld [vmem:[%s3746 + $0x10] sm:$0xf]
      %v3752 = vld [vmem:[%s3746 + $0x14] sm:$0xf]
      %v3753 = vld [vmem:[%s3746 + $0x18] sm:$0xf]
      %v3754 = vld [vmem:[%s3746 + $0x1c] sm:$0xf]
      %v3763 = vunpack.c.l.b16 %v3747
      %v3764 = vunpack.c.l.b16 %v3748
      %v3765 = vunpack.c.l.b16 %v3749
      %v3766 = vunpack.c.l.b16 %v3750
      %v3767 = vunpack.c.l.b16 %v3751
      %v3768 = vunpack.c.l.b16 %v3752
      %v3769 = vunpack.c.l.b16 %v3753
      %v3770 = vunpack.c.l.b16 %v3754
      %v3771 = vpack.c.b16 %v3764, %v3763
      %v3772 = vpack.c.b16 %v3766, %v3765
      %v3773 = vpack.c.b16 %v3768, %v3767
      %v3774 = vpack.c.b16 %v3770, %v3769
      %3779 = vmatpush.bf16.msra.mxu0 0
      %3780 = vmatpush.bf16.msra.mxu0 0
      %3781 = vmatpush.bf16.msra.mxu0 0
      %3782 = vmatpush.bf16.msra.mxu0 0
      %3783 = vmatpush.bf16.msra.mxu0 %v3774
      %3784 = vmatpush.bf16.msra.mxu0 %v3773
      %3785 = vmatpush.bf16.msra.mxu0 %v3772
      %3786 = vmatpush.bf16.msra.mxu0 %v3771
      %3787 = vmatmul.bf16.gmra.mxu0 %v3601
      %v3788 = vpop.f32.mrf.mxu0
      %v3789 = vadd.f32 0.0, %v3788
      %v3790 = vpop.f32.mrf.mxu0
      %v3791 = vadd.f32 0.0, %v3790
      %3792 = vdwg.mxu0
      %s3793 = scalar_lea.vmem %s5, 32
      %v3794 = vld [vmem:[%s3793] sm:$0xf]
      %v3795 = vld [vmem:[%s3793 + $0x4] sm:$0xf]
      %v3796 = vld [vmem:[%s3793 + $0x8] sm:$0xf]
      %v3797 = vld [vmem:[%s3793 + $0xc] sm:$0xf]
      %v3798 = vpack.c.bf16 %v3791, %v3789
      %v3803 = vunpack.c.l.b16 %v3794
      %v3804 = vunpack.c.l.b16 %v3795
      %v3805 = vunpack.c.l.b16 %v3796
      %v3806 = vunpack.c.l.b16 %v3797
      %v3807 = vpack.c.b16 %v3804, %v3803
      %v3808 = vpack.c.b16 %v3806, %v3805
      %v3810 = vsel %vm3685, %v3807, 0
      %v3813 = vsel %vm3685, %v3808, 0
      %3815 = vmatpush.bf16.msra.mxu0 0
      %3816 = vmatpush.bf16.msra.mxu0 0
      %3817 = vmatpush.bf16.msra.mxu0 0
      %3818 = vmatpush.bf16.msra.mxu0 0
      %3819 = vmatpush.bf16.msra.mxu0 0
      %3820 = vmatpush.bf16.msra.mxu0 0
      %3821 = vmatpush.bf16.msra.mxu0 0
      %3822 = vmatpush.bf16.msra.mxu0 %v3798
      %3823 = vmatmul.bf16.gmra.mxu0 %v3810
      %v3824 = vpop.f32.mrf.mxu0
      %v3825 = vadd.f32 0.0, %v3824
      %v3826 = vpop.f32.mrf.mxu0
      %v3827 = vadd.f32 0.0, %v3826
      %3828 = vmatmul.bf16.gmra.mxu0 %v3813
      %v3829 = vpop.f32.mrf.mxu0
      %v3830 = vadd.f32 0.0, %v3829
      %v3831 = vpop.f32.mrf.mxu0
      %v3832 = vadd.f32 0.0, %v3831
      %3833 = vdwg.mxu0
      %v3834 = vadd.f32 %v3737, %v3825
      %v3835 = vadd.f32 %v3739, %v3827
      %v3836 = vadd.f32 %v3742, %v3830
      %v3837 = vadd.f32 %v3744, %v3832
      %s3838 = scalar_lea.vmem %s4, 96
      %v3839 = vld [vmem:[%s3838] sm:$0xf]
      %v3840 = vld [vmem:[%s3838 + $0x4] sm:$0xf]
      %v3841 = vld [vmem:[%s3838 + $0x8] sm:$0xf]
      %v3842 = vld [vmem:[%s3838 + $0xc] sm:$0xf]
      %v3843 = vld [vmem:[%s3838 + $0x10] sm:$0xf]
      %v3844 = vld [vmem:[%s3838 + $0x14] sm:$0xf]
      %v3845 = vld [vmem:[%s3838 + $0x18] sm:$0xf]
      %v3846 = vld [vmem:[%s3838 + $0x1c] sm:$0xf]
      %v3855 = vunpack.c.l.b16 %v3839
      %v3856 = vunpack.c.l.b16 %v3840
      %v3857 = vunpack.c.l.b16 %v3841
      %v3858 = vunpack.c.l.b16 %v3842
      %v3859 = vunpack.c.l.b16 %v3843
      %v3860 = vunpack.c.l.b16 %v3844
      %v3861 = vunpack.c.l.b16 %v3845
      %v3862 = vunpack.c.l.b16 %v3846
      %v3863 = vpack.c.b16 %v3856, %v3855
      %v3864 = vpack.c.b16 %v3858, %v3857
      %v3865 = vpack.c.b16 %v3860, %v3859
      %v3866 = vpack.c.b16 %v3862, %v3861
      %3871 = vmatpush.bf16.msra.mxu0 0
      %3872 = vmatpush.bf16.msra.mxu0 0
      %3873 = vmatpush.bf16.msra.mxu0 0
      %3874 = vmatpush.bf16.msra.mxu0 0
      %3875 = vmatpush.bf16.msra.mxu0 %v3866
      %3876 = vmatpush.bf16.msra.mxu0 %v3865
      %3877 = vmatpush.bf16.msra.mxu0 %v3864
      %3878 = vmatpush.bf16.msra.mxu0 %v3863
      %3879 = vmatmul.bf16.gmra.mxu0 %v3601
      %v3880 = vpop.f32.mrf.mxu0
      %v3881 = vadd.f32 0.0, %v3880
      %v3882 = vpop.f32.mrf.mxu0
      %v3883 = vadd.f32 0.0, %v3882
      %3884 = vdwg.mxu0
      %s3885 = scalar_lea.vmem %s5, 48
      %v3886 = vld [vmem:[%s3885] sm:$0xf]
      %v3887 = vld [vmem:[%s3885 + $0x4] sm:$0xf]
      %v3888 = vld [vmem:[%s3885 + $0x8] sm:$0xf]
      %v3889 = vld [vmem:[%s3885 + $0xc] sm:$0xf]
      %v3890 = vpack.c.bf16 %v3883, %v3881
      %v3895 = vunpack.c.l.b16 %v3886
      %v3896 = vunpack.c.l.b16 %v3887
      %v3897 = vunpack.c.l.b16 %v3888
      %v3898 = vunpack.c.l.b16 %v3889
      %v3899 = vpack.c.b16 %v3896, %v3895
      %v3900 = vpack.c.b16 %v3898, %v3897
      %v3902 = vsel %vm3685, %v3899, 0
      %v3905 = vsel %vm3685, %v3900, 0
      %3907 = vmatpush.bf16.msra.mxu0 0
      %3908 = vmatpush.bf16.msra.mxu0 0
      %3909 = vmatpush.bf16.msra.mxu0 0
      %3910 = vmatpush.bf16.msra.mxu0 0
      %3911 = vmatpush.bf16.msra.mxu0 0
      %3912 = vmatpush.bf16.msra.mxu0 0
      %3913 = vmatpush.bf16.msra.mxu0 0
      %3914 = vmatpush.bf16.msra.mxu0 %v3890
      %3915 = vmatmul.bf16.gmra.mxu0 %v3902
      %v3916 = vpop.f32.mrf.mxu0
      %v3917 = vadd.f32 0.0, %v3916
      %v3918 = vpop.f32.mrf.mxu0
      %v3919 = vadd.f32 0.0, %v3918
      %3920 = vmatmul.bf16.gmra.mxu0 %v3905
      %v3921 = vpop.f32.mrf.mxu0
      %v3922 = vadd.f32 0.0, %v3921
      %v3923 = vpop.f32.mrf.mxu0
      %v3924 = vadd.f32 0.0, %v3923
      %3925 = vdwg.mxu0
      %v3926 = vadd.f32 %v3834, %v3917
      %v3927 = vadd.f32 %v3835, %v3919
      %v3928 = vadd.f32 %v3836, %v3922
      %v3929 = vadd.f32 %v3837, %v3924
      %s3930 = scalar_lea.vmem %s4, 128
      %v3931 = vld [vmem:[%s3930] sm:$0xf]
      %v3932 = vld [vmem:[%s3930 + $0x4] sm:$0xf]
      %v3933 = vld [vmem:[%s3930 + $0x8] sm:$0xf]
      %v3934 = vld [vmem:[%s3930 + $0xc] sm:$0xf]
      %v3935 = vld [vmem:[%s3930 + $0x10] sm:$0xf]
      %v3936 = vld [vmem:[%s3930 + $0x14] sm:$0xf]
      %v3937 = vld [vmem:[%s3930 + $0x18] sm:$0xf]
      %v3938 = vld [vmem:[%s3930 + $0x1c] sm:$0xf]
      %v3947 = vunpack.c.l.b16 %v3931
      %v3948 = vunpack.c.l.b16 %v3932
      %v3949 = vunpack.c.l.b16 %v3933
      %v3950 = vunpack.c.l.b16 %v3934
      %v3951 = vunpack.c.l.b16 %v3935
      %v3952 = vunpack.c.l.b16 %v3936
      %v3953 = vunpack.c.l.b16 %v3937
      %v3954 = vunpack.c.l.b16 %v3938
      %v3955 = vpack.c.b16 %v3948, %v3947
      %v3956 = vpack.c.b16 %v3950, %v3949
      %v3957 = vpack.c.b16 %v3952, %v3951
      %v3958 = vpack.c.b16 %v3954, %v3953
      %3963 = vmatpush.bf16.msra.mxu0 0
      %3964 = vmatpush.bf16.msra.mxu0 0
      %3965 = vmatpush.bf16.msra.mxu0 0
      %3966 = vmatpush.bf16.msra.mxu0 0
      %3967 = vmatpush.bf16.msra.mxu0 %v3958
      %3968 = vmatpush.bf16.msra.mxu0 %v3957
      %3969 = vmatpush.bf16.msra.mxu0 %v3956
      %3970 = vmatpush.bf16.msra.mxu0 %v3955
      %3971 = vmatmul.bf16.gmra.mxu0 %v3601
      %v3972 = vpop.f32.mrf.mxu0
      %v3973 = vadd.f32 0.0, %v3972
      %v3974 = vpop.f32.mrf.mxu0
      %v3975 = vadd.f32 0.0, %v3974
      %3976 = vdwg.mxu0
      %s3977 = scalar_lea.vmem %s5, 64
      %v3978 = vld [vmem:[%s3977] sm:$0xf]
      %v3979 = vld [vmem:[%s3977 + $0x4] sm:$0xf]
      %v3980 = vld [vmem:[%s3977 + $0x8] sm:$0xf]
      %v3981 = vld [vmem:[%s3977 + $0xc] sm:$0xf]
      %v3982 = vpack.c.bf16 %v3975, %v3973
      %v3987 = vunpack.c.l.b16 %v3978
      %v3988 = vunpack.c.l.b16 %v3979
      %v3989 = vunpack.c.l.b16 %v3980
      %v3990 = vunpack.c.l.b16 %v3981
      %v3991 = vpack.c.b16 %v3988, %v3987
      %v3992 = vpack.c.b16 %v3990, %v3989
      %v3994 = vsel %vm3685, %v3991, 0
      %v3997 = vsel %vm3685, %v3992, 0
      %3999 = vmatpush.bf16.msra.mxu0 0
      %4000 = vmatpush.bf16.msra.mxu0 0
      %4001 = vmatpush.bf16.msra.mxu0 0
      %4002 = vmatpush.bf16.msra.mxu0 0
      %4003 = vmatpush.bf16.msra.mxu0 0
      %4004 = vmatpush.bf16.msra.mxu0 0
      %4005 = vmatpush.bf16.msra.mxu0 0
      %4006 = vmatpush.bf16.msra.mxu0 %v3982
      %4007 = vmatmul.bf16.gmra.mxu0 %v3994
      %v4008 = vpop.f32.mrf.mxu0
      %v4009 = vadd.f32 0.0, %v4008
      %v4010 = vpop.f32.mrf.mxu0
      %v4011 = vadd.f32 0.0, %v4010
      %4012 = vmatmul.bf16.gmra.mxu0 %v3997
      %v4013 = vpop.f32.mrf.mxu0
      %v4014 = vadd.f32 0.0, %v4013
      %v4015 = vpop.f32.mrf.mxu0
      %v4016 = vadd.f32 0.0, %v4015
      %4017 = vdwg.mxu0
      %v4018 = vadd.f32 %v3926, %v4009
      %v4019 = vadd.f32 %v3927, %v4011
      %v4020 = vadd.f32 %v3928, %v4014
      %v4021 = vadd.f32 %v3929, %v4016
      %s4022 = scalar_lea.vmem %s4, 160
      %v4023 = vld [vmem:[%s4022] sm:$0xf]
      %v4024 = vld [vmem:[%s4022 + $0x4] sm:$0xf]
      %v4025 = vld [vmem:[%s4022 + $0x8] sm:$0xf]
      %v4026 = vld [vmem:[%s4022 + $0xc] sm:$0xf]
      %v4027 = vld [vmem:[%s4022 + $0x10] sm:$0xf]
      %v4028 = vld [vmem:[%s4022 + $0x14] sm:$0xf]
      %v4029 = vld [vmem:[%s4022 + $0x18] sm:$0xf]
      %v4030 = vld [vmem:[%s4022 + $0x1c] sm:$0xf]
      %v4039 = vunpack.c.l.b16 %v4023
      %v4040 = vunpack.c.l.b16 %v4024
      %v4041 = vunpack.c.l.b16 %v4025
      %v4042 = vunpack.c.l.b16 %v4026
      %v4043 = vunpack.c.l.b16 %v4027
      %v4044 = vunpack.c.l.b16 %v4028
      %v4045 = vunpack.c.l.b16 %v4029
      %v4046 = vunpack.c.l.b16 %v4030
      %v4047 = vpack.c.b16 %v4040, %v4039
      %v4048 = vpack.c.b16 %v4042, %v4041
      %v4049 = vpack.c.b16 %v4044, %v4043
      %v4050 = vpack.c.b16 %v4046, %v4045
      %4055 = vmatpush.bf16.msra.mxu0 0
      %4056 = vmatpush.bf16.msra.mxu0 0
      %4057 = vmatpush.bf16.msra.mxu0 0
      %4058 = vmatpush.bf16.msra.mxu0 0
      %4059 = vmatpush.bf16.msra.mxu0 %v4050
      %4060 = vmatpush.bf16.msra.mxu0 %v4049
      %4061 = vmatpush.bf16.msra.mxu0 %v4048
      %4062 = vmatpush.bf16.msra.mxu0 %v4047
      %4063 = vmatmul.bf16.gmra.mxu0 %v3601
      %v4064 = vpop.f32.mrf.mxu0
      %v4065 = vadd.f32 0.0, %v4064
      %v4066 = vpop.f32.mrf.mxu0
      %v4067 = vadd.f32 0.0, %v4066
      %4068 = vdwg.mxu0
      %s4069 = scalar_lea.vmem %s5, 80
      %v4070 = vld [vmem:[%s4069] sm:$0xf]
      %v4071 = vld [vmem:[%s4069 + $0x4] sm:$0xf]
      %v4072 = vld [vmem:[%s4069 + $0x8] sm:$0xf]
      %v4073 = vld [vmem:[%s4069 + $0xc] sm:$0xf]
      %v4074 = vpack.c.bf16 %v4067, %v4065
      %v4079 = vunpack.c.l.b16 %v4070
      %v4080 = vunpack.c.l.b16 %v4071
      %v4081 = vunpack.c.l.b16 %v4072
      %v4082 = vunpack.c.l.b16 %v4073
      %v4083 = vpack.c.b16 %v4080, %v4079
      %v4084 = vpack.c.b16 %v4082, %v4081
      %v4086 = vsel %vm3685, %v4083, 0
      %v4089 = vsel %vm3685, %v4084, 0
      %4091 = vmatpush.bf16.msra.mxu0 0
      %4092 = vmatpush.bf16.msra.mxu0 0
      %4093 = vmatpush.bf16.msra.mxu0 0
      %4094 = vmatpush.bf16.msra.mxu0 0
      %4095 = vmatpush.bf16.msra.mxu0 0
      %4096 = vmatpush.bf16.msra.mxu0 0
      %4097 = vmatpush.bf16.msra.mxu0 0
      %4098 = vmatpush.bf16.msra.mxu0 %v4074
      %4099 = vmatmul.bf16.gmra.mxu0 %v4086
      %v4100 = vpop.f32.mrf.mxu0
      %v4101 = vadd.f32 0.0, %v4100
      %v4102 = vpop.f32.mrf.mxu0
      %v4103 = vadd.f32 0.0, %v4102
      %4104 = vmatmul.bf16.gmra.mxu0 %v4089
      %v4105 = vpop.f32.mrf.mxu0
      %v4106 = vadd.f32 0.0, %v4105
      %v4107 = vpop.f32.mrf.mxu0
      %v4108 = vadd.f32 0.0, %v4107
      %4109 = vdwg.mxu0
      %v4110 = vadd.f32 %v4018, %v4101
      %v4111 = vadd.f32 %v4019, %v4103
      %v4112 = vadd.f32 %v4020, %v4106
      %v4113 = vadd.f32 %v4021, %v4108
      %s4114 = scalar_lea.vmem %s4, 192
      %v4115 = vld [vmem:[%s4114] sm:$0xf]
      %v4116 = vld [vmem:[%s4114 + $0x4] sm:$0xf]
      %v4117 = vld [vmem:[%s4114 + $0x8] sm:$0xf]
      %v4118 = vld [vmem:[%s4114 + $0xc] sm:$0xf]
      %v4119 = vld [vmem:[%s4114 + $0x10] sm:$0xf]
      %v4120 = vld [vmem:[%s4114 + $0x14] sm:$0xf]
      %v4121 = vld [vmem:[%s4114 + $0x18] sm:$0xf]
      %v4122 = vld [vmem:[%s4114 + $0x1c] sm:$0xf]
      %v4131 = vunpack.c.l.b16 %v4115
      %v4132 = vunpack.c.l.b16 %v4116
      %v4133 = vunpack.c.l.b16 %v4117
      %v4134 = vunpack.c.l.b16 %v4118
      %v4135 = vunpack.c.l.b16 %v4119
      %v4136 = vunpack.c.l.b16 %v4120
      %v4137 = vunpack.c.l.b16 %v4121
      %v4138 = vunpack.c.l.b16 %v4122
      %v4139 = vpack.c.b16 %v4132, %v4131
      %v4140 = vpack.c.b16 %v4134, %v4133
      %v4141 = vpack.c.b16 %v4136, %v4135
      %v4142 = vpack.c.b16 %v4138, %v4137
      %4147 = vmatpush.bf16.msra.mxu0 0
      %4148 = vmatpush.bf16.msra.mxu0 0
      %4149 = vmatpush.bf16.msra.mxu0 0
      %4150 = vmatpush.bf16.msra.mxu0 0
      %4151 = vmatpush.bf16.msra.mxu0 %v4142
      %4152 = vmatpush.bf16.msra.mxu0 %v4141
      %4153 = vmatpush.bf16.msra.mxu0 %v4140
      %4154 = vmatpush.bf16.msra.mxu0 %v4139
      %4155 = vmatmul.bf16.gmra.mxu0 %v3601
      %v4156 = vpop.f32.mrf.mxu0
      %v4157 = vadd.f32 0.0, %v4156
      %v4158 = vpop.f32.mrf.mxu0
      %v4159 = vadd.f32 0.0, %v4158
      %4160 = vdwg.mxu0
      %s4161 = scalar_lea.vmem %s5, 96
      %v4162 = vld [vmem:[%s4161] sm:$0xf]
      %v4163 = vld [vmem:[%s4161 + $0x4] sm:$0xf]
      %v4164 = vld [vmem:[%s4161 + $0x8] sm:$0xf]
      %v4165 = vld [vmem:[%s4161 + $0xc] sm:$0xf]
      %v4166 = vpack.c.bf16 %v4159, %v4157
      %v4171 = vunpack.c.l.b16 %v4162
      %v4172 = vunpack.c.l.b16 %v4163
      %v4173 = vunpack.c.l.b16 %v4164
      %v4174 = vunpack.c.l.b16 %v4165
      %v4175 = vpack.c.b16 %v4172, %v4171
      %v4176 = vpack.c.b16 %v4174, %v4173
      %v4178 = vsel %vm3685, %v4175, 0
      %v4181 = vsel %vm3685, %v4176, 0
      %4183 = vmatpush.bf16.msra.mxu0 0
      %4184 = vmatpush.bf16.msra.mxu0 0
      %4185 = vmatpush.bf16.msra.mxu0 0
      %4186 = vmatpush.bf16.msra.mxu0 0
      %4187 = vmatpush.bf16.msra.mxu0 0
      %4188 = vmatpush.bf16.msra.mxu0 0
      %4189 = vmatpush.bf16.msra.mxu0 0
      %4190 = vmatpush.bf16.msra.mxu0 %v4166
      %4191 = vmatmul.bf16.gmra.mxu0 %v4178
      %v4192 = vpop.f32.mrf.mxu0
      %v4193 = vadd.f32 0.0, %v4192
      %v4194 = vpop.f32.mrf.mxu0
      %v4195 = vadd.f32 0.0, %v4194
      %4196 = vmatmul.bf16.gmra.mxu0 %v4181
      %v4197 = vpop.f32.mrf.mxu0
      %v4198 = vadd.f32 0.0, %v4197
      %v4199 = vpop.f32.mrf.mxu0
      %v4200 = vadd.f32 0.0, %v4199
      %4201 = vdwg.mxu0
      %v4202 = vadd.f32 %v4110, %v4193
      %v4203 = vadd.f32 %v4111, %v4195
      %v4204 = vadd.f32 %v4112, %v4198
      %v4205 = vadd.f32 %v4113, %v4200
      %s4206 = scalar_lea.vmem %s4, 224
      %v4207 = vld [vmem:[%s4206] sm:$0xf]
      %v4208 = vld [vmem:[%s4206 + $0x4] sm:$0xf]
      %v4209 = vld [vmem:[%s4206 + $0x8] sm:$0xf]
      %v4210 = vld [vmem:[%s4206 + $0xc] sm:$0xf]
      %v4211 = vld [vmem:[%s4206 + $0x10] sm:$0xf]
      %v4212 = vld [vmem:[%s4206 + $0x14] sm:$0xf]
      %v4213 = vld [vmem:[%s4206 + $0x18] sm:$0xf]
      %v4214 = vld [vmem:[%s4206 + $0x1c] sm:$0xf]
      %v4223 = vunpack.c.l.b16 %v4207
      %v4224 = vunpack.c.l.b16 %v4208
      %v4225 = vunpack.c.l.b16 %v4209
      %v4226 = vunpack.c.l.b16 %v4210
      %v4227 = vunpack.c.l.b16 %v4211
      %v4228 = vunpack.c.l.b16 %v4212
      %v4229 = vunpack.c.l.b16 %v4213
      %v4230 = vunpack.c.l.b16 %v4214
      %v4231 = vpack.c.b16 %v4224, %v4223
      %v4232 = vpack.c.b16 %v4226, %v4225
      %v4233 = vpack.c.b16 %v4228, %v4227
      %v4234 = vpack.c.b16 %v4230, %v4229
      %4239 = vmatpush.bf16.msra.mxu0 0
      %4240 = vmatpush.bf16.msra.mxu0 0
      %4241 = vmatpush.bf16.msra.mxu0 0
      %4242 = vmatpush.bf16.msra.mxu0 0
      %4243 = vmatpush.bf16.msra.mxu0 %v4234
      %4244 = vmatpush.bf16.msra.mxu0 %v4233
      %4245 = vmatpush.bf16.msra.mxu0 %v4232
      %4246 = vmatpush.bf16.msra.mxu0 %v4231
      %4247 = vmatmul.bf16.gmra.mxu0 %v3601
      %v4248 = vpop.f32.mrf.mxu0
      %v4249 = vadd.f32 0.0, %v4248
      %v4250 = vpop.f32.mrf.mxu0
      %v4251 = vadd.f32 0.0, %v4250
      %4252 = vdwg.mxu0
      %s4253 = scalar_lea.vmem %s5, 112
      %v4254 = vld [vmem:[%s4253] sm:$0xf]
      %v4255 = vld [vmem:[%s4253 + $0x4] sm:$0xf]
      %v4256 = vld [vmem:[%s4253 + $0x8] sm:$0xf]
      %v4257 = vld [vmem:[%s4253 + $0xc] sm:$0xf]
      %v4258 = vpack.c.bf16 %v4251, %v4249
      %v4263 = vunpack.c.l.b16 %v4254
      %v4264 = vunpack.c.l.b16 %v4255
      %v4265 = vunpack.c.l.b16 %v4256
      %v4266 = vunpack.c.l.b16 %v4257
      %v4267 = vpack.c.b16 %v4264, %v4263
      %v4268 = vpack.c.b16 %v4266, %v4265
      %v4270 = vsel %vm3685, %v4267, 0
      %v4273 = vsel %vm3685, %v4268, 0
      %4275 = vmatpush.bf16.msra.mxu0 0
      %4276 = vmatpush.bf16.msra.mxu0 0
      %4277 = vmatpush.bf16.msra.mxu0 0
      %4278 = vmatpush.bf16.msra.mxu0 0
      %4279 = vmatpush.bf16.msra.mxu0 0
      %4280 = vmatpush.bf16.msra.mxu0 0
      %4281 = vmatpush.bf16.msra.mxu0 0
      %4282 = vmatpush.bf16.msra.mxu0 %v4258
      %4283 = vmatmul.bf16.gmra.mxu0 %v4270
      %v4284 = vpop.f32.mrf.mxu0
      %v4285 = vadd.f32 0.0, %v4284
      %v4286 = vpop.f32.mrf.mxu0
      %v4287 = vadd.f32 0.0, %v4286
      %4288 = vmatmul.bf16.gmra.mxu0 %v4273
      %v4289 = vpop.f32.mrf.mxu0
      %v4290 = vadd.f32 0.0, %v4289
      %v4291 = vpop.f32.mrf.mxu0
      %v4292 = vadd.f32 0.0, %v4291
      %4293 = vdwg.mxu0
      %v4294 = vadd.f32 %v4202, %v4285
      %v4295 = vadd.f32 %v4203, %v4287
      %v4296 = vadd.f32 %v4204, %v4290
      %v4297 = vadd.f32 %v4205, %v4292
      %s4298 = scalar_lea.vmem %s4, 256
      %v4299 = vld [vmem:[%s4298] sm:$0xf]
      %v4300 = vld [vmem:[%s4298 + $0x4] sm:$0xf]
      %v4301 = vld [vmem:[%s4298 + $0x8] sm:$0xf]
      %v4302 = vld [vmem:[%s4298 + $0xc] sm:$0xf]
      %v4303 = vld [vmem:[%s4298 + $0x10] sm:$0xf]
      %v4304 = vld [vmem:[%s4298 + $0x14] sm:$0xf]
      %v4305 = vld [vmem:[%s4298 + $0x18] sm:$0xf]
      %v4306 = vld [vmem:[%s4298 + $0x1c] sm:$0xf]
      %v4315 = vunpack.c.l.b16 %v4299
      %v4316 = vunpack.c.l.b16 %v4300
      %v4317 = vunpack.c.l.b16 %v4301
      %v4318 = vunpack.c.l.b16 %v4302
      %v4319 = vunpack.c.l.b16 %v4303
      %v4320 = vunpack.c.l.b16 %v4304
      %v4321 = vunpack.c.l.b16 %v4305
      %v4322 = vunpack.c.l.b16 %v4306
      %v4323 = vpack.c.b16 %v4316, %v4315
      %v4324 = vpack.c.b16 %v4318, %v4317
      %v4325 = vpack.c.b16 %v4320, %v4319
      %v4326 = vpack.c.b16 %v4322, %v4321
      %4331 = vmatpush.bf16.msra.mxu0 0
      %4332 = vmatpush.bf16.msra.mxu0 0
      %4333 = vmatpush.bf16.msra.mxu0 0
      %4334 = vmatpush.bf16.msra.mxu0 0
      %4335 = vmatpush.bf16.msra.mxu0 %v4326
      %4336 = vmatpush.bf16.msra.mxu0 %v4325
      %4337 = vmatpush.bf16.msra.mxu0 %v4324
      %4338 = vmatpush.bf16.msra.mxu0 %v4323
      %4339 = vmatmul.bf16.gmra.mxu0 %v3601
      %v4340 = vpop.f32.mrf.mxu0
      %v4341 = vadd.f32 0.0, %v4340
      %v4342 = vpop.f32.mrf.mxu0
      %v4343 = vadd.f32 0.0, %v4342
      %4344 = vdwg.mxu0
      %s4345 = scalar_lea.vmem %s5, 128
      %v4346 = vld [vmem:[%s4345] sm:$0xf]
      %v4347 = vld [vmem:[%s4345 + $0x4] sm:$0xf]
      %v4348 = vld [vmem:[%s4345 + $0x8] sm:$0xf]
      %v4349 = vld [vmem:[%s4345 + $0xc] sm:$0xf]
      %v4350 = vpack.c.bf16 %v4343, %v4341
      %v4355 = vunpack.c.l.b16 %v4346
      %v4356 = vunpack.c.l.b16 %v4347
      %v4357 = vunpack.c.l.b16 %v4348
      %v4358 = vunpack.c.l.b16 %v4349
      %v4359 = vpack.c.b16 %v4356, %v4355
      %v4360 = vpack.c.b16 %v4358, %v4357
      %v4362 = vsel %vm3685, %v4359, 0
      %v4365 = vsel %vm3685, %v4360, 0
      %4367 = vmatpush.bf16.msra.mxu0 0
      %4368 = vmatpush.bf16.msra.mxu0 0
      %4369 = vmatpush.bf16.msra.mxu0 0
      %4370 = vmatpush.bf16.msra.mxu0 0
      %4371 = vmatpush.bf16.msra.mxu0 0
      %4372 = vmatpush.bf16.msra.mxu0 0
      %4373 = vmatpush.bf16.msra.mxu0 0
      %4374 = vmatpush.bf16.msra.mxu0 %v4350
      %4375 = vmatmul.bf16.gmra.mxu0 %v4362
      %v4376 = vpop.f32.mrf.mxu0
      %v4377 = vadd.f32 0.0, %v4376
      %v4378 = vpop.f32.mrf.mxu0
      %v4379 = vadd.f32 0.0, %v4378
      %4380 = vmatmul.bf16.gmra.mxu0 %v4365
      %v4381 = vpop.f32.mrf.mxu0
      %v4382 = vadd.f32 0.0, %v4381
      %v4383 = vpop.f32.mrf.mxu0
      %v4384 = vadd.f32 0.0, %v4383
      %4385 = vdwg.mxu0
      %v4386 = vadd.f32 %v4294, %v4377
      %v4387 = vadd.f32 %v4295, %v4379
      %v4388 = vadd.f32 %v4296, %v4382
      %v4389 = vadd.f32 %v4297, %v4384
      %s4390 = scalar_lea.vmem %s4, 288
      %v4391 = vld [vmem:[%s4390] sm:$0xf]
      %v4392 = vld [vmem:[%s4390 + $0x4] sm:$0xf]
      %v4393 = vld [vmem:[%s4390 + $0x8] sm:$0xf]
      %v4394 = vld [vmem:[%s4390 + $0xc] sm:$0xf]
      %v4395 = vld [vmem:[%s4390 + $0x10] sm:$0xf]
      %v4396 = vld [vmem:[%s4390 + $0x14] sm:$0xf]
      %v4397 = vld [vmem:[%s4390 + $0x18] sm:$0xf]
      %v4398 = vld [vmem:[%s4390 + $0x1c] sm:$0xf]
      %v4407 = vunpack.c.l.b16 %v4391
      %v4408 = vunpack.c.l.b16 %v4392
      %v4409 = vunpack.c.l.b16 %v4393
      %v4410 = vunpack.c.l.b16 %v4394
      %v4411 = vunpack.c.l.b16 %v4395
      %v4412 = vunpack.c.l.b16 %v4396
      %v4413 = vunpack.c.l.b16 %v4397
      %v4414 = vunpack.c.l.b16 %v4398
      %v4415 = vpack.c.b16 %v4408, %v4407
      %v4416 = vpack.c.b16 %v4410, %v4409
      %v4417 = vpack.c.b16 %v4412, %v4411
      %v4418 = vpack.c.b16 %v4414, %v4413
      %4423 = vmatpush.bf16.msra.mxu0 0
      %4424 = vmatpush.bf16.msra.mxu0 0
      %4425 = vmatpush.bf16.msra.mxu0 0
      %4426 = vmatpush.bf16.msra.mxu0 0
      %4427 = vmatpush.bf16.msra.mxu0 %v4418
      %4428 = vmatpush.bf16.msra.mxu0 %v4417
      %4429 = vmatpush.bf16.msra.mxu0 %v4416
      %4430 = vmatpush.bf16.msra.mxu0 %v4415
      %4431 = vmatmul.bf16.gmra.mxu0 %v3601
      %v4432 = vpop.f32.mrf.mxu0
      %v4433 = vadd.f32 0.0, %v4432
      %v4434 = vpop.f32.mrf.mxu0
      %v4435 = vadd.f32 0.0, %v4434
      %4436 = vdwg.mxu0
      %s4437 = scalar_lea.vmem %s5, 144
      %v4438 = vld [vmem:[%s4437] sm:$0xf]
      %v4439 = vld [vmem:[%s4437 + $0x4] sm:$0xf]
      %v4440 = vld [vmem:[%s4437 + $0x8] sm:$0xf]
      %v4441 = vld [vmem:[%s4437 + $0xc] sm:$0xf]
      %v4442 = vpack.c.bf16 %v4435, %v4433
      %v4447 = vunpack.c.l.b16 %v4438
      %v4448 = vunpack.c.l.b16 %v4439
      %v4449 = vunpack.c.l.b16 %v4440
      %v4450 = vunpack.c.l.b16 %v4441
      %v4451 = vpack.c.b16 %v4448, %v4447
      %v4452 = vpack.c.b16 %v4450, %v4449
      %v4454 = vsel %vm3685, %v4451, 0
      %v4457 = vsel %vm3685, %v4452, 0
      %4459 = vmatpush.bf16.msra.mxu0 0
      %4460 = vmatpush.bf16.msra.mxu0 0
      %4461 = vmatpush.bf16.msra.mxu0 0
      %4462 = vmatpush.bf16.msra.mxu0 0
      %4463 = vmatpush.bf16.msra.mxu0 0
      %4464 = vmatpush.bf16.msra.mxu0 0
      %4465 = vmatpush.bf16.msra.mxu0 0
      %4466 = vmatpush.bf16.msra.mxu0 %v4442
      %4467 = vmatmul.bf16.gmra.mxu0 %v4454
      %v4468 = vpop.f32.mrf.mxu0
      %v4469 = vadd.f32 0.0, %v4468
      %v4470 = vpop.f32.mrf.mxu0
      %v4471 = vadd.f32 0.0, %v4470
      %4472 = vmatmul.bf16.gmra.mxu0 %v4457
      %v4473 = vpop.f32.mrf.mxu0
      %v4474 = vadd.f32 0.0, %v4473
      %v4475 = vpop.f32.mrf.mxu0
      %v4476 = vadd.f32 0.0, %v4475
      %4477 = vdwg.mxu0
      %v4478 = vadd.f32 %v4386, %v4469
      %v4479 = vadd.f32 %v4387, %v4471
      %v4480 = vadd.f32 %v4388, %v4474
      %v4481 = vadd.f32 %v4389, %v4476
      %s4482 = scalar_lea.vmem %s4, 320
      %v4483 = vld [vmem:[%s4482] sm:$0xf]
      %v4484 = vld [vmem:[%s4482 + $0x4] sm:$0xf]
      %v4485 = vld [vmem:[%s4482 + $0x8] sm:$0xf]
      %v4486 = vld [vmem:[%s4482 + $0xc] sm:$0xf]
      %v4487 = vld [vmem:[%s4482 + $0x10] sm:$0xf]
      %v4488 = vld [vmem:[%s4482 + $0x14] sm:$0xf]
      %v4489 = vld [vmem:[%s4482 + $0x18] sm:$0xf]
      %v4490 = vld [vmem:[%s4482 + $0x1c] sm:$0xf]
      %v4499 = vunpack.c.l.b16 %v4483
      %v4500 = vunpack.c.l.b16 %v4484
      %v4501 = vunpack.c.l.b16 %v4485
      %v4502 = vunpack.c.l.b16 %v4486
      %v4503 = vunpack.c.l.b16 %v4487
      %v4504 = vunpack.c.l.b16 %v4488
      %v4505 = vunpack.c.l.b16 %v4489
      %v4506 = vunpack.c.l.b16 %v4490
      %v4507 = vpack.c.b16 %v4500, %v4499
      %v4508 = vpack.c.b16 %v4502, %v4501
      %v4509 = vpack.c.b16 %v4504, %v4503
      %v4510 = vpack.c.b16 %v4506, %v4505
      %4515 = vmatpush.bf16.msra.mxu0 0
      %4516 = vmatpush.bf16.msra.mxu0 0
      %4517 = vmatpush.bf16.msra.mxu0 0
      %4518 = vmatpush.bf16.msra.mxu0 0
      %4519 = vmatpush.bf16.msra.mxu0 %v4510
      %4520 = vmatpush.bf16.msra.mxu0 %v4509
      %4521 = vmatpush.bf16.msra.mxu0 %v4508
      %4522 = vmatpush.bf16.msra.mxu0 %v4507
      %4523 = vmatmul.bf16.gmra.mxu0 %v3601
      %v4524 = vpop.f32.mrf.mxu0
      %v4525 = vadd.f32 0.0, %v4524
      %v4526 = vpop.f32.mrf.mxu0
      %v4527 = vadd.f32 0.0, %v4526
      %4528 = vdwg.mxu0
      %s4529 = scalar_lea.vmem %s5, 160
      %v4530 = vld [vmem:[%s4529] sm:$0xf]
      %v4531 = vld [vmem:[%s4529 + $0x4] sm:$0xf]
      %v4532 = vld [vmem:[%s4529 + $0x8] sm:$0xf]
      %v4533 = vld [vmem:[%s4529 + $0xc] sm:$0xf]
      %v4534 = vpack.c.bf16 %v4527, %v4525
      %v4539 = vunpack.c.l.b16 %v4530
      %v4540 = vunpack.c.l.b16 %v4531
      %v4541 = vunpack.c.l.b16 %v4532
      %v4542 = vunpack.c.l.b16 %v4533
      %v4543 = vpack.c.b16 %v4540, %v4539
      %v4544 = vpack.c.b16 %v4542, %v4541
      %v4546 = vsel %vm3685, %v4543, 0
      %v4549 = vsel %vm3685, %v4544, 0
      %4551 = vmatpush.bf16.msra.mxu0 0
      %4552 = vmatpush.bf16.msra.mxu0 0
      %4553 = vmatpush.bf16.msra.mxu0 0
      %4554 = vmatpush.bf16.msra.mxu0 0
      %4555 = vmatpush.bf16.msra.mxu0 0
      %4556 = vmatpush.bf16.msra.mxu0 0
      %4557 = vmatpush.bf16.msra.mxu0 0
      %4558 = vmatpush.bf16.msra.mxu0 %v4534
      %4559 = vmatmul.bf16.gmra.mxu0 %v4546
      %v4560 = vpop.f32.mrf.mxu0
      %v4561 = vadd.f32 0.0, %v4560
      %v4562 = vpop.f32.mrf.mxu0
      %v4563 = vadd.f32 0.0, %v4562
      %4564 = vmatmul.bf16.gmra.mxu0 %v4549
      %v4565 = vpop.f32.mrf.mxu0
      %v4566 = vadd.f32 0.0, %v4565
      %v4567 = vpop.f32.mrf.mxu0
      %v4568 = vadd.f32 0.0, %v4567
      %4569 = vdwg.mxu0
      %v4570 = vadd.f32 %v4478, %v4561
      %v4571 = vadd.f32 %v4479, %v4563
      %v4572 = vadd.f32 %v4480, %v4566
      %v4573 = vadd.f32 %v4481, %v4568
      %s4574 = scalar_lea.vmem %s4, 352
      %v4575 = vld [vmem:[%s4574] sm:$0xf]
      %v4576 = vld [vmem:[%s4574 + $0x4] sm:$0xf]
      %v4577 = vld [vmem:[%s4574 + $0x8] sm:$0xf]
      %v4578 = vld [vmem:[%s4574 + $0xc] sm:$0xf]
      %v4579 = vld [vmem:[%s4574 + $0x10] sm:$0xf]
      %v4580 = vld [vmem:[%s4574 + $0x14] sm:$0xf]
      %v4581 = vld [vmem:[%s4574 + $0x18] sm:$0xf]
      %v4582 = vld [vmem:[%s4574 + $0x1c] sm:$0xf]
      %v4591 = vunpack.c.l.b16 %v4575
      %v4592 = vunpack.c.l.b16 %v4576
      %v4593 = vunpack.c.l.b16 %v4577
      %v4594 = vunpack.c.l.b16 %v4578
      %v4595 = vunpack.c.l.b16 %v4579
      %v4596 = vunpack.c.l.b16 %v4580
      %v4597 = vunpack.c.l.b16 %v4581
      %v4598 = vunpack.c.l.b16 %v4582
      %v4599 = vpack.c.b16 %v4592, %v4591
      %v4600 = vpack.c.b16 %v4594, %v4593
      %v4601 = vpack.c.b16 %v4596, %v4595
      %v4602 = vpack.c.b16 %v4598, %v4597
      %4607 = vmatpush.bf16.msra.mxu0 0
      %4608 = vmatpush.bf16.msra.mxu0 0
      %4609 = vmatpush.bf16.msra.mxu0 0
      %4610 = vmatpush.bf16.msra.mxu0 0
      %4611 = vmatpush.bf16.msra.mxu0 %v4602
      %4612 = vmatpush.bf16.msra.mxu0 %v4601
      %4613 = vmatpush.bf16.msra.mxu0 %v4600
      %4614 = vmatpush.bf16.msra.mxu0 %v4599
      %4615 = vmatmul.bf16.gmra.mxu0 %v3601
      %v4616 = vpop.f32.mrf.mxu0
      %v4617 = vadd.f32 0.0, %v4616
      %v4618 = vpop.f32.mrf.mxu0
      %v4619 = vadd.f32 0.0, %v4618
      %4620 = vdwg.mxu0
      %s4621 = scalar_lea.vmem %s5, 176
      %v4622 = vld [vmem:[%s4621] sm:$0xf]
      %v4623 = vld [vmem:[%s4621 + $0x4] sm:$0xf]
      %v4624 = vld [vmem:[%s4621 + $0x8] sm:$0xf]
      %v4625 = vld [vmem:[%s4621 + $0xc] sm:$0xf]
      %v4626 = vpack.c.bf16 %v4619, %v4617
      %v4631 = vunpack.c.l.b16 %v4622
      %v4632 = vunpack.c.l.b16 %v4623
      %v4633 = vunpack.c.l.b16 %v4624
      %v4634 = vunpack.c.l.b16 %v4625
      %v4635 = vpack.c.b16 %v4632, %v4631
      %v4636 = vpack.c.b16 %v4634, %v4633
      %v4638 = vsel %vm3685, %v4635, 0
      %v4641 = vsel %vm3685, %v4636, 0
      %4643 = vmatpush.bf16.msra.mxu0 0
      %4644 = vmatpush.bf16.msra.mxu0 0
      %4645 = vmatpush.bf16.msra.mxu0 0
      %4646 = vmatpush.bf16.msra.mxu0 0
      %4647 = vmatpush.bf16.msra.mxu0 0
      %4648 = vmatpush.bf16.msra.mxu0 0
      %4649 = vmatpush.bf16.msra.mxu0 0
      %4650 = vmatpush.bf16.msra.mxu0 %v4626
      %4651 = vmatmul.bf16.gmra.mxu0 %v4638
      %v4652 = vpop.f32.mrf.mxu0
      %v4653 = vadd.f32 0.0, %v4652
      %v4654 = vpop.f32.mrf.mxu0
      %v4655 = vadd.f32 0.0, %v4654
      %4656 = vmatmul.bf16.gmra.mxu0 %v4641
      %v4657 = vpop.f32.mrf.mxu0
      %v4658 = vadd.f32 0.0, %v4657
      %v4659 = vpop.f32.mrf.mxu0
      %v4660 = vadd.f32 0.0, %v4659
      %4661 = vdwg.mxu0
      %v4662 = vadd.f32 %v4570, %v4653
      %v4663 = vadd.f32 %v4571, %v4655
      %v4664 = vadd.f32 %v4572, %v4658
      %v4665 = vadd.f32 %v4573, %v4660
      %s4666 = scalar_lea.vmem %s4, 384
      %v4667 = vld [vmem:[%s4666] sm:$0xf]
      %v4668 = vld [vmem:[%s4666 + $0x4] sm:$0xf]
      %v4669 = vld [vmem:[%s4666 + $0x8] sm:$0xf]
      %v4670 = vld [vmem:[%s4666 + $0xc] sm:$0xf]
      %v4671 = vld [vmem:[%s4666 + $0x10] sm:$0xf]
      %v4672 = vld [vmem:[%s4666 + $0x14] sm:$0xf]
      %v4673 = vld [vmem:[%s4666 + $0x18] sm:$0xf]
      %v4674 = vld [vmem:[%s4666 + $0x1c] sm:$0xf]
      %v4683 = vunpack.c.l.b16 %v4667
      %v4684 = vunpack.c.l.b16 %v4668
      %v4685 = vunpack.c.l.b16 %v4669
      %v4686 = vunpack.c.l.b16 %v4670
      %v4687 = vunpack.c.l.b16 %v4671
      %v4688 = vunpack.c.l.b16 %v4672
      %v4689 = vunpack.c.l.b16 %v4673
      %v4690 = vunpack.c.l.b16 %v4674
      %v4691 = vpack.c.b16 %v4684, %v4683
      %v4692 = vpack.c.b16 %v4686, %v4685
      %v4693 = vpack.c.b16 %v4688, %v4687
      %v4694 = vpack.c.b16 %v4690, %v4689
      %4699 = vmatpush.bf16.msra.mxu0 0
      %4700 = vmatpush.bf16.msra.mxu0 0
      %4701 = vmatpush.bf16.msra.mxu0 0
      %4702 = vmatpush.bf16.msra.mxu0 0
      %4703 = vmatpush.bf16.msra.mxu0 %v4694
      %4704 = vmatpush.bf16.msra.mxu0 %v4693
      %4705 = vmatpush.bf16.msra.mxu0 %v4692
      %4706 = vmatpush.bf16.msra.mxu0 %v4691
      %4707 = vmatmul.bf16.gmra.mxu0 %v3601
      %v4708 = vpop.f32.mrf.mxu0
      %v4709 = vadd.f32 0.0, %v4708
      %v4710 = vpop.f32.mrf.mxu0
      %v4711 = vadd.f32 0.0, %v4710
      %4712 = vdwg.mxu0
      %s4713 = scalar_lea.vmem %s5, 192
      %v4714 = vld [vmem:[%s4713] sm:$0xf]
      %v4715 = vld [vmem:[%s4713 + $0x4] sm:$0xf]
      %v4716 = vld [vmem:[%s4713 + $0x8] sm:$0xf]
      %v4717 = vld [vmem:[%s4713 + $0xc] sm:$0xf]
      %v4718 = vpack.c.bf16 %v4711, %v4709
      %v4723 = vunpack.c.l.b16 %v4714
      %v4724 = vunpack.c.l.b16 %v4715
      %v4725 = vunpack.c.l.b16 %v4716
      %v4726 = vunpack.c.l.b16 %v4717
      %v4727 = vpack.c.b16 %v4724, %v4723
      %v4728 = vpack.c.b16 %v4726, %v4725
      %v4730 = vsel %vm3685, %v4727, 0
      %v4733 = vsel %vm3685, %v4728, 0
      %4735 = vmatpush.bf16.msra.mxu0 0
      %4736 = vmatpush.bf16.msra.mxu0 0
      %4737 = vmatpush.bf16.msra.mxu0 0
      %4738 = vmatpush.bf16.msra.mxu0 0
      %4739 = vmatpush.bf16.msra.mxu0 0
      %4740 = vmatpush.bf16.msra.mxu0 0
      %4741 = vmatpush.bf16.msra.mxu0 0
      %4742 = vmatpush.bf16.msra.mxu0 %v4718
      %4743 = vmatmul.bf16.gmra.mxu0 %v4730
      %v4744 = vpop.f32.mrf.mxu0
      %v4745 = vadd.f32 0.0, %v4744
      %v4746 = vpop.f32.mrf.mxu0
      %v4747 = vadd.f32 0.0, %v4746
      %4748 = vmatmul.bf16.gmra.mxu0 %v4733
      %v4749 = vpop.f32.mrf.mxu0
      %v4750 = vadd.f32 0.0, %v4749
      %v4751 = vpop.f32.mrf.mxu0
      %v4752 = vadd.f32 0.0, %v4751
      %4753 = vdwg.mxu0
      %v4754 = vadd.f32 %v4662, %v4745
      %v4755 = vadd.f32 %v4663, %v4747
      %v4756 = vadd.f32 %v4664, %v4750
      %v4757 = vadd.f32 %v4665, %v4752
      %s4758 = scalar_lea.vmem %s4, 416
      %v4759 = vld [vmem:[%s4758] sm:$0xf]
      %v4760 = vld [vmem:[%s4758 + $0x4] sm:$0xf]
      %v4761 = vld [vmem:[%s4758 + $0x8] sm:$0xf]
      %v4762 = vld [vmem:[%s4758 + $0xc] sm:$0xf]
      %v4763 = vld [vmem:[%s4758 + $0x10] sm:$0xf]
      %v4764 = vld [vmem:[%s4758 + $0x14] sm:$0xf]
      %v4765 = vld [vmem:[%s4758 + $0x18] sm:$0xf]
      %v4766 = vld [vmem:[%s4758 + $0x1c] sm:$0xf]
      %v4775 = vunpack.c.l.b16 %v4759
      %v4776 = vunpack.c.l.b16 %v4760
      %v4777 = vunpack.c.l.b16 %v4761
      %v4778 = vunpack.c.l.b16 %v4762
      %v4779 = vunpack.c.l.b16 %v4763
      %v4780 = vunpack.c.l.b16 %v4764
      %v4781 = vunpack.c.l.b16 %v4765
      %v4782 = vunpack.c.l.b16 %v4766
      %v4783 = vpack.c.b16 %v4776, %v4775
      %v4784 = vpack.c.b16 %v4778, %v4777
      %v4785 = vpack.c.b16 %v4780, %v4779
      %v4786 = vpack.c.b16 %v4782, %v4781
      %4791 = vmatpush.bf16.msra.mxu0 0
      %4792 = vmatpush.bf16.msra.mxu0 0
      %4793 = vmatpush.bf16.msra.mxu0 0
      %4794 = vmatpush.bf16.msra.mxu0 0
      %4795 = vmatpush.bf16.msra.mxu0 %v4786
      %4796 = vmatpush.bf16.msra.mxu0 %v4785
      %4797 = vmatpush.bf16.msra.mxu0 %v4784
      %4798 = vmatpush.bf16.msra.mxu0 %v4783
      %4799 = vmatmul.bf16.gmra.mxu0 %v3601
      %v4800 = vpop.f32.mrf.mxu0
      %v4801 = vadd.f32 0.0, %v4800
      %v4802 = vpop.f32.mrf.mxu0
      %v4803 = vadd.f32 0.0, %v4802
      %4804 = vdwg.mxu0
      %s4805 = scalar_lea.vmem %s5, 208
      %v4806 = vld [vmem:[%s4805] sm:$0xf]
      %v4807 = vld [vmem:[%s4805 + $0x4] sm:$0xf]
      %v4808 = vld [vmem:[%s4805 + $0x8] sm:$0xf]
      %v4809 = vld [vmem:[%s4805 + $0xc] sm:$0xf]
      %v4810 = vpack.c.bf16 %v4803, %v4801
      %v4815 = vunpack.c.l.b16 %v4806
      %v4816 = vunpack.c.l.b16 %v4807
      %v4817 = vunpack.c.l.b16 %v4808
      %v4818 = vunpack.c.l.b16 %v4809
      %v4819 = vpack.c.b16 %v4816, %v4815
      %v4820 = vpack.c.b16 %v4818, %v4817
      %v4822 = vsel %vm3685, %v4819, 0
      %v4825 = vsel %vm3685, %v4820, 0
      %4827 = vmatpush.bf16.msra.mxu0 0
      %4828 = vmatpush.bf16.msra.mxu0 0
      %4829 = vmatpush.bf16.msra.mxu0 0
      %4830 = vmatpush.bf16.msra.mxu0 0
      %4831 = vmatpush.bf16.msra.mxu0 0
      %4832 = vmatpush.bf16.msra.mxu0 0
      %4833 = vmatpush.bf16.msra.mxu0 0
      %4834 = vmatpush.bf16.msra.mxu0 %v4810
      %4835 = vmatmul.bf16.gmra.mxu0 %v4822
      %v4836 = vpop.f32.mrf.mxu0
      %v4837 = vadd.f32 0.0, %v4836
      %v4838 = vpop.f32.mrf.mxu0
      %v4839 = vadd.f32 0.0, %v4838
      %4840 = vmatmul.bf16.gmra.mxu0 %v4825
      %v4841 = vpop.f32.mrf.mxu0
      %v4842 = vadd.f32 0.0, %v4841
      %v4843 = vpop.f32.mrf.mxu0
      %v4844 = vadd.f32 0.0, %v4843
      %4845 = vdwg.mxu0
      %v4846 = vadd.f32 %v4754, %v4837
      %v4847 = vadd.f32 %v4755, %v4839
      %v4848 = vadd.f32 %v4756, %v4842
      %v4849 = vadd.f32 %v4757, %v4844
      %s4850 = scalar_lea.vmem %s4, 448
      %v4851 = vld [vmem:[%s4850] sm:$0xf]
      %v4852 = vld [vmem:[%s4850 + $0x4] sm:$0xf]
      %v4853 = vld [vmem:[%s4850 + $0x8] sm:$0xf]
      %v4854 = vld [vmem:[%s4850 + $0xc] sm:$0xf]
      %v4855 = vld [vmem:[%s4850 + $0x10] sm:$0xf]
      %v4856 = vld [vmem:[%s4850 + $0x14] sm:$0xf]
      %v4857 = vld [vmem:[%s4850 + $0x18] sm:$0xf]
      %v4858 = vld [vmem:[%s4850 + $0x1c] sm:$0xf]
      %v4867 = vunpack.c.l.b16 %v4851
      %v4868 = vunpack.c.l.b16 %v4852
      %v4869 = vunpack.c.l.b16 %v4853
      %v4870 = vunpack.c.l.b16 %v4854
      %v4871 = vunpack.c.l.b16 %v4855
      %v4872 = vunpack.c.l.b16 %v4856
      %v4873 = vunpack.c.l.b16 %v4857
      %v4874 = vunpack.c.l.b16 %v4858
      %v4875 = vpack.c.b16 %v4868, %v4867
      %v4876 = vpack.c.b16 %v4870, %v4869
      %v4877 = vpack.c.b16 %v4872, %v4871
      %v4878 = vpack.c.b16 %v4874, %v4873
      %4883 = vmatpush.bf16.msra.mxu0 0
      %4884 = vmatpush.bf16.msra.mxu0 0
      %4885 = vmatpush.bf16.msra.mxu0 0
      %4886 = vmatpush.bf16.msra.mxu0 0
      %4887 = vmatpush.bf16.msra.mxu0 %v4878
      %4888 = vmatpush.bf16.msra.mxu0 %v4877
      %4889 = vmatpush.bf16.msra.mxu0 %v4876
      %4890 = vmatpush.bf16.msra.mxu0 %v4875
      %4891 = vmatmul.bf16.gmra.mxu0 %v3601
      %v4892 = vpop.f32.mrf.mxu0
      %v4893 = vadd.f32 0.0, %v4892
      %v4894 = vpop.f32.mrf.mxu0
      %v4895 = vadd.f32 0.0, %v4894
      %4896 = vdwg.mxu0
      %s4897 = scalar_lea.vmem %s5, 224
      %v4898 = vld [vmem:[%s4897] sm:$0xf]
      %v4899 = vld [vmem:[%s4897 + $0x4] sm:$0xf]
      %v4900 = vld [vmem:[%s4897 + $0x8] sm:$0xf]
      %v4901 = vld [vmem:[%s4897 + $0xc] sm:$0xf]
      %v4902 = vpack.c.bf16 %v4895, %v4893
      %v4907 = vunpack.c.l.b16 %v4898
      %v4908 = vunpack.c.l.b16 %v4899
      %v4909 = vunpack.c.l.b16 %v4900
      %v4910 = vunpack.c.l.b16 %v4901
      %v4911 = vpack.c.b16 %v4908, %v4907
      %v4912 = vpack.c.b16 %v4910, %v4909
      %v4914 = vsel %vm3685, %v4911, 0
      %v4917 = vsel %vm3685, %v4912, 0
      %4919 = vmatpush.bf16.msra.mxu0 0
      %4920 = vmatpush.bf16.msra.mxu0 0
      %4921 = vmatpush.bf16.msra.mxu0 0
      %4922 = vmatpush.bf16.msra.mxu0 0
      %4923 = vmatpush.bf16.msra.mxu0 0
      %4924 = vmatpush.bf16.msra.mxu0 0
      %4925 = vmatpush.bf16.msra.mxu0 0
      %4926 = vmatpush.bf16.msra.mxu0 %v4902
      %4927 = vmatmul.bf16.gmra.mxu0 %v4914
      %v4928 = vpop.f32.mrf.mxu0
      %v4929 = vadd.f32 0.0, %v4928
      %v4930 = vpop.f32.mrf.mxu0
      %v4931 = vadd.f32 0.0, %v4930
      %4932 = vmatmul.bf16.gmra.mxu0 %v4917
      %v4933 = vpop.f32.mrf.mxu0
      %v4934 = vadd.f32 0.0, %v4933
      %v4935 = vpop.f32.mrf.mxu0
      %v4936 = vadd.f32 0.0, %v4935
      %4937 = vdwg.mxu0
      %v4938 = vadd.f32 %v4846, %v4929
      %v4939 = vadd.f32 %v4847, %v4931
      %v4940 = vadd.f32 %v4848, %v4934
      %v4941 = vadd.f32 %v4849, %v4936
      %s4942 = scalar_lea.vmem %s4, 480
      %v4943 = vld [vmem:[%s4942] sm:$0xf]
      %v4944 = vld [vmem:[%s4942 + $0x4] sm:$0xf]
      %v4945 = vld [vmem:[%s4942 + $0x8] sm:$0xf]
      %v4946 = vld [vmem:[%s4942 + $0xc] sm:$0xf]
      %v4947 = vld [vmem:[%s4942 + $0x10] sm:$0xf]
      %v4948 = vld [vmem:[%s4942 + $0x14] sm:$0xf]
      %v4949 = vld [vmem:[%s4942 + $0x18] sm:$0xf]
      %v4950 = vld [vmem:[%s4942 + $0x1c] sm:$0xf]
      %v4959 = vunpack.c.l.b16 %v4943
      %v4960 = vunpack.c.l.b16 %v4944
      %v4961 = vunpack.c.l.b16 %v4945
      %v4962 = vunpack.c.l.b16 %v4946
      %v4963 = vunpack.c.l.b16 %v4947
      %v4964 = vunpack.c.l.b16 %v4948
      %v4965 = vunpack.c.l.b16 %v4949
      %v4966 = vunpack.c.l.b16 %v4950
      %v4967 = vpack.c.b16 %v4960, %v4959
      %v4968 = vpack.c.b16 %v4962, %v4961
      %v4969 = vpack.c.b16 %v4964, %v4963
      %v4970 = vpack.c.b16 %v4966, %v4965
      %4975 = vmatpush.bf16.msra.mxu0 0
      %4976 = vmatpush.bf16.msra.mxu0 0
      %4977 = vmatpush.bf16.msra.mxu0 0
      %4978 = vmatpush.bf16.msra.mxu0 0
      %4979 = vmatpush.bf16.msra.mxu0 %v4970
      %4980 = vmatpush.bf16.msra.mxu0 %v4969
      %4981 = vmatpush.bf16.msra.mxu0 %v4968
      %4982 = vmatpush.bf16.msra.mxu0 %v4967
      %4983 = vmatmul.bf16.gmra.mxu0 %v3601
      %v4984 = vpop.f32.mrf.mxu0
      %v4985 = vadd.f32 0.0, %v4984
      %v4986 = vpop.f32.mrf.mxu0
      %v4987 = vadd.f32 0.0, %v4986
      %4988 = vdwg.mxu0
      %s4989 = scalar_lea.vmem %s5, 240
      %v4990 = vld [vmem:[%s4989] sm:$0xf]
      %v4991 = vld [vmem:[%s4989 + $0x4] sm:$0xf]
      %v4992 = vld [vmem:[%s4989 + $0x8] sm:$0xf]
      %v4993 = vld [vmem:[%s4989 + $0xc] sm:$0xf]
      %v4994 = vpack.c.bf16 %v4987, %v4985
      %v4999 = vunpack.c.l.b16 %v4990
      %v5000 = vunpack.c.l.b16 %v4991
      %v5001 = vunpack.c.l.b16 %v4992
      %v5002 = vunpack.c.l.b16 %v4993
      %v5003 = vpack.c.b16 %v5000, %v4999
      %v5004 = vpack.c.b16 %v5002, %v5001
      %v5006 = vsel %vm3685, %v5003, 0
      %v5009 = vsel %vm3685, %v5004, 0
      %5011 = vmatpush.bf16.msra.mxu0 0
      %5012 = vmatpush.bf16.msra.mxu0 0
      %5013 = vmatpush.bf16.msra.mxu0 0
      %5014 = vmatpush.bf16.msra.mxu0 0
      %5015 = vmatpush.bf16.msra.mxu0 0
      %5016 = vmatpush.bf16.msra.mxu0 0
      %5017 = vmatpush.bf16.msra.mxu0 0
      %5018 = vmatpush.bf16.msra.mxu0 %v4994
      %5019 = vmatmul.bf16.gmra.mxu0 %v5006
      %v5020 = vpop.f32.mrf.mxu0
      %v5021 = vadd.f32 0.0, %v5020
      %v5022 = vpop.f32.mrf.mxu0
      %v5023 = vadd.f32 0.0, %v5022
      %5024 = vmatmul.bf16.gmra.mxu0 %v5009
      %v5025 = vpop.f32.mrf.mxu0
      %v5026 = vadd.f32 0.0, %v5025
      %v5027 = vpop.f32.mrf.mxu0
      %v5028 = vadd.f32 0.0, %v5027
      %5029 = vdwg.mxu0
      %v5030 = vadd.f32 %v4938, %v5021
      %v5031 = vadd.f32 %v4939, %v5023
      %v5032 = vadd.f32 %v4940, %v5026
      %v5033 = vadd.f32 %v4941, %v5028
      %v5034 = vsel %vm3685, %v5030, 0.0
      %5035 = vadd.xlane.f32.xlu0 %v5034
      %v5036 = vpop.xlane.xlu0 %5035
      %v5037 = vsel %vm3685, %v5031, 0.0
      %5038 = vadd.xlane.f32.xlu0 %v5037
      %v5039 = vpop.xlane.xlu0 %5038
      %v5040 = vsel %vm3685, %v5032, 0.0
      %5041 = vadd.xlane.f32.xlu0 %v5040
      %v5042 = vpop.xlane.xlu0 %5041
      %v5043 = vsel %vm3685, %v5033, 0.0
      %5044 = vadd.xlane.f32.xlu0 %v5043
      %v5045 = vpop.xlane.xlu0 %5044
      %v5046 = vrcp.pop 16.0
      %v5047 = vmul.f32 16.0, %v5046
      %v5048 = vsub.f32 1.0, %v5047
      %v5049 = vmul.f32 %v5046, %v5048
      %v5050 = vadd.f32 %v5046, %v5049
      %vm5051 = vweird.f32 %v5046
      %v5052 = vsel %vm5051, %v5046, %v5050
      %v5053 = vmul.f32 %v5036, %v5052
      %v5054 = vmul.f32 %v5039, %v5052
      %v5055 = vmul.f32 %v5042, %v5052
      %v5056 = vmul.f32 %v5045, %v5052
      %v5057 = vsub.f32 %v5030, %v5053
      %v5058 = vsub.f32 %v5031, %v5054
      %v5059 = vsub.f32 %v5032, %v5055
      %v5060 = vsub.f32 %v5033, %v5056
      %v5061 = vmul.f32 %v5057, %v5057
      %v5062 = vmul.f32 %v5058, %v5058
      %v5063 = vmul.f32 %v5059, %v5059
      %v5064 = vmul.f32 %v5060, %v5060
      %v5065 = vsel %vm3685, %v5061, 0.0
      %5066 = vadd.xlane.f32.xlu0 %v5065
      %v5067 = vpop.xlane.xlu0 %5066
      %v5068 = vsel %vm3685, %v5062, 0.0
      %5069 = vadd.xlane.f32.xlu0 %v5068
      %v5070 = vpop.xlane.xlu0 %5069
      %v5071 = vsel %vm3685, %v5063, 0.0
      %5072 = vadd.xlane.f32.xlu0 %v5071
      %v5073 = vpop.xlane.xlu0 %5072
      %v5074 = vsel %vm3685, %v5064, 0.0
      %5075 = vadd.xlane.f32.xlu0 %v5074
      %v5076 = vpop.xlane.xlu0 %5075
      %v5077 = vmul.f32 %v5067, %v5052
      %v5078 = vmul.f32 %v5070, %v5052
      %v5079 = vmul.f32 %v5073, %v5052
      %v5080 = vmul.f32 %v5076, %v5052
      %v5081 = vadd.f32 %v5077, 1e-05
      %v5082 = vadd.f32 %v5078, 1e-05
      %v5083 = vadd.f32 %v5079, 1e-05
      %v5084 = vadd.f32 %v5080, 1e-05
      %v5085 = vrsqrt.pop %v5081
      %v5086 = vmul.f32 %v5085, %v5081
      %v5087 = vmul.f32 %v5086, %v5085
      %v5088 = vmul.f32 0.5, %v5087
      %v5089 = vsub.f32 1.5, %v5088
      %v5090 = vmul.f32 %v5085, %v5089
      %vm5091 = vweird.f32 %v5081
      %vm5092 = vweird.f32 %v5085
      %vm5093 = vmor %vm5091, %vm5092
      %v5094 = vsel %vm5093, %v5085, %v5090
      %v5095 = vrsqrt.pop %v5082
      %v5096 = vmul.f32 %v5095, %v5082
      %v5097 = vmul.f32 %v5096, %v5095
      %v5098 = vmul.f32 0.5, %v5097
      %v5099 = vsub.f32 1.5, %v5098
      %v5100 = vmul.f32 %v5095, %v5099
      %vm5101 = vweird.f32 %v5082
      %vm5102 = vweird.f32 %v5095
      %vm5103 = vmor %vm5101, %vm5102
      %v5104 = vsel %vm5103, %v5095, %v5100
      %v5105 = vrsqrt.pop %v5083
      %v5106 = vmul.f32 %v5105, %v5083
      %v5107 = vmul.f32 %v5106, %v5105
      %v5108 = vmul.f32 0.5, %v5107
      %v5109 = vsub.f32 1.5, %v5108
      %v5110 = vmul.f32 %v5105, %v5109
      %vm5111 = vweird.f32 %v5083
      %vm5112 = vweird.f32 %v5105
      %vm5113 = vmor %vm5111, %vm5112
      %v5114 = vsel %vm5113, %v5105, %v5110
      %v5115 = vrsqrt.pop %v5084
      %v5116 = vmul.f32 %v5115, %v5084
      %v5117 = vmul.f32 %v5116, %v5115
      %v5118 = vmul.f32 0.5, %v5117
      %v5119 = vsub.f32 1.5, %v5118
      %v5120 = vmul.f32 %v5115, %v5119
      %vm5121 = vweird.f32 %v5084
      %vm5122 = vweird.f32 %v5115
      %vm5123 = vmor %vm5121, %vm5122
      %v5124 = vsel %vm5123, %v5115, %v5120
      %v5125 = vmul.f32 %v5057, %v5094
      %v5126 = vmul.f32 %v5058, %v5104
      %v5127 = vmul.f32 %v5059, %v5114
      %v5128 = vmul.f32 %v5060, %v5124
      %v5129 = vmax.f32 %v5125, 0.0
      %v5130 = vmax.f32 %v5126, 0.0
      %v5131 = vmax.f32 %v5127, 0.0
      %v5132 = vmax.f32 %v5128, 0.0
      %5133 = vst.msk [vmem:[%s251] sm:$0xff] %vm3685, %v5129
      %5134 = vst.msk [vmem:[%s251 + $0x8] sm:$0xff] %vm3685, %v5130
      %5135 = vst.msk [vmem:[%s251 + $0x10] sm:$0xff] %vm3685, %v5131
      %5136 = vst.msk [vmem:[%s251 + $0x18] sm:$0xff] %vm3685, %v5132
      %p5137 = scmp.lt.s32.totalorder %s17, 1
      %s5138 = scalar_select %p5137, %s17, 1
      %s5139 = smul.addr %s5138, 4
      %s5140 = smul.addr %s5139, 8
      %s5141 = scalar_lea.vmem %s6, %s5140
      // Predicated region
      $region45: #{encoder_forward.1} parent=43 // pred_check
        %p5142 = pneg %p166
      $region46: #{encoder_forward.1} parent=43 // pred_check_branch
        %5144 = sbr.rel (%p5142) target = $region48
      $region47: #{encoder_forward.1} parent=43 // pred_region
        _
      $region48: #{encoder_forward.1} parent=43 // pred_fallthru
        _
    $region44: #{encoder_forward.1} parent=5 // pred_fallthru
      _
    %p5145 = scmp.le.s32.totalorder 2, %s12
    // Predicated region
    $region49: #{encoder_forward.1} parent=5 // pred_check
      %p5146 = pneg %p5145
    $region50: #{encoder_forward.1} parent=5 // pred_check_branch
      %5148 = sbr.rel (%p5146) target = $region52
    $region51: #{encoder_forward.1} parent=5 // pred_region
      %s5149 = ssub.s32 %s12, 2
      // Predicated region
      $region53: #{encoder_forward.1} parent=51 // pred_check
        %p5150 = pneg %p172
      $region54: #{encoder_forward.1} parent=51 // pred_check_branch
        %5152 = sbr.rel (%p5150) target = $region56
      $region55: #{encoder_forward.1} parent=51 // pred_region
        %p5153 = scmp.lt.s32.totalorder %s18, 1
        %s5154 = scalar_select %p5153, %s18, 1
        %s5155 = smul.addr %s5154, 4
        %s5156 = smul.addr %s5155, 8
        %s5157 = scalar_lea.vmem %s6, %s5156
      $region56: #{encoder_forward.1} parent=51 // pred_fallthru
        _
    $region52: #{encoder_forward.1} parent=5 // pred_fallthru
      _
  $region6: #{encoder_forward.1} parent=0 // loop_footer
    %s16 = sadd.s32 1, %s12
  $region7: #{encoder_forward.1} parent=0 // loop_footer_branch
    %11 = sbr.rel target = $region3
  $region8: #{encoder_forward.1} parent=0 // loop_exit
    _

</llo_original>
